<compile_context>
chip_gen: v7x
topology: tpu7x:2x2x1
jax: 0.10.0
libtpu: 0.0.40
codegen_flags: <defaults>
</compile_context>

<pallas_src>
import jax
import jax.numpy as jnp
import jax.scipy.linalg as jsl
from jax.experimental import pallas as pl
from jax.experimental.pallas import tpu as pltpu


# ----------------------------- Pallas kernel --------------------------------


def _make_kernel(depth):
    """Kernel over one batch tile.  Flat ref layout:
       x,
       [object packed : W0, b0, (Wh, bh)*depth, Wo, bo],
       [pred   packed : W0, b0, (Wh, bh)*depth, Wo],
       bout, out
    """
    n_obj = 4 + 2 * depth       # W0,b0,(Wh,bh)*depth,Wo,bo
    n_pred = 3 + 2 * depth      # W0,b0,(Wh,bh)*depth,Wo  (output bias in bout)

    def kernel(*refs):
        x_ref = refs[0]
        pos = 1
        obj_refs = refs[pos:pos + n_obj]; pos += n_obj
        pred_refs = refs[pos:pos + n_pred]; pos += n_pred
        bout_ref = refs[pos]; pos += 1
        out_ref = refs[pos]

        def lin(h, w_ref, b_ref=None):
            y = jnp.dot(h, w_ref[...], preferred_element_type=jnp.float32)
            if b_ref is not None:
                y = y + b_ref[...]
            return y

        # -------- fused object encoders: x (TB, 3N) -> obj (TB, N*H) --------
        h = jnp.maximum(lin(x_ref[...], obj_refs[0], obj_refs[1]), 0.0)
        for d in range(depth):
            h = jnp.maximum(lin(h, obj_refs[2 + 2 * d], obj_refs[3 + 2 * d]), 0.0)
        obj = lin(h, obj_refs[2 + 2 * depth], obj_refs[3 + 2 * depth])

        # -------- fused predicate encoders: obj -> all N*(N+2) logits -------
        h = jnp.maximum(lin(obj, pred_refs[0], pred_refs[1]), 0.0)
        for d in range(depth):
            h = jnp.maximum(lin(h, pred_refs[2 + 2 * d], pred_refs[3 + 2 * d]), 0.0)
        logits = lin(h, pred_refs[2 + 2 * depth]) + bout_ref[...]

        out_ref[...] = jax.nn.sigmoid(logits).astype(out_ref.dtype)

    return kernel


# ------------------------------ Param setup ---------------------------------


def _init_linear(key, fan_in, fan_out):
    wk, bk = jax.random.split(key)
    bound = 1.0 / float(fan_in) ** 0.5
    w = jax.random.uniform(wk, (fan_in, fan_out), jnp.float32, -bound, bound)
    b = jax.random.uniform(bk, (fan_out,), jnp.float32, -bound, bound)
    return w, b


def _init_mlp(key, in_dim, hid, out_dim, depth):
    keys = jax.random.split(key, depth + 2)
    w0, b0 = _init_linear(keys[0], in_dim, hid)
    whs, bhs = [], []
    for d in range(depth):
        w, b = _init_linear(keys[1 + d], hid, hid)
        whs.append(w)
        bhs.append(b)
    wo, bo = _init_linear(keys[-1], hid, out_dim)
    return (w0, b0, whs, bhs, wo, bo)


def init_block_stacking_sgn(key, n_blocks, hidden_dim, depth):
    """Raw (torch-style, per-encoder) parameters."""
    kobj, kclear, kontab, kaonb = jax.random.split(key, 4)
    obj_keys = jax.random.split(kobj, n_blocks)
    obj = [_init_mlp(k, 3 * n_blocks, hidden_dim, hidden_dim, depth)
           for k in obj_keys]
    clear = _init_mlp(kclear, hidden_dim, hidden_dim, 1, depth)
    ontab = _init_mlp(kontab, hidden_dim, hidden_dim, 1, depth)
    aonb = _init_mlp(kaonb, 2 * hidden_dim, hidden_dim, 1, depth)
    return obj, clear, ontab, aonb


# -------------------------- Host-side weight packing -------------------------


def pack_block_stacking_sgn(raw, n_blocks, hidden_dim, depth):
    """Pack raw per-encoder params into the fused matrices the kernel uses."""
    obj_list, clear_p, ontab_p, aonb_p = raw
    N, H = n_blocks, hidden_dim
    D = N * H                    # width of stacked object encodings
    P = N * N * H                # AonB segment width (all pairs)
    WTOT = P + 2 * D             # + clear segment + ontable segment
    OUT = N * (N + 2)            # logical output width
    OUT_PAD = ((OUT + 127) // 128) * 128   # lane-dense output width

    packed = []

    # ---- object encoders: one fused MLP over the lane dimension ----
    packed += [jnp.concatenate([p[0] for p in obj_list], axis=1),          # (3N, D)
               jnp.concatenate([p[1] for p in obj_list]).reshape(1, D)]
    for d in range(depth):
        packed += [jsl.block_diag(*[p[2][d] for p in obj_list]),           # (D, D)
                   jnp.concatenate([p[3][d] for p in obj_list]).reshape(1, D)]
    packed += [jsl.block_diag(*[p[4] for p in obj_list]),                  # (D, D)
               jnp.concatenate([p[5] for p in obj_list]).reshape(1, D)]

    # ---- fused predicate MLP (AonB pairs | clear | ontable) ----
    aw0, ab0, awh, abh, awo, abo = aonb_p
    cw0, cb0, cwh, cbh, cwo, cbo = clear_p
    tw0, tb0, twh, tbh, two, tbo = ontab_p

    # first layer:  cat(obj_i, obj_j) @ W == obj_i @ W_top + obj_j @ W_bot
    w_top, w_bot = aw0[:H], aw0[H:]
    W0 = jnp.zeros((D, WTOT), jnp.float32)
    for i in range(N):
        for j in range(N):
            c = (i * N + j) * H
            W0 = W0.at[i * H:(i + 1) * H, c:c + H].add(w_top)
            W0 = W0.at[j * H:(j + 1) * H, c:c + H].add(w_bot)
        W0 = W0.at[i * H:(i + 1) * H, P + i * H:P + (i + 1) * H].set(cw0)
        W0 = W0.at[i * H:(i + 1) * H, P + D + i * H:P + D + (i + 1) * H].set(tw0)
    B0 = jnp.concatenate([jnp.tile(ab0.reshape(1, H), (1, N * N)),
                          jnp.tile(cb0.reshape(1, H), (1, N)),
                          jnp.tile(tb0.reshape(1, H), (1, N))], axis=1)
    packed += [W0, B0]

    # hidden layers: one big block-diagonal per layer
    for d in range(depth):
        Wh = jsl.block_diag(*([awh[d]] * (N * N) + [cwh[d]] * N + [twh[d]] * N))
        Bh = jnp.concatenate([jnp.tile(abh[d].reshape(1, H), (1, N * N)),
                              jnp.tile(cbh[d].reshape(1, H), (1, N)),
                              jnp.tile(tbh[d].reshape(1, H), (1, N))], axis=1)
        packed += [Wh, Bh]

    # output layer: scatter every predicate straight into its final column
    WO = jnp.zeros((WTOT, OUT_PAD), jnp.float32)
    bout = jnp.zeros((1, OUT_PAD), jnp.float32)
    for i in range(N):
        for j in range(N):
            col = i * (N + 2) + j
            r = (i * N + j) * H
            WO = WO.at[r:r + H, col].set(awo[:, 0])
            bout = bout.at[0, col].set(abo[0])
        col_c = i * (N + 2) + N
        col_t = i * (N + 2) + N + 1
        WO = WO.at[P + i * H:P + (i + 1) * H, col_c].set(cwo[:, 0])
        WO = WO.at[P + D + i * H:P + D + (i + 1) * H, col_t].set(two[:, 0])
        bout = bout.at[0, col_c].set(cbo[0])
        bout = bout.at[0, col_t].set(tbo[0])
    packed += [WO, bout]

    return packed


# ------------------------------- Wrapper -------------------------------------


def block_stacking_sgn_forward(x, packed, n_blocks, depth, batch_tile=None):
    B = x.shape[0]
    OUT = n_blocks * (n_blocks + 2)
    OUT_PAD = packed[-1].shape[1]

    if batch_tile is None:
        batch_tile = B if B <= 1024 else 1024
    if B % batch_tile != 0:
        batch_tile = B                      # fallback: single tile
    grid = (B // batch_tile,)

    x_spec = pl.BlockSpec((batch_tile, x.shape[1]), lambda b: (b, 0))
    # Weights/biases: full-array blocks, constant index_map -> stay resident
    # in VMEM across batch tiles (no re-DMA).
    w_specs = [pl.BlockSpec(p.shape, lambda b: (0, 0)) for p in packed]
    out_spec = pl.BlockSpec((batch_tile, OUT_PAD), lambda b: (b, 0))

    fn = pl.pallas_call(
        _make_kernel(depth),
        out_shape=jax.ShapeDtypeStruct((B, OUT_PAD), jnp.float32),
        grid_spec=pltpu.PrefetchScalarGridSpec(
            num_scalar_prefetch=0,
            grid=grid,
            in_specs=[x_spec] + w_specs,
            out_specs=out_spec,
        ),
        compiler_params=pltpu.CompilerParams(
            dimension_semantics=("parallel",)),   # batch tiles across TCs (v7x)
    )
    out_padded = fn(x, *packed)
    return out_padded[:, :OUT]


# ---------------------------- Pure-JAX reference -----------------------------


def _ref_mlp(h, params, depth, sigmoid):
    w0, b0, whs, bhs, wo, bo = params
    h = jnp.maximum(h @ w0 + b0, 0.0)
    for d in range(depth):
        h = jnp.maximum(h @ whs[d] + bhs[d], 0.0)
    h = h @ wo + bo
    return jax.nn.sigmoid(h) if sigmoid else h


def block_stacking_sgn_reference(x, raw, n_blocks, depth):
    obj_list, clear_p, ontab_p, aonb_p = raw
    obj = [_ref_mlp(x, obj_list[i], depth, False) for i in range(n_blocks)]
    preds = []
    for i in range(n_blocks):
        for j in range(n_blocks):
            preds.append(_ref_mlp(jnp.concatenate([obj[i], obj[j]], -1),
                                  aonb_p, depth, True))
        preds.append(_ref_mlp(obj[i], clear_p, depth, True))
        preds.append(_ref_mlp(obj[i], ontab_p, depth, True))
    return jnp.concatenate(preds, axis=-1)


# --------------------------------- Main ---------------------------------------


if __name__ == "__main__":
    N_BLOCKS = 4
    HIDDEN = 32
    DEPTH = 2
    BATCH = 8

    key = jax.random.PRNGKey(0)
    kparam, kx = jax.random.split(key)

    raw = init_block_stacking_sgn(kparam, N_BLOCKS, HIDDEN, DEPTH)
    packed = pack_block_stacking_sgn(raw, N_BLOCKS, HIDDEN, DEPTH)
    x = jax.random.normal(kx, (BATCH, 3 * N_BLOCKS), jnp.float32)

    out = block_stacking_sgn_forward(x, packed, N_BLOCKS, DEPTH)
    out = jax.block_until_ready(out)

    ref = jax.block_until_ready(
        block_stacking_sgn_reference(x, raw, N_BLOCKS, DEPTH))

    assert out.shape == (BATCH, N_BLOCKS * (N_BLOCKS + 2)), out.shape
    assert jnp.allclose(out, ref, atol=1e-5, rtol=1e-5), \
        float(jnp.max(jnp.abs(out - ref)))

    print("KERNEL_OK")
</pallas_src>

<mosaic_0001>
module attributes {stable_mosaic.version = 11 : i64} {
  func.func @kernel(%arg0: i32, %arg1: memref<8x12xf32, #tpu.memory_space<vmem>>, %arg2: memref<12x128xf32, #tpu.memory_space<vmem>>, %arg3: memref<1x128xf32, #tpu.memory_space<vmem>>, %arg4: memref<128x128xf32, #tpu.memory_space<vmem>>, %arg5: memref<1x128xf32, #tpu.memory_space<vmem>>, %arg6: memref<128x128xf32, #tpu.memory_space<vmem>>, %arg7: memref<1x128xf32, #tpu.memory_space<vmem>>, %arg8: memref<128x128xf32, #tpu.memory_space<vmem>>, %arg9: memref<1x128xf32, #tpu.memory_space<vmem>>, %arg10: memref<128x768xf32, #tpu.memory_space<vmem>>, %arg11: memref<1x768xf32, #tpu.memory_space<vmem>>, %arg12: memref<768x768xf32, #tpu.memory_space<vmem>>, %arg13: memref<1x768xf32, #tpu.memory_space<vmem>>, %arg14: memref<768x768xf32, #tpu.memory_space<vmem>>, %arg15: memref<1x768xf32, #tpu.memory_space<vmem>>, %arg16: memref<768x128xf32, #tpu.memory_space<vmem>>, %arg17: memref<1x128xf32, #tpu.memory_space<vmem>>, %arg18: memref<8x128xf32, #tpu.memory_space<vmem>>) attributes {dimension_semantics = [#tpu.dimension_semantics<parallel>], iteration_bounds = array<i64: 1>, scalar_prefetch = 0 : i64, scratch_operands = 0 : i64, tpu.core_type = #tpu.core_type<tc>, window_params = [{transform_indices = @transform_0, window_bounds = array<i64: 8, 12>}, {pipeline_mode = #tpu.pipeline_mode<synchronous>, transform_indices = @transform_1, window_bounds = array<i64: 12, 128>}, {pipeline_mode = #tpu.pipeline_mode<synchronous>, transform_indices = @transform_2, window_bounds = array<i64: 1, 128>}, {pipeline_mode = #tpu.pipeline_mode<synchronous>, transform_indices = @transform_3, window_bounds = array<i64: 128, 128>}, {pipeline_mode = #tpu.pipeline_mode<synchronous>, transform_indices = @transform_4, window_bounds = array<i64: 1, 128>}, {pipeline_mode = #tpu.pipeline_mode<synchronous>, transform_indices = @transform_5, window_bounds = array<i64: 128, 128>}, {pipeline_mode = #tpu.pipeline_mode<synchronous>, transform_indices = @transform_6, window_bounds = array<i64: 1, 128>}, {pipeline_mode = #tpu.pipeline_mode<synchronous>, transform_indices = @transform_7, window_bounds = array<i64: 128, 128>}, {pipeline_mode = #tpu.pipeline_mode<synchronous>, transform_indices = @transform_8, window_bounds = array<i64: 1, 128>}, {pipeline_mode = #tpu.pipeline_mode<synchronous>, transform_indices = @transform_9, window_bounds = array<i64: 128, 768>}, {pipeline_mode = #tpu.pipeline_mode<synchronous>, transform_indices = @transform_10, window_bounds = array<i64: 1, 768>}, {pipeline_mode = #tpu.pipeline_mode<synchronous>, transform_indices = @transform_11, window_bounds = array<i64: 768, 768>}, {pipeline_mode = #tpu.pipeline_mode<synchronous>, transform_indices = @transform_12, window_bounds = array<i64: 1, 768>}, {pipeline_mode = #tpu.pipeline_mode<synchronous>, transform_indices = @transform_13, window_bounds = array<i64: 768, 768>}, {pipeline_mode = #tpu.pipeline_mode<synchronous>, transform_indices = @transform_14, window_bounds = array<i64: 1, 768>}, {pipeline_mode = #tpu.pipeline_mode<synchronous>, transform_indices = @transform_15, window_bounds = array<i64: 768, 128>}, {pipeline_mode = #tpu.pipeline_mode<synchronous>, transform_indices = @transform_16, window_bounds = array<i64: 1, 128>}, {transform_indices = @transform_17, window_bounds = array<i64: 8, 128>}]} {
    %c0 = arith.constant 0 : index
    %c0_0 = arith.constant 0 : index
    %0 = vector.load %arg1[%c0, %c0_0] : memref<8x12xf32, #tpu.memory_space<vmem>>, vector<8x12xf32>
    %c0_1 = arith.constant 0 : index
    %c0_2 = arith.constant 0 : index
    %1 = vector.load %arg2[%c0_1, %c0_2] : memref<12x128xf32, #tpu.memory_space<vmem>>, vector<12x128xf32>
    %cst = arith.constant dense<0.000000e+00> : vector<8x128xf32>
    %2 = tpu.matmul %0, %1, %cst {dimension_numbers = #tpu.dot_dimension_numbers<[1], [0], [0], [1], [0, 0, 1, 1], [], []>} : vector<8x12xf32>, vector<12x128xf32>, vector<8x128xf32> -> vector<8x128xf32>
    %c0_3 = arith.constant 0 : index
    %c0_4 = arith.constant 0 : index
    %3 = vector.load %arg3[%c0_3, %c0_4] : memref<1x128xf32, #tpu.memory_space<vmem>>, vector<1x128xf32>
    %4 = vector.broadcast %3 : vector<1x128xf32> to vector<8x128xf32>
    %5 = arith.addf %2, %4 : vector<8x128xf32>
    %cst_5 = arith.constant 0.000000e+00 : f32
    %6 = vector.broadcast %cst_5 : f32 to vector<8x128xf32>
    %7 = arith.maximumf %5, %6 : vector<8x128xf32>
    %c0_6 = arith.constant 0 : index
    %c0_7 = arith.constant 0 : index
    %8 = vector.load %arg4[%c0_6, %c0_7] : memref<128x128xf32, #tpu.memory_space<vmem>>, vector<128x128xf32>
    %cst_8 = arith.constant dense<0.000000e+00> : vector<8x128xf32>
    %9 = tpu.matmul %7, %8, %cst_8 {dimension_numbers = #tpu.dot_dimension_numbers<[1], [0], [0], [1], [0, 0, 1, 1], [], []>} : vector<8x128xf32>, vector<128x128xf32>, vector<8x128xf32> -> vector<8x128xf32>
    %c0_9 = arith.constant 0 : index
    %c0_10 = arith.constant 0 : index
    %10 = vector.load %arg5[%c0_9, %c0_10] : memref<1x128xf32, #tpu.memory_space<vmem>>, vector<1x128xf32>
    %11 = vector.broadcast %10 : vector<1x128xf32> to vector<8x128xf32>
    %12 = arith.addf %9, %11 : vector<8x128xf32>
    %cst_11 = arith.constant 0.000000e+00 : f32
    %13 = vector.broadcast %cst_11 : f32 to vector<8x128xf32>
    %14 = arith.maximumf %12, %13 : vector<8x128xf32>
    %c0_12 = arith.constant 0 : index
    %c0_13 = arith.constant 0 : index
    %15 = vector.load %arg6[%c0_12, %c0_13] : memref<128x128xf32, #tpu.memory_space<vmem>>, vector<128x128xf32>
    %cst_14 = arith.constant dense<0.000000e+00> : vector<8x128xf32>
    %16 = tpu.matmul %14, %15, %cst_14 {dimension_numbers = #tpu.dot_dimension_numbers<[1], [0], [0], [1], [0, 0, 1, 1], [], []>} : vector<8x128xf32>, vector<128x128xf32>, vector<8x128xf32> -> vector<8x128xf32>
    %c0_15 = arith.constant 0 : index
    %c0_16 = arith.constant 0 : index
    %17 = vector.load %arg7[%c0_15, %c0_16] : memref<1x128xf32, #tpu.memory_space<vmem>>, vector<1x128xf32>
    %18 = vector.broadcast %17 : vector<1x128xf32> to vector<8x128xf32>
    %19 = arith.addf %16, %18 : vector<8x128xf32>
    %cst_17 = arith.constant 0.000000e+00 : f32
    %20 = vector.broadcast %cst_17 : f32 to vector<8x128xf32>
    %21 = arith.maximumf %19, %20 : vector<8x128xf32>
    %c0_18 = arith.constant 0 : index
    %c0_19 = arith.constant 0 : index
    %22 = vector.load %arg8[%c0_18, %c0_19] : memref<128x128xf32, #tpu.memory_space<vmem>>, vector<128x128xf32>
    %cst_20 = arith.constant dense<0.000000e+00> : vector<8x128xf32>
    %23 = tpu.matmul %21, %22, %cst_20 {dimension_numbers = #tpu.dot_dimension_numbers<[1], [0], [0], [1], [0, 0, 1, 1], [], []>} : vector<8x128xf32>, vector<128x128xf32>, vector<8x128xf32> -> vector<8x128xf32>
    %c0_21 = arith.constant 0 : index
    %c0_22 = arith.constant 0 : index
    %24 = vector.load %arg9[%c0_21, %c0_22] : memref<1x128xf32, #tpu.memory_space<vmem>>, vector<1x128xf32>
    %25 = vector.broadcast %24 : vector<1x128xf32> to vector<8x128xf32>
    %26 = arith.addf %23, %25 : vector<8x128xf32>
    %c0_23 = arith.constant 0 : index
    %c0_24 = arith.constant 0 : index
    %27 = vector.load %arg10[%c0_23, %c0_24] : memref<128x768xf32, #tpu.memory_space<vmem>>, vector<128x768xf32>
    %cst_25 = arith.constant dense<0.000000e+00> : vector<8x768xf32>
    %28 = tpu.matmul %26, %27, %cst_25 {dimension_numbers = #tpu.dot_dimension_numbers<[1], [0], [0], [1], [0, 0, 1, 1], [], []>} : vector<8x128xf32>, vector<128x768xf32>, vector<8x768xf32> -> vector<8x768xf32>
    %c0_26 = arith.constant 0 : index
    %c0_27 = arith.constant 0 : index
    %29 = vector.load %arg11[%c0_26, %c0_27] : memref<1x768xf32, #tpu.memory_space<vmem>>, vector<1x768xf32>
    %30 = vector.broadcast %29 : vector<1x768xf32> to vector<8x768xf32>
    %31 = arith.addf %28, %30 : vector<8x768xf32>
    %cst_28 = arith.constant 0.000000e+00 : f32
    %32 = vector.broadcast %cst_28 : f32 to vector<8x768xf32>
    %33 = arith.maximumf %31, %32 : vector<8x768xf32>
    %c0_29 = arith.constant 0 : index
    %c0_30 = arith.constant 0 : index
    %34 = vector.load %arg12[%c0_29, %c0_30] : memref<768x768xf32, #tpu.memory_space<vmem>>, vector<768x768xf32>
    %cst_31 = arith.constant dense<0.000000e+00> : vector<8x768xf32>
    %35 = tpu.matmul %33, %34, %cst_31 {dimension_numbers = #tpu.dot_dimension_numbers<[1], [0], [0], [1], [0, 0, 1, 1], [], []>} : vector<8x768xf32>, vector<768x768xf32>, vector<8x768xf32> -> vector<8x768xf32>
    %c0_32 = arith.constant 0 : index
    %c0_33 = arith.constant 0 : index
    %36 = vector.load %arg13[%c0_32, %c0_33] : memref<1x768xf32, #tpu.memory_space<vmem>>, vector<1x768xf32>
    %37 = vector.broadcast %36 : vector<1x768xf32> to vector<8x768xf32>
    %38 = arith.addf %35, %37 : vector<8x768xf32>
    %cst_34 = arith.constant 0.000000e+00 : f32
    %39 = vector.broadcast %cst_34 : f32 to vector<8x768xf32>
    %40 = arith.maximumf %38, %39 : vector<8x768xf32>
    %c0_35 = arith.constant 0 : index
    %c0_36 = arith.constant 0 : index
    %41 = vector.load %arg14[%c0_35, %c0_36] : memref<768x768xf32, #tpu.memory_space<vmem>>, vector<768x768xf32>
    %cst_37 = arith.constant dense<0.000000e+00> : vector<8x768xf32>
    %42 = tpu.matmul %40, %41, %cst_37 {dimension_numbers = #tpu.dot_dimension_numbers<[1], [0], [0], [1], [0, 0, 1, 1], [], []>} : vector<8x768xf32>, vector<768x768xf32>, vector<8x768xf32> -> vector<8x768xf32>
    %c0_38 = arith.constant 0 : index
    %c0_39 = arith.constant 0 : index
    %43 = vector.load %arg15[%c0_38, %c0_39] : memref<1x768xf32, #tpu.memory_space<vmem>>, vector<1x768xf32>
    %44 = vector.broadcast %43 : vector<1x768xf32> to vector<8x768xf32>
    %45 = arith.addf %42, %44 : vector<8x768xf32>
    %cst_40 = arith.constant 0.000000e+00 : f32
    %46 = vector.broadcast %cst_40 : f32 to vector<8x768xf32>
    %47 = arith.maximumf %45, %46 : vector<8x768xf32>
    %c0_41 = arith.constant 0 : index
    %c0_42 = arith.constant 0 : index
    %48 = vector.load %arg16[%c0_41, %c0_42] : memref<768x128xf32, #tpu.memory_space<vmem>>, vector<768x128xf32>
    %cst_43 = arith.constant dense<0.000000e+00> : vector<8x128xf32>
    %49 = tpu.matmul %47, %48, %cst_43 {dimension_numbers = #tpu.dot_dimension_numbers<[1], [0], [0], [1], [0, 0, 1, 1], [], []>} : vector<8x768xf32>, vector<768x128xf32>, vector<8x128xf32> -> vector<8x128xf32>
    %c0_44 = arith.constant 0 : index
    %c0_45 = arith.constant 0 : index
    %50 = vector.load %arg17[%c0_44, %c0_45] : memref<1x128xf32, #tpu.memory_space<vmem>>, vector<1x128xf32>
    %51 = vector.broadcast %50 : vector<1x128xf32> to vector<8x128xf32>
    %52 = arith.addf %49, %51 : vector<8x128xf32>
    %53 = arith.negf %52 : vector<8x128xf32>
    %54 = math.exp %53 : vector<8x128xf32>
    %cst_46 = arith.constant 1.000000e+00 : f32
    %55 = vector.broadcast %cst_46 : f32 to vector<8x128xf32>
    %56 = arith.addf %55, %54 : vector<8x128xf32>
    %57 = arith.divf %55, %56 : vector<8x128xf32>
    %c0_47 = arith.constant 0 : index
    %c0_48 = arith.constant 0 : index
    %58 = vector.load %arg18[%c0_47, %c0_48] : memref<8x128xf32, #tpu.memory_space<vmem>>, vector<8x128xf32>
    tpu.vector_store %arg18[%c0_47, %c0_48], %57 {strides = array<i32>} : memref<8x128xf32, #tpu.memory_space<vmem>>, vector<8x128xf32>,
    return
  }
  func.func @transform_0(%arg0: i32) -> (i32, i32) {
    %c0_i32 = arith.constant 0 : i32
    %c0_i32_0 = arith.constant 0 : i32
    return %arg0, %c0_i32 : i32, i32
  }
  func.func @transform_1(%arg0: i32) -> (i32, i32) {
    %c0_i32 = arith.constant 0 : i32
    %c0_i32_0 = arith.constant 0 : i32
    %c0_i32_1 = arith.constant 0 : i32
    return %c0_i32, %c0_i32_0 : i32, i32
  }
  func.func @transform_2(%arg0: i32) -> (i32, i32) {
    %c0_i32 = arith.constant 0 : i32
    %c0_i32_0 = arith.constant 0 : i32
    %c0_i32_1 = arith.constant 0 : i32
    return %c0_i32, %c0_i32_0 : i32, i32
  }
  func.func @transform_3(%arg0: i32) -> (i32, i32) {
    %c0_i32 = arith.constant 0 : i32
    %c0_i32_0 = arith.constant 0 : i32
    %c0_i32_1 = arith.constant 0 : i32
    return %c0_i32, %c0_i32_0 : i32, i32
  }
  func.func @transform_4(%arg0: i32) -> (i32, i32) {
    %c0_i32 = arith.constant 0 : i32
    %c0_i32_0 = arith.constant 0 : i32
    %c0_i32_1 = arith.constant 0 : i32
    return %c0_i32, %c0_i32_0 : i32, i32
  }
  func.func @transform_5(%arg0: i32) -> (i32, i32) {
    %c0_i32 = arith.constant 0 : i32
    %c0_i32_0 = arith.constant 0 : i32
    %c0_i32_1 = arith.constant 0 : i32
    return %c0_i32, %c0_i32_0 : i32, i32
  }
  func.func @transform_6(%arg0: i32) -> (i32, i32) {
    %c0_i32 = arith.constant 0 : i32
    %c0_i32_0 = arith.constant 0 : i32
    %c0_i32_1 = arith.constant 0 : i32
    return %c0_i32, %c0_i32_0 : i32, i32
  }
  func.func @transform_7(%arg0: i32) -> (i32, i32) {
    %c0_i32 = arith.constant 0 : i32
    %c0_i32_0 = arith.constant 0 : i32
    %c0_i32_1 = arith.constant 0 : i32
    return %c0_i32, %c0_i32_0 : i32, i32
  }
  func.func @transform_8(%arg0: i32) -> (i32, i32) {
    %c0_i32 = arith.constant 0 : i32
    %c0_i32_0 = arith.constant 0 : i32
    %c0_i32_1 = arith.constant 0 : i32
    return %c0_i32, %c0_i32_0 : i32, i32
  }
  func.func @transform_9(%arg0: i32) -> (i32, i32) {
    %c0_i32 = arith.constant 0 : i32
    %c0_i32_0 = arith.constant 0 : i32
    %c0_i32_1 = arith.constant 0 : i32
    return %c0_i32, %c0_i32_0 : i32, i32
  }
  func.func @transform_10(%arg0: i32) -> (i32, i32) {
    %c0_i32 = arith.constant 0 : i32
    %c0_i32_0 = arith.constant 0 : i32
    %c0_i32_1 = arith.constant 0 : i32
    return %c0_i32, %c0_i32_0 : i32, i32
  }
  func.func @transform_11(%arg0: i32) -> (i32, i32) {
    %c0_i32 = arith.constant 0 : i32
    %c0_i32_0 = arith.constant 0 : i32
    %c0_i32_1 = arith.constant 0 : i32
    return %c0_i32, %c0_i32_0 : i32, i32
  }
  func.func @transform_12(%arg0: i32) -> (i32, i32) {
    %c0_i32 = arith.constant 0 : i32
    %c0_i32_0 = arith.constant 0 : i32
    %c0_i32_1 = arith.constant 0 : i32
    return %c0_i32, %c0_i32_0 : i32, i32
  }
  func.func @transform_13(%arg0: i32) -> (i32, i32) {
    %c0_i32 = arith.constant 0 : i32
    %c0_i32_0 = arith.constant 0 : i32
    %c0_i32_1 = arith.constant 0 : i32
    return %c0_i32, %c0_i32_0 : i32, i32
  }
  func.func @transform_14(%arg0: i32) -> (i32, i32) {
    %c0_i32 = arith.constant 0 : i32
    %c0_i32_0 = arith.constant 0 : i32
    %c0_i32_1 = arith.constant 0 : i32
    return %c0_i32, %c0_i32_0 : i32, i32
  }
  func.func @transform_15(%arg0: i32) -> (i32, i32) {
    %c0_i32 = arith.constant 0 : i32
    %c0_i32_0 = arith.constant 0 : i32
    %c0_i32_1 = arith.constant 0 : i32
    return %c0_i32, %c0_i32_0 : i32, i32
  }
  func.func @transform_16(%arg0: i32) -> (i32, i32) {
    %c0_i32 = arith.constant 0 : i32
    %c0_i32_0 = arith.constant 0 : i32
    %c0_i32_1 = arith.constant 0 : i32
    return %c0_i32, %c0_i32_0 : i32, i32
  }
  func.func @transform_17(%arg0: i32) -> (i32, i32) {
    %c0_i32 = arith.constant 0 : i32
    %c0_i32_0 = arith.constant 0 : i32
    return %arg0, %c0_i32 : i32, i32
  }
}

</mosaic_0001>

<llo_original>
// kernel: tpu_custom_call.1
$region0: #{tpu_custom_call.1}
  #allocation0 [shape = 'u32[]', space=smem, size = 0x4, offset = 0x4, fixed_abs, tag = 'smem constant byte address 0x4 - core index']
  #allocation1 [shape = 'u32[144,128]{1,0:T(1,128)}', space=vmem, size = 0x12000, scoped, tag = 'internal scratch']
  %s0 = inlined_call_operand.hbm [shape: f32[8,12], index: 0, kind: input, shape index: {}]
  %s1 = inlined_call_operand.hbm [shape: f32[12,128], index: 1, kind: input, shape index: {}]
  %s2 = inlined_call_operand.hbm [shape: f32[1,128], index: 2, kind: input, shape index: {}]
  %s3 = inlined_call_operand.hbm [shape: f32[128,128], index: 3, kind: input, shape index: {}]
  %s4 = inlined_call_operand.hbm [shape: f32[1,128], index: 4, kind: input, shape index: {}]
  %s5 = inlined_call_operand.hbm [shape: f32[128,128], index: 5, kind: input, shape index: {}]
  %s6 = inlined_call_operand.hbm [shape: f32[1,128], index: 6, kind: input, shape index: {}]
  %s7 = inlined_call_operand.hbm [shape: f32[128,128], index: 7, kind: input, shape index: {}]
  %s8 = inlined_call_operand.hbm [shape: f32[1,128], index: 8, kind: input, shape index: {}]
  %s9 = inlined_call_operand.hbm [shape: f32[128,768], index: 9, kind: input, shape index: {}]
  %s10 = inlined_call_operand.hbm [shape: f32[1,768], index: 10, kind: input, shape index: {}]
  %s11 = inlined_call_operand.hbm [shape: f32[768,768], index: 11, kind: input, shape index: {}]
  %s12 = inlined_call_operand.hbm [shape: f32[1,768], index: 12, kind: input, shape index: {}]
  %s13 = inlined_call_operand.hbm [shape: f32[768,768], index: 13, kind: input, shape index: {}]
  %s14 = inlined_call_operand.hbm [shape: f32[1,768], index: 14, kind: input, shape index: {}]
  %s15 = inlined_call_operand.hbm [shape: f32[768,128], index: 15, kind: input, shape index: {}]
  %s16 = inlined_call_operand.hbm [shape: f32[1,128], index: 16, kind: input, shape index: {}]
  %s17 = inlined_call_operand.hbm [shape: f32[8,128], index: 17, kind: output, shape index: {}]
  %s18 = sld [smem:[#allocation0]]
  $region146: #{tpu_custom_call.1} parent=0
    _
  %s20 = ssub.s32 1, %s18
  %s21 = scalar_select 0, %s20, %s18
  $region1: #{tpu_custom_call.1} parent=0
    #allocation2 [shape = 'u8[4096]{0}', space=vmem, size = 0x1000, scoped, tag = 'input window, operand 0, single buffered']
    #allocation3 [shape = 's32[1]{0}', space=sflag, size = 0x4, scoped, tag = 'scoped memory for tpu_custom_call.1']
    #allocation4 [shape = 's32[1]{0}', space=sflag, size = 0x4, scoped, tag = 'scoped memory for tpu_custom_call.1']
    #allocation5 [shape = 'u8[8192]{0}', space=vmem, size = 0x2000, scoped, tag = 'input window, operand 1, single buffered']
    #allocation6 [shape = 's32[1]{0}', space=sflag, size = 0x4, scoped, tag = 'scoped memory for tpu_custom_call.1']
    #allocation7 [shape = 'u8[512]{0}', space=vmem, size = 0x400, scoped, tag = 'input window, operand 2, single buffered']
    #allocation8 [shape = 'u8[65536]{0}', space=vmem, size = 0x10000, scoped, tag = 'input window, operand 3, single buffered']
    #allocation9 [shape = 's32[1]{0}', space=sflag, size = 0x4, scoped, tag = 'scoped memory for tpu_custom_call.1']
    #allocation10 [shape = 'u8[512]{0}', space=vmem, size = 0x400, scoped, tag = 'input window, operand 4, single buffered']
    #allocation11 [shape = 'u8[65536]{0}', space=vmem, size = 0x10000, scoped, tag = 'input window, operand 5, single buffered']
    #allocation12 [shape = 's32[1]{0}', space=sflag, size = 0x4, scoped, tag = 'scoped memory for tpu_custom_call.1']
    #allocation13 [shape = 'u8[512]{0}', space=vmem, size = 0x400, scoped, tag = 'input window, operand 6, single buffered']
    #allocation14 [shape = 'u8[65536]{0}', space=vmem, size = 0x10000, scoped, tag = 'input window, operand 7, single buffered']
    #allocation15 [shape = 's32[1]{0}', space=sflag, size = 0x4, scoped, tag = 'scoped memory for tpu_custom_call.1']
    #allocation16 [shape = 'u8[512]{0}', space=vmem, size = 0x400, scoped, tag = 'input window, operand 8, single buffered']
    #allocation17 [shape = 'u8[393216]{0}', space=vmem, size = 0x60000, scoped, tag = 'input window, operand 9, single buffered']
    #allocation18 [shape = 's32[1]{0}', space=sflag, size = 0x4, scoped, tag = 'scoped memory for tpu_custom_call.1']
    #allocation19 [shape = 'u8[3072]{0}', space=vmem, size = 0xc00, scoped, tag = 'input window, operand 10, single buffered']
    #allocation20 [shape = 'u8[2359296]{0}', space=vmem, size = 0x240000, scoped, tag = 'input window, operand 11, single buffered']
    #allocation21 [shape = 's32[1]{0}', space=sflag, size = 0x4, scoped, tag = 'scoped memory for tpu_custom_call.1']
    #allocation22 [shape = 'u8[3072]{0}', space=vmem, size = 0xc00, scoped, tag = 'input window, operand 12, single buffered']
    #allocation23 [shape = 'u8[2359296]{0}', space=vmem, size = 0x240000, scoped, tag = 'input window, operand 13, single buffered']
    #allocation24 [shape = 's32[1]{0}', space=sflag, size = 0x4, scoped, tag = 'scoped memory for tpu_custom_call.1']
    #allocation25 [shape = 'u8[3072]{0}', space=vmem, size = 0xc00, scoped, tag = 'input window, operand 14, single buffered']
    #allocation26 [shape = 'u8[393216]{0}', space=vmem, size = 0x60000, scoped, tag = 'input window, operand 15, single buffered']
    #allocation27 [shape = 's32[1]{0}', space=sflag, size = 0x4, scoped, tag = 'scoped memory for tpu_custom_call.1']
    #allocation28 [shape = 'u8[512]{0}', space=vmem, size = 0x400, scoped, tag = 'input window, operand 16, single buffered']
    #allocation29 [shape = 'u8[4096]{0}', space=vmem, size = 0x1000, scoped, tag = 'output window, operand 0, single buffered']
    %22 = vsyncpa [#allocation3], 0
    %23 = vsyncpa [#allocation6], 0
    %24 = vsyncpa [#allocation9], 0
    %25 = vsyncpa [#allocation12], 0
    %26 = vsyncpa [#allocation15], 0
    %27 = vsyncpa [#allocation18], 0
    %28 = vsyncpa [#allocation21], 0
    %29 = vsyncpa [#allocation24], 0
    %30 = vsyncpa [#allocation27], 0
    %31 = vsyncpa [#allocation4], 0
    // Predicated region
    $region2: #{tpu_custom_call.1} parent=1 // pred_check
      _
    $region3: #{tpu_custom_call.1} parent=1 // pred_check_branch
      %33 = sbr.rel (0) target = $region5
    $region4: #{tpu_custom_call.1} parent=1 // pred_region
      %s35 = ssub.s32 128, 128
      %36 = vsyncadd [#allocation3], %s35
      %s38 = sshll.u32 [#allocation2], 4
      %s39 = int_to_ptr.vmem [resolvable:$true] %s38
      %41 = dma.hbm_to_vmem [thread:$0]  %s0, 128, %s39, [#allocation3]
    $region5: #{tpu_custom_call.1} parent=1 // pred_fallthru
      _
    // Predicated region
    $region6: #{tpu_custom_call.1} parent=1 // pred_check
      _
    $region7: #{tpu_custom_call.1} parent=1 // pred_check_branch
      %43 = sbr.rel (0) target = $region9
    $region8: #{tpu_custom_call.1} parent=1 // pred_region
      %s45 = ssub.s32 256, 256
      %46 = vsyncadd [#allocation6], %s45
      %s47 = sshll.u32 [#allocation5], 4
      %s48 = int_to_ptr.vmem [resolvable:$true] %s47
      %53 = dma.hbm_to_vmem [thread:$0]  %s1, 256, %s48, [#allocation6], 128, 128, 8
    $region9: #{tpu_custom_call.1} parent=1 // pred_fallthru
      _
    // Predicated region
    $region10: #{tpu_custom_call.1} parent=1 // pred_check
      _
    $region11: #{tpu_custom_call.1} parent=1 // pred_check_branch
      %55 = sbr.rel (0) target = $region13
    $region12: #{tpu_custom_call.1} parent=1 // pred_region
      %s57 = ssub.s32 16, 16
      %58 = vsyncadd [#allocation6], %s57
      %s60 = sshll.u32 [#allocation7], 4
      %s61 = int_to_ptr.vmem [resolvable:$true] %s60
      %63 = dma.hbm_to_vmem [thread:$0]  %s2, 16, %s61, [#allocation6]
    $region13: #{tpu_custom_call.1} parent=1 // pred_fallthru
      _
    // Predicated region
    $region14: #{tpu_custom_call.1} parent=1 // pred_check
      _
    $region15: #{tpu_custom_call.1} parent=1 // pred_check_branch
      %65 = sbr.rel (0) target = $region17
    $region16: #{tpu_custom_call.1} parent=1 // pred_region
      %s67 = ssub.s32 2048, 2048
      %68 = vsyncadd [#allocation9], %s67
      %s69 = sshll.u32 [#allocation8], 4
      %s70 = int_to_ptr.vmem [resolvable:$true] %s69
      %75 = dma.hbm_to_vmem [thread:$0]  %s3, 2048, %s70, [#allocation9], 128, 128, 8
    $region17: #{tpu_custom_call.1} parent=1 // pred_fallthru
      _
    // Predicated region
    $region18: #{tpu_custom_call.1} parent=1 // pred_check
      _
    $region19: #{tpu_custom_call.1} parent=1 // pred_check_branch
      %77 = sbr.rel (0) target = $region21
    $region20: #{tpu_custom_call.1} parent=1 // pred_region
      %s79 = ssub.s32 16, 16
      %80 = vsyncadd [#allocation9], %s79
      %s82 = sshll.u32 [#allocation10], 4
      %s83 = int_to_ptr.vmem [resolvable:$true] %s82
      %85 = dma.hbm_to_vmem [thread:$0]  %s4, 16, %s83, [#allocation9]
    $region21: #{tpu_custom_call.1} parent=1 // pred_fallthru
      _
    // Predicated region
    $region22: #{tpu_custom_call.1} parent=1 // pred_check
      _
    $region23: #{tpu_custom_call.1} parent=1 // pred_check_branch
      %87 = sbr.rel (0) target = $region25
    $region24: #{tpu_custom_call.1} parent=1 // pred_region
      %s89 = ssub.s32 2048, 2048
      %90 = vsyncadd [#allocation12], %s89
      %s91 = sshll.u32 [#allocation11], 4
      %s92 = int_to_ptr.vmem [resolvable:$true] %s91
      %97 = dma.hbm_to_vmem [thread:$0]  %s5, 2048, %s92, [#allocation12], 128, 128, 8
    $region25: #{tpu_custom_call.1} parent=1 // pred_fallthru
      _
    // Predicated region
    $region26: #{tpu_custom_call.1} parent=1 // pred_check
      _
    $region27: #{tpu_custom_call.1} parent=1 // pred_check_branch
      %99 = sbr.rel (0) target = $region29
    $region28: #{tpu_custom_call.1} parent=1 // pred_region
      %s101 = ssub.s32 16, 16
      %102 = vsyncadd [#allocation12], %s101
      %s104 = sshll.u32 [#allocation13], 4
      %s105 = int_to_ptr.vmem [resolvable:$true] %s104
      %107 = dma.hbm_to_vmem [thread:$0]  %s6, 16, %s105, [#allocation12]
    $region29: #{tpu_custom_call.1} parent=1 // pred_fallthru
      _
    // Predicated region
    $region30: #{tpu_custom_call.1} parent=1 // pred_check
      _
    $region31: #{tpu_custom_call.1} parent=1 // pred_check_branch
      %109 = sbr.rel (0) target = $region33
    $region32: #{tpu_custom_call.1} parent=1 // pred_region
      %s111 = ssub.s32 2048, 2048
      %112 = vsyncadd [#allocation15], %s111
      %s113 = sshll.u32 [#allocation14], 4
      %s114 = int_to_ptr.vmem [resolvable:$true] %s113
      %119 = dma.hbm_to_vmem [thread:$0]  %s7, 2048, %s114, [#allocation15], 128, 128, 8
    $region33: #{tpu_custom_call.1} parent=1 // pred_fallthru
      _
    // Predicated region
    $region34: #{tpu_custom_call.1} parent=1 // pred_check
      _
    $region35: #{tpu_custom_call.1} parent=1 // pred_check_branch
      %121 = sbr.rel (0) target = $region37
    $region36: #{tpu_custom_call.1} parent=1 // pred_region
      %s123 = ssub.s32 16, 16
      %124 = vsyncadd [#allocation15], %s123
      %s126 = sshll.u32 [#allocation16], 4
      %s127 = int_to_ptr.vmem [resolvable:$true] %s126
      %129 = dma.hbm_to_vmem [thread:$0]  %s8, 16, %s127, [#allocation15]
    $region37: #{tpu_custom_call.1} parent=1 // pred_fallthru
      _
    // Predicated region
    $region38: #{tpu_custom_call.1} parent=1 // pred_check
      _
    $region39: #{tpu_custom_call.1} parent=1 // pred_check_branch
      %131 = sbr.rel (0) target = $region41
    $region40: #{tpu_custom_call.1} parent=1 // pred_region
      %s133 = ssub.s32 12288, 12288
      %134 = vsyncadd [#allocation18], %s133
      %s135 = sshll.u32 [#allocation17], 4
      %s136 = int_to_ptr.vmem [resolvable:$true] %s135
      %141 = dma.hbm_to_vmem [thread:$0]  %s9, 12288, %s136, [#allocation18], 768, 768, 48
    $region41: #{tpu_custom_call.1} parent=1 // pred_fallthru
      _
    // Predicated region
    $region42: #{tpu_custom_call.1} parent=1 // pred_check
      _
    $region43: #{tpu_custom_call.1} parent=1 // pred_check_branch
      %143 = sbr.rel (0) target = $region45
    $region44: #{tpu_custom_call.1} parent=1 // pred_region
      %s145 = ssub.s32 96, 96
      %146 = vsyncadd [#allocation18], %s145
      %s148 = sshll.u32 [#allocation19], 4
      %s149 = int_to_ptr.vmem [resolvable:$true] %s148
      %151 = dma.hbm_to_vmem [thread:$0]  %s10, 96, %s149, [#allocation18]
    $region45: #{tpu_custom_call.1} parent=1 // pred_fallthru
      _
    // Predicated region
    $region46: #{tpu_custom_call.1} parent=1 // pred_check
      _
    $region47: #{tpu_custom_call.1} parent=1 // pred_check_branch
      %153 = sbr.rel (0) target = $region49
    $region48: #{tpu_custom_call.1} parent=1 // pred_region
      %s155 = ssub.s32 73728, 73728
      %156 = vsyncadd [#allocation21], %s155
      %s157 = sshll.u32 [#allocation20], 4
      %s158 = int_to_ptr.vmem [resolvable:$true] %s157
      %163 = dma.hbm_to_vmem [thread:$0]  %s11, 73728, %s158, [#allocation21], 768, 768, 48
    $region49: #{tpu_custom_call.1} parent=1 // pred_fallthru
      _
    // Predicated region
    $region50: #{tpu_custom_call.1} parent=1 // pred_check
      _
    $region51: #{tpu_custom_call.1} parent=1 // pred_check_branch
      %165 = sbr.rel (0) target = $region53
    $region52: #{tpu_custom_call.1} parent=1 // pred_region
      %s167 = ssub.s32 96, 96
      %168 = vsyncadd [#allocation21], %s167
      %s170 = sshll.u32 [#allocation22], 4
      %s171 = int_to_ptr.vmem [resolvable:$true] %s170
      %173 = dma.hbm_to_vmem [thread:$0]  %s12, 96, %s171, [#allocation21]
    $region53: #{tpu_custom_call.1} parent=1 // pred_fallthru
      _
    // Predicated region
    $region54: #{tpu_custom_call.1} parent=1 // pred_check
      _
    $region55: #{tpu_custom_call.1} parent=1 // pred_check_branch
      %175 = sbr.rel (0) target = $region57
    $region56: #{tpu_custom_call.1} parent=1 // pred_region
      %s177 = ssub.s32 73728, 73728
      %178 = vsyncadd [#allocation24], %s177
      %s179 = sshll.u32 [#allocation23], 4
      %s180 = int_to_ptr.vmem [resolvable:$true] %s179
      %185 = dma.hbm_to_vmem [thread:$0]  %s13, 73728, %s180, [#allocation24], 768, 768, 48
    $region57: #{tpu_custom_call.1} parent=1 // pred_fallthru
      _
    // Predicated region
    $region58: #{tpu_custom_call.1} parent=1 // pred_check
      _
    $region59: #{tpu_custom_call.1} parent=1 // pred_check_branch
      %187 = sbr.rel (0) target = $region61
    $region60: #{tpu_custom_call.1} parent=1 // pred_region
      %s189 = ssub.s32 96, 96
      %190 = vsyncadd [#allocation24], %s189
      %s192 = sshll.u32 [#allocation25], 4
      %s193 = int_to_ptr.vmem [resolvable:$true] %s192
      %195 = dma.hbm_to_vmem [thread:$0]  %s14, 96, %s193, [#allocation24]
    $region61: #{tpu_custom_call.1} parent=1 // pred_fallthru
      _
    // Predicated region
    $region62: #{tpu_custom_call.1} parent=1 // pred_check
      _
    $region63: #{tpu_custom_call.1} parent=1 // pred_check_branch
      %197 = sbr.rel (0) target = $region65
    $region64: #{tpu_custom_call.1} parent=1 // pred_region
      %s199 = ssub.s32 12288, 12288
      %200 = vsyncadd [#allocation27], %s199
      %s201 = sshll.u32 [#allocation26], 4
      %s202 = int_to_ptr.vmem [resolvable:$true] %s201
      %207 = dma.hbm_to_vmem [thread:$0]  %s15, 12288, %s202, [#allocation27], 128, 128, 8
    $region65: #{tpu_custom_call.1} parent=1 // pred_fallthru
      _
    // Predicated region
    $region66: #{tpu_custom_call.1} parent=1 // pred_check
      _
    $region67: #{tpu_custom_call.1} parent=1 // pred_check_branch
      %209 = sbr.rel (0) target = $region69
    $region68: #{tpu_custom_call.1} parent=1 // pred_region
      %s211 = ssub.s32 16, 16
      %212 = vsyncadd [#allocation27], %s211
      %s214 = sshll.u32 [#allocation28], 4
      %s215 = int_to_ptr.vmem [resolvable:$true] %s214
      %217 = dma.hbm_to_vmem [thread:$0]  %s16, 16, %s215, [#allocation27]
    $region69: #{tpu_custom_call.1} parent=1 // pred_fallthru
      _
    // Predicated region
    $region70: #{tpu_custom_call.1} parent=1 // pred_check
      _
    $region71: #{tpu_custom_call.1} parent=1 // pred_check_branch
      %219 = sbr.rel (0) target = $region73
    $region72: #{tpu_custom_call.1} parent=1 // pred_region
      %220 = dma.done [#allocation3], 128
    $region73: #{tpu_custom_call.1} parent=1 // pred_fallthru
      _
    // Predicated region
    $region74: #{tpu_custom_call.1} parent=1 // pred_check
      _
    $region75: #{tpu_custom_call.1} parent=1 // pred_check_branch
      %222 = sbr.rel (0) target = $region77
    $region76: #{tpu_custom_call.1} parent=1 // pred_region
      %223 = dma.done [#allocation6], 256
    $region77: #{tpu_custom_call.1} parent=1 // pred_fallthru
      _
    // Predicated region
    $region78: #{tpu_custom_call.1} parent=1 // pred_check
      _
    $region79: #{tpu_custom_call.1} parent=1 // pred_check_branch
      %225 = sbr.rel (0) target = $region81
    $region80: #{tpu_custom_call.1} parent=1 // pred_region
      %226 = dma.done [#allocation6], 16
    $region81: #{tpu_custom_call.1} parent=1 // pred_fallthru
      _
    // Predicated region
    $region82: #{tpu_custom_call.1} parent=1 // pred_check
      _
    $region83: #{tpu_custom_call.1} parent=1 // pred_check_branch
      %228 = sbr.rel (0) target = $region85
    $region84: #{tpu_custom_call.1} parent=1 // pred_region
      %229 = dma.done [#allocation9], 2048
    $region85: #{tpu_custom_call.1} parent=1 // pred_fallthru
      _
    // Predicated region
    $region86: #{tpu_custom_call.1} parent=1 // pred_check
      _
    $region87: #{tpu_custom_call.1} parent=1 // pred_check_branch
      %231 = sbr.rel (0) target = $region89
    $region88: #{tpu_custom_call.1} parent=1 // pred_region
      %232 = dma.done [#allocation9], 16
    $region89: #{tpu_custom_call.1} parent=1 // pred_fallthru
      _
    // Predicated region
    $region90: #{tpu_custom_call.1} parent=1 // pred_check
      _
    $region91: #{tpu_custom_call.1} parent=1 // pred_check_branch
      %234 = sbr.rel (0) target = $region93
    $region92: #{tpu_custom_call.1} parent=1 // pred_region
      %235 = dma.done [#allocation12], 2048
    $region93: #{tpu_custom_call.1} parent=1 // pred_fallthru
      _
    // Predicated region
    $region94: #{tpu_custom_call.1} parent=1 // pred_check
      _
    $region95: #{tpu_custom_call.1} parent=1 // pred_check_branch
      %237 = sbr.rel (0) target = $region97
    $region96: #{tpu_custom_call.1} parent=1 // pred_region
      %238 = dma.done [#allocation12], 16
    $region97: #{tpu_custom_call.1} parent=1 // pred_fallthru
      _
    // Predicated region
    $region98: #{tpu_custom_call.1} parent=1 // pred_check
      _
    $region99: #{tpu_custom_call.1} parent=1 // pred_check_branch
      %240 = sbr.rel (0) target = $region101
    $region100: #{tpu_custom_call.1} parent=1 // pred_region
      %241 = dma.done [#allocation15], 2048
    $region101: #{tpu_custom_call.1} parent=1 // pred_fallthru
      _
    // Predicated region
    $region102: #{tpu_custom_call.1} parent=1 // pred_check
      _
    $region103: #{tpu_custom_call.1} parent=1 // pred_check_branch
      %243 = sbr.rel (0) target = $region105
    $region104: #{tpu_custom_call.1} parent=1 // pred_region
      %244 = dma.done [#allocation15], 16
    $region105: #{tpu_custom_call.1} parent=1 // pred_fallthru
      _
    // Predicated region
    $region106: #{tpu_custom_call.1} parent=1 // pred_check
      _
    $region107: #{tpu_custom_call.1} parent=1 // pred_check_branch
      %246 = sbr.rel (0) target = $region109
    $region108: #{tpu_custom_call.1} parent=1 // pred_region
      %247 = dma.done [#allocation18], 12288
    $region109: #{tpu_custom_call.1} parent=1 // pred_fallthru
      _
    // Predicated region
    $region110: #{tpu_custom_call.1} parent=1 // pred_check
      _
    $region111: #{tpu_custom_call.1} parent=1 // pred_check_branch
      %249 = sbr.rel (0) target = $region113
    $region112: #{tpu_custom_call.1} parent=1 // pred_region
      %250 = dma.done [#allocation18], 96
    $region113: #{tpu_custom_call.1} parent=1 // pred_fallthru
      _
    // Predicated region
    $region114: #{tpu_custom_call.1} parent=1 // pred_check
      _
    $region115: #{tpu_custom_call.1} parent=1 // pred_check_branch
      %252 = sbr.rel (0) target = $region117
    $region116: #{tpu_custom_call.1} parent=1 // pred_region
      %253 = dma.done [#allocation21], 73728
    $region117: #{tpu_custom_call.1} parent=1 // pred_fallthru
      _
    // Predicated region
    $region118: #{tpu_custom_call.1} parent=1 // pred_check
      _
    $region119: #{tpu_custom_call.1} parent=1 // pred_check_branch
      %255 = sbr.rel (0) target = $region121
    $region120: #{tpu_custom_call.1} parent=1 // pred_region
      %256 = dma.done [#allocation21], 96
    $region121: #{tpu_custom_call.1} parent=1 // pred_fallthru
      _
    // Predicated region
    $region122: #{tpu_custom_call.1} parent=1 // pred_check
      _
    $region123: #{tpu_custom_call.1} parent=1 // pred_check_branch
      %258 = sbr.rel (0) target = $region125
    $region124: #{tpu_custom_call.1} parent=1 // pred_region
      %259 = dma.done [#allocation24], 73728
    $region125: #{tpu_custom_call.1} parent=1 // pred_fallthru
      _
    // Predicated region
    $region126: #{tpu_custom_call.1} parent=1 // pred_check
      _
    $region127: #{tpu_custom_call.1} parent=1 // pred_check_branch
      %261 = sbr.rel (0) target = $region129
    $region128: #{tpu_custom_call.1} parent=1 // pred_region
      %262 = dma.done [#allocation24], 96
    $region129: #{tpu_custom_call.1} parent=1 // pred_fallthru
      _
    // Predicated region
    $region130: #{tpu_custom_call.1} parent=1 // pred_check
      _
    $region131: #{tpu_custom_call.1} parent=1 // pred_check_branch
      %264 = sbr.rel (0) target = $region133
    $region132: #{tpu_custom_call.1} parent=1 // pred_region
      %265 = dma.done [#allocation27], 12288
    $region133: #{tpu_custom_call.1} parent=1 // pred_fallthru
      _
    // Predicated region
    $region134: #{tpu_custom_call.1} parent=1 // pred_check
      _
    $region135: #{tpu_custom_call.1} parent=1 // pred_check_branch
      %267 = sbr.rel (0) target = $region137
    $region136: #{tpu_custom_call.1} parent=1 // pred_region
      %268 = dma.done [#allocation27], 16
    $region137: #{tpu_custom_call.1} parent=1 // pred_fallthru
      _
    %v269 = vld [vmem:[#allocation2] sm:$0xff]
    %v270 = vld [vmem:[#allocation5] sm:$0xff]
    %v271 = vld [vmem:[#allocation5 + $0x8] sm:$0xf]
    %v272 = vld [vmem:[#allocation7] sm:$0x1]
    %v274 = vlaneseq
    %v275 = vshrl.u32 %v274, 7
    %v276 = vsub.s32 0, %v275
    %v277 = vrot.slane %v272, %v276
    %vm279 = vcmask 97280
    %v281 = vsel %vm279, %v269, 0
    %vm283 = vcmask 1043456
    %v285 = vsel %vm283, %v271, 0
    %287 = vmatprep.subr.mxu0 0.0
    %288 = vmatpush1.msra.mxu0 %v270
    %289 = vmatprep.subr.mxu0 0.0
    %290 = vmatpush1.msra.mxu0 %v285
    %291 = vmatprep.subr.mxu0 0.0
    %292 = vmatpush1.msra.mxu0 0.0
    %293 = vmatprep.subr.mxu0 0.0
    %294 = vmatpush1.msra.mxu0 0.0
    %295 = vmatprep.subr.mxu0 0.0
    %296 = vmatpush1.msra.mxu0 0.0
    %297 = vmatprep.subr.mxu0 0.0
    %298 = vmatpush1.msra.mxu0 0.0
    %299 = vmatprep.subr.mxu0 0.0
    %300 = vmatpush1.msra.mxu0 0.0
    %301 = vmatprep.subr.mxu0 0.0
    %302 = vmatpush1.msra.mxu0 0.0
    %303 = vmatprep.subr.mxu0 0.0
    %304 = vmatpush1.msra.mxu0 0.0
    %305 = vmatprep.subr.mxu0 0.0
    %306 = vmatpush1.msra.mxu0 0.0
    %307 = vmatprep.subr.mxu0 0.0
    %308 = vmatpush1.msra.mxu0 0.0
    %309 = vmatprep.subr.mxu0 0.0
    %310 = vmatpush1.msra.mxu0 0.0
    %311 = vmatprep.subr.mxu0 0.0
    %312 = vmatpush1.msra.mxu0 0.0
    %313 = vmatprep.subr.mxu0 0.0
    %314 = vmatpush1.msra.mxu0 0.0
    %315 = vmatprep.subr.mxu0 0.0
    %316 = vmatpush1.msra.mxu0 0.0
    %317 = vmatprep.subr.mxu0 0.0
    %318 = vmatpush1.msra.mxu0 0.0
    %319 = vmatprep.subr.mxu0 0.0
    %320 = vmatpush1.msra.mxu0 0.0
    %321 = vmatprep.subr.mxu0 0.0
    %322 = vmatpush1.msra.mxu0 0.0
    %323 = vmatprep.subr.mxu0 0.0
    %324 = vmatpush1.msra.mxu0 0.0
    %325 = vmatprep.subr.mxu0 0.0
    %326 = vmatpush1.msra.mxu0 0.0
    %327 = vmatprep.subr.mxu0 0.0
    %328 = vmatpush1.msra.mxu0 0.0
    %329 = vmatprep.subr.mxu0 0.0
    %330 = vmatpush1.msra.mxu0 0.0
    %331 = vmatprep.subr.mxu0 0.0
    %332 = vmatpush1.msra.mxu0 0.0
    %333 = vmatprep.subr.mxu0 0.0
    %334 = vmatpush1.msra.mxu0 0.0
    %335 = vmatprep.subr.mxu0 0.0
    %336 = vmatpush1.msra.mxu0 0.0
    %337 = vmatprep.subr.mxu0 0.0
    %338 = vmatpush1.msra.mxu0 0.0
    %339 = vmatprep.subr.mxu0 0.0
    %340 = vmatpush1.msra.mxu0 0.0
    %341 = vmatprep.subr.mxu0 0.0
    %342 = vmatpush1.msra.mxu0 0.0
    %343 = vmatprep.subr.mxu0 0.0
    %344 = vmatpush1.msra.mxu0 0.0
    %345 = vmatprep.subr.mxu0 0.0
    %346 = vmatpush1.msra.mxu0 0.0
    %347 = vmatprep.subr.mxu0 0.0
    %348 = vmatpush1.msra.mxu0 0.0
    %349 = vmatprep.subr.mxu0 0.0
    %350 = vmatpush1.msra.mxu0 0.0
    %351 = vmatprep.mubr.f32.mxu0 0.0
    %352 = vmatmul.mubr.f32.gmra.mrb[0].mxu0 %v281
    %v353 = vpop.f32.mrb[0].mxu0
    %v354 = vadd.f32 %v277, %v353
    %v355 = vpop.f32.mrb[0].mxu0
    %356 = vdwg.mxu0
    %v357 = vmax.f32 %v354, 0.0
    %v358 = vld [vmem:[#allocation8] sm:$0xff]
    %v359 = vld [vmem:[#allocation8 + $0x8] sm:$0xff]
    %v360 = vld [vmem:[#allocation8 + $0x10] sm:$0xff]
    %v361 = vld [vmem:[#allocation8 + $0x18] sm:$0xff]
    %v362 = vld [vmem:[#allocation8 + $0x20] sm:$0xff]
    %v363 = vld [vmem:[#allocation8 + $0x28] sm:$0xff]
    %v364 = vld [vmem:[#allocation8 + $0x30] sm:$0xff]
    %v365 = vld [vmem:[#allocation8 + $0x38] sm:$0xff]
    %v366 = vld [vmem:[#allocation8 + $0x40] sm:$0xff]
    %v367 = vld [vmem:[#allocation8 + $0x48] sm:$0xff]
    %v368 = vld [vmem:[#allocation8 + $0x50] sm:$0xff]
    %v369 = vld [vmem:[#allocation8 + $0x58] sm:$0xff]
    %v370 = vld [vmem:[#allocation8 + $0x60] sm:$0xff]
    %v371 = vld [vmem:[#allocation8 + $0x68] sm:$0xff]
    %v372 = vld [vmem:[#allocation8 + $0x70] sm:$0xff]
    %v373 = vld [vmem:[#allocation8 + $0x78] sm:$0xff]
    %v374 = vld [vmem:[#allocation10] sm:$0x1]
    %v376 = vlaneseq
    %v377 = vshrl.u32 %v376, 7
    %v378 = vsub.s32 0, %v377
    %v379 = vrot.slane %v374, %v378
    %381 = vmatprep.subr.mxu0 0.0
    %382 = vmatpush1.msra.mxu0 %v358
    %383 = vmatprep.subr.mxu0 0.0
    %384 = vmatpush1.msra.mxu0 %v359
    %385 = vmatprep.subr.mxu0 0.0
    %386 = vmatpush1.msra.mxu0 %v360
    %387 = vmatprep.subr.mxu0 0.0
    %388 = vmatpush1.msra.mxu0 %v361
    %389 = vmatprep.subr.mxu0 0.0
    %390 = vmatpush1.msra.mxu0 %v362
    %391 = vmatprep.subr.mxu0 0.0
    %392 = vmatpush1.msra.mxu0 %v363
    %393 = vmatprep.subr.mxu0 0.0
    %394 = vmatpush1.msra.mxu0 %v364
    %395 = vmatprep.subr.mxu0 0.0
    %396 = vmatpush1.msra.mxu0 %v365
    %397 = vmatprep.subr.mxu0 0.0
    %398 = vmatpush1.msra.mxu0 %v366
    %399 = vmatprep.subr.mxu0 0.0
    %400 = vmatpush1.msra.mxu0 %v367
    %401 = vmatprep.subr.mxu0 0.0
    %402 = vmatpush1.msra.mxu0 %v368
    %403 = vmatprep.subr.mxu0 0.0
    %404 = vmatpush1.msra.mxu0 %v369
    %405 = vmatprep.subr.mxu0 0.0
    %406 = vmatpush1.msra.mxu0 %v370
    %407 = vmatprep.subr.mxu0 0.0
    %408 = vmatpush1.msra.mxu0 %v371
    %409 = vmatprep.subr.mxu0 0.0
    %410 = vmatpush1.msra.mxu0 %v372
    %411 = vmatprep.subr.mxu0 0.0
    %412 = vmatpush1.msra.mxu0 %v373
    %413 = vmatprep.subr.mxu0 0.0
    %414 = vmatpush1.msra.mxu0 0.0
    %415 = vmatprep.subr.mxu0 0.0
    %416 = vmatpush1.msra.mxu0 0.0
    %417 = vmatprep.subr.mxu0 0.0
    %418 = vmatpush1.msra.mxu0 0.0
    %419 = vmatprep.subr.mxu0 0.0
    %420 = vmatpush1.msra.mxu0 0.0
    %421 = vmatprep.subr.mxu0 0.0
    %422 = vmatpush1.msra.mxu0 0.0
    %423 = vmatprep.subr.mxu0 0.0
    %424 = vmatpush1.msra.mxu0 0.0
    %425 = vmatprep.subr.mxu0 0.0
    %426 = vmatpush1.msra.mxu0 0.0
    %427 = vmatprep.subr.mxu0 0.0
    %428 = vmatpush1.msra.mxu0 0.0
    %429 = vmatprep.subr.mxu0 0.0
    %430 = vmatpush1.msra.mxu0 0.0
    %431 = vmatprep.subr.mxu0 0.0
    %432 = vmatpush1.msra.mxu0 0.0
    %433 = vmatprep.subr.mxu0 0.0
    %434 = vmatpush1.msra.mxu0 0.0
    %435 = vmatprep.subr.mxu0 0.0
    %436 = vmatpush1.msra.mxu0 0.0
    %437 = vmatprep.subr.mxu0 0.0
    %438 = vmatpush1.msra.mxu0 0.0
    %439 = vmatprep.subr.mxu0 0.0
    %440 = vmatpush1.msra.mxu0 0.0
    %441 = vmatprep.subr.mxu0 0.0
    %442 = vmatpush1.msra.mxu0 0.0
    %443 = vmatprep.subr.mxu0 0.0
    %444 = vmatpush1.msra.mxu0 0.0
    %445 = vmatprep.mubr.f32.mxu0 0.0
    %446 = vmatmul.mubr.f32.gmra.mrb[0].mxu0 %v357
    %v447 = vpop.f32.mrb[0].mxu0
    %v448 = vadd.f32 %v379, %v447
    %v449 = vpop.f32.mrb[0].mxu0
    %450 = vdwg.mxu0
    %v451 = vmax.f32 %v448, 0.0
    %v452 = vld [vmem:[#allocation11] sm:$0xff]
    %v453 = vld [vmem:[#allocation11 + $0x8] sm:$0xff]
    %v454 = vld [vmem:[#allocation11 + $0x10] sm:$0xff]
    %v455 = vld [vmem:[#allocation11 + $0x18] sm:$0xff]
    %v456 = vld [vmem:[#allocation11 + $0x20] sm:$0xff]
    %v457 = vld [vmem:[#allocation11 + $0x28] sm:$0xff]
    %v458 = vld [vmem:[#allocation11 + $0x30] sm:$0xff]
    %v459 = vld [vmem:[#allocation11 + $0x38] sm:$0xff]
    %v460 = vld [vmem:[#allocation11 + $0x40] sm:$0xff]
    %v461 = vld [vmem:[#allocation11 + $0x48] sm:$0xff]
    %v462 = vld [vmem:[#allocation11 + $0x50] sm:$0xff]
    %v463 = vld [vmem:[#allocation11 + $0x58] sm:$0xff]
    %v464 = vld [vmem:[#allocation11 + $0x60] sm:$0xff]
    %v465 = vld [vmem:[#allocation11 + $0x68] sm:$0xff]
    %v466 = vld [vmem:[#allocation11 + $0x70] sm:$0xff]
    %v467 = vld [vmem:[#allocation11 + $0x78] sm:$0xff]
    %v468 = vld [vmem:[#allocation13] sm:$0x1]
    %v470 = vlaneseq
    %v471 = vshrl.u32 %v470, 7
    %v472 = vsub.s32 0, %v471
    %v473 = vrot.slane %v468, %v472
    %475 = vmatprep.subr.mxu0 0.0
    %476 = vmatpush1.msra.mxu0 %v452
    %477 = vmatprep.subr.mxu0 0.0
    %478 = vmatpush1.msra.mxu0 %v453
    %479 = vmatprep.subr.mxu0 0.0
    %480 = vmatpush1.msra.mxu0 %v454
    %481 = vmatprep.subr.mxu0 0.0
    %482 = vmatpush1.msra.mxu0 %v455
    %483 = vmatprep.subr.mxu0 0.0
    %484 = vmatpush1.msra.mxu0 %v456
    %485 = vmatprep.subr.mxu0 0.0
    %486 = vmatpush1.msra.mxu0 %v457
    %487 = vmatprep.subr.mxu0 0.0
    %488 = vmatpush1.msra.mxu0 %v458
    %489 = vmatprep.subr.mxu0 0.0
    %490 = vmatpush1.msra.mxu0 %v459
    %491 = vmatprep.subr.mxu0 0.0
    %492 = vmatpush1.msra.mxu0 %v460
    %493 = vmatprep.subr.mxu0 0.0
    %494 = vmatpush1.msra.mxu0 %v461
    %495 = vmatprep.subr.mxu0 0.0
    %496 = vmatpush1.msra.mxu0 %v462
    %497 = vmatprep.subr.mxu0 0.0
    %498 = vmatpush1.msra.mxu0 %v463
    %499 = vmatprep.subr.mxu0 0.0
    %500 = vmatpush1.msra.mxu0 %v464
    %501 = vmatprep.subr.mxu0 0.0
    %502 = vmatpush1.msra.mxu0 %v465
    %503 = vmatprep.subr.mxu0 0.0
    %504 = vmatpush1.msra.mxu0 %v466
    %505 = vmatprep.subr.mxu0 0.0
    %506 = vmatpush1.msra.mxu0 %v467
    %507 = vmatprep.subr.mxu0 0.0
    %508 = vmatpush1.msra.mxu0 0.0
    %509 = vmatprep.subr.mxu0 0.0
    %510 = vmatpush1.msra.mxu0 0.0
    %511 = vmatprep.subr.mxu0 0.0
    %512 = vmatpush1.msra.mxu0 0.0
    %513 = vmatprep.subr.mxu0 0.0
    %514 = vmatpush1.msra.mxu0 0.0
    %515 = vmatprep.subr.mxu0 0.0
    %516 = vmatpush1.msra.mxu0 0.0
    %517 = vmatprep.subr.mxu0 0.0
    %518 = vmatpush1.msra.mxu0 0.0
    %519 = vmatprep.subr.mxu0 0.0
    %520 = vmatpush1.msra.mxu0 0.0
    %521 = vmatprep.subr.mxu0 0.0
    %522 = vmatpush1.msra.mxu0 0.0
    %523 = vmatprep.subr.mxu0 0.0
    %524 = vmatpush1.msra.mxu0 0.0
    %525 = vmatprep.subr.mxu0 0.0
    %526 = vmatpush1.msra.mxu0 0.0
    %527 = vmatprep.subr.mxu0 0.0
    %528 = vmatpush1.msra.mxu0 0.0
    %529 = vmatprep.subr.mxu0 0.0
    %530 = vmatpush1.msra.mxu0 0.0
    %531 = vmatprep.subr.mxu0 0.0
    %532 = vmatpush1.msra.mxu0 0.0
    %533 = vmatprep.subr.mxu0 0.0
    %534 = vmatpush1.msra.mxu0 0.0
    %535 = vmatprep.subr.mxu0 0.0
    %536 = vmatpush1.msra.mxu0 0.0
    %537 = vmatprep.subr.mxu0 0.0
    %538 = vmatpush1.msra.mxu0 0.0
    %539 = vmatprep.mubr.f32.mxu0 0.0
    %540 = vmatmul.mubr.f32.gmra.mrb[0].mxu0 %v451
    %v541 = vpop.f32.mrb[0].mxu0
    %v542 = vadd.f32 %v473, %v541
    %v543 = vpop.f32.mrb[0].mxu0
    %544 = vdwg.mxu0
    %v545 = vmax.f32 %v542, 0.0
    %v546 = vld [vmem:[#allocation14] sm:$0xff]
    %v547 = vld [vmem:[#allocation14 + $0x8] sm:$0xff]
    %v548 = vld [vmem:[#allocation14 + $0x10] sm:$0xff]
    %v549 = vld [vmem:[#allocation14 + $0x18] sm:$0xff]
    %v550 = vld [vmem:[#allocation14 + $0x20] sm:$0xff]
    %v551 = vld [vmem:[#allocation14 + $0x28] sm:$0xff]
    %v552 = vld [vmem:[#allocation14 + $0x30] sm:$0xff]
    %v553 = vld [vmem:[#allocation14 + $0x38] sm:$0xff]
    %v554 = vld [vmem:[#allocation14 + $0x40] sm:$0xff]
    %v555 = vld [vmem:[#allocation14 + $0x48] sm:$0xff]
    %v556 = vld [vmem:[#allocation14 + $0x50] sm:$0xff]
    %v557 = vld [vmem:[#allocation14 + $0x58] sm:$0xff]
    %v558 = vld [vmem:[#allocation14 + $0x60] sm:$0xff]
    %v559 = vld [vmem:[#allocation14 + $0x68] sm:$0xff]
    %v560 = vld [vmem:[#allocation14 + $0x70] sm:$0xff]
    %v561 = vld [vmem:[#allocation14 + $0x78] sm:$0xff]
    %v562 = vld [vmem:[#allocation16] sm:$0x1]
    %v564 = vlaneseq
    %v565 = vshrl.u32 %v564, 7
    %v566 = vsub.s32 0, %v565
    %v567 = vrot.slane %v562, %v566
    %569 = vmatprep.subr.mxu0 0.0
    %570 = vmatpush1.msra.mxu0 %v546
    %571 = vmatprep.subr.mxu0 0.0
    %572 = vmatpush1.msra.mxu0 %v547
    %573 = vmatprep.subr.mxu0 0.0
    %574 = vmatpush1.msra.mxu0 %v548
    %575 = vmatprep.subr.mxu0 0.0
    %576 = vmatpush1.msra.mxu0 %v549
    %577 = vmatprep.subr.mxu0 0.0
    %578 = vmatpush1.msra.mxu0 %v550
    %579 = vmatprep.subr.mxu0 0.0
    %580 = vmatpush1.msra.mxu0 %v551
    %581 = vmatprep.subr.mxu0 0.0
    %582 = vmatpush1.msra.mxu0 %v552
    %583 = vmatprep.subr.mxu0 0.0
    %584 = vmatpush1.msra.mxu0 %v553
    %585 = vmatprep.subr.mxu0 0.0
    %586 = vmatpush1.msra.mxu0 %v554
    %587 = vmatprep.subr.mxu0 0.0
    %588 = vmatpush1.msra.mxu0 %v555
    %589 = vmatprep.subr.mxu0 0.0
    %590 = vmatpush1.msra.mxu0 %v556
    %591 = vmatprep.subr.mxu0 0.0
    %592 = vmatpush1.msra.mxu0 %v557
    %593 = vmatprep.subr.mxu0 0.0
    %594 = vmatpush1.msra.mxu0 %v558
    %595 = vmatprep.subr.mxu0 0.0
    %596 = vmatpush1.msra.mxu0 %v559
    %597 = vmatprep.subr.mxu0 0.0
    %598 = vmatpush1.msra.mxu0 %v560
    %599 = vmatprep.subr.mxu0 0.0
    %600 = vmatpush1.msra.mxu0 %v561
    %601 = vmatprep.subr.mxu0 0.0
    %602 = vmatpush1.msra.mxu0 0.0
    %603 = vmatprep.subr.mxu0 0.0
    %604 = vmatpush1.msra.mxu0 0.0
    %605 = vmatprep.subr.mxu0 0.0
    %606 = vmatpush1.msra.mxu0 0.0
    %607 = vmatprep.subr.mxu0 0.0
    %608 = vmatpush1.msra.mxu0 0.0
    %609 = vmatprep.subr.mxu0 0.0
    %610 = vmatpush1.msra.mxu0 0.0
    %611 = vmatprep.subr.mxu0 0.0
    %612 = vmatpush1.msra.mxu0 0.0
    %613 = vmatprep.subr.mxu0 0.0
    %614 = vmatpush1.msra.mxu0 0.0
    %615 = vmatprep.subr.mxu0 0.0
    %616 = vmatpush1.msra.mxu0 0.0
    %617 = vmatprep.subr.mxu0 0.0
    %618 = vmatpush1.msra.mxu0 0.0
    %619 = vmatprep.subr.mxu0 0.0
    %620 = vmatpush1.msra.mxu0 0.0
    %621 = vmatprep.subr.mxu0 0.0
    %622 = vmatpush1.msra.mxu0 0.0
    %623 = vmatprep.subr.mxu0 0.0
    %624 = vmatpush1.msra.mxu0 0.0
    %625 = vmatprep.subr.mxu0 0.0
    %626 = vmatpush1.msra.mxu0 0.0
    %627 = vmatprep.subr.mxu0 0.0
    %628 = vmatpush1.msra.mxu0 0.0
    %629 = vmatprep.subr.mxu0 0.0
    %630 = vmatpush1.msra.mxu0 0.0
    %631 = vmatprep.subr.mxu0 0.0
    %632 = vmatpush1.msra.mxu0 0.0
    %633 = vmatprep.mubr.f32.mxu0 0.0
    %634 = vmatmul.mubr.f32.gmra.mrb[0].mxu0 %v545
    %v635 = vpop.f32.mrb[0].mxu0
    %v636 = vadd.f32 %v567, %v635
    %v637 = vpop.f32.mrb[0].mxu0
    %638 = vdwg.mxu0
    %v639 = vld [vmem:[#allocation17] sm:$0xff]
    %v640 = vld [vmem:[#allocation17 + $0x8] sm:$0xff]
    %v641 = vld [vmem:[#allocation17 + $0x10] sm:$0xff]
    %v642 = vld [vmem:[#allocation17 + $0x18] sm:$0xff]
    %v643 = vld [vmem:[#allocation17 + $0x20] sm:$0xff]
    %v644 = vld [vmem:[#allocation17 + $0x28] sm:$0xff]
    %v645 = vld [vmem:[#allocation17 + $0x30] sm:$0xff]
    %v646 = vld [vmem:[#allocation17 + $0x38] sm:$0xff]
    %v647 = vld [vmem:[#allocation17 + $0x40] sm:$0xff]
    %v648 = vld [vmem:[#allocation17 + $0x48] sm:$0xff]
    %v649 = vld [vmem:[#allocation17 + $0x50] sm:$0xff]
    %v650 = vld [vmem:[#allocation17 + $0x58] sm:$0xff]
    %v651 = vld [vmem:[#allocation17 + $0x60] sm:$0xff]
    %v652 = vld [vmem:[#allocation17 + $0x68] sm:$0xff]
    %v653 = vld [vmem:[#allocation17 + $0x70] sm:$0xff]
    %v654 = vld [vmem:[#allocation17 + $0x78] sm:$0xff]
    %v655 = vld [vmem:[#allocation17 + $0x80] sm:$0xff]
    %v656 = vld [vmem:[#allocation17 + $0x88] sm:$0xff]
    %v657 = vld [vmem:[#allocation17 + $0x90] sm:$0xff]
    %v658 = vld [vmem:[#allocation17 + $0x98] sm:$0xff]
    %v659 = vld [vmem:[#allocation17 + $0xa0] sm:$0xff]
    %v660 = vld [vmem:[#allocation17 + $0xa8] sm:$0xff]
    %v661 = vld [vmem:[#allocation17 + $0xb0] sm:$0xff]
    %v662 = vld [vmem:[#allocation17 + $0xb8] sm:$0xff]
    %v663 = vld [vmem:[#allocation17 + $0xc0] sm:$0xff]
    %v664 = vld [vmem:[#allocation17 + $0xc8] sm:$0xff]
    %v665 = vld [vmem:[#allocation17 + $0xd0] sm:$0xff]
    %v666 = vld [vmem:[#allocation17 + $0xd8] sm:$0xff]
    %v667 = vld [vmem:[#allocation17 + $0xe0] sm:$0xff]
    %v668 = vld [vmem:[#allocation17 + $0xe8] sm:$0xff]
    %v669 = vld [vmem:[#allocation17 + $0xf0] sm:$0xff]
    %v670 = vld [vmem:[#allocation17 + $0xf8] sm:$0xff]
    %v671 = vld [vmem:[#allocation17 + $0x100] sm:$0xff]
    %v672 = vld [vmem:[#allocation17 + $0x108] sm:$0xff]
    %v673 = vld [vmem:[#allocation17 + $0x110] sm:$0xff]
    %v674 = vld [vmem:[#allocation17 + $0x118] sm:$0xff]
    %v675 = vld [vmem:[#allocation17 + $0x120] sm:$0xff]
    %v676 = vld [vmem:[#allocation17 + $0x128] sm:$0xff]
    %v677 = vld [vmem:[#allocation17 + $0x130] sm:$0xff]
    %v678 = vld [vmem:[#allocation17 + $0x138] sm:$0xff]
    %v679 = vld [vmem:[#allocation17 + $0x140] sm:$0xff]
    %v680 = vld [vmem:[#allocation17 + $0x148] sm:$0xff]
    %v681 = vld [vmem:[#allocation17 + $0x150] sm:$0xff]
    %v682 = vld [vmem:[#allocation17 + $0x158] sm:$0xff]
    %v683 = vld [vmem:[#allocation17 + $0x160] sm:$0xff]
    %v684 = vld [vmem:[#allocation17 + $0x168] sm:$0xff]
    %v685 = vld [vmem:[#allocation17 + $0x170] sm:$0xff]
    %v686 = vld [vmem:[#allocation17 + $0x178] sm:$0xff]
    %v687 = vld [vmem:[#allocation17 + $0x180] sm:$0xff]
    %v688 = vld [vmem:[#allocation17 + $0x188] sm:$0xff]
    %v689 = vld [vmem:[#allocation17 + $0x190] sm:$0xff]
    %v690 = vld [vmem:[#allocation17 + $0x198] sm:$0xff]
    %v691 = vld [vmem:[#allocation17 + $0x1a0] sm:$0xff]
    %v692 = vld [vmem:[#allocation17 + $0x1a8] sm:$0xff]
    %v693 = vld [vmem:[#allocation17 + $0x1b0] sm:$0xff]
    %v694 = vld [vmem:[#allocation17 + $0x1b8] sm:$0xff]
    %v695 = vld [vmem:[#allocation17 + $0x1c0] sm:$0xff]
    %v696 = vld [vmem:[#allocation17 + $0x1c8] sm:$0xff]
    %v697 = vld [vmem:[#allocation17 + $0x1d0] sm:$0xff]
    %v698 = vld [vmem:[#allocation17 + $0x1d8] sm:$0xff]
    %v699 = vld [vmem:[#allocation17 + $0x1e0] sm:$0xff]
    %v700 = vld [vmem:[#allocation17 + $0x1e8] sm:$0xff]
    %v701 = vld [vmem:[#allocation17 + $0x1f0] sm:$0xff]
    %v702 = vld [vmem:[#allocation17 + $0x1f8] sm:$0xff]
    %v703 = vld [vmem:[#allocation17 + $0x200] sm:$0xff]
    %v704 = vld [vmem:[#allocation17 + $0x208] sm:$0xff]
    %v705 = vld [vmem:[#allocation17 + $0x210] sm:$0xff]
    %v706 = vld [vmem:[#allocation17 + $0x218] sm:$0xff]
    %v707 = vld [vmem:[#allocation17 + $0x220] sm:$0xff]
    %v708 = vld [vmem:[#allocation17 + $0x228] sm:$0xff]
    %v709 = vld [vmem:[#allocation17 + $0x230] sm:$0xff]
    %v710 = vld [vmem:[#allocation17 + $0x238] sm:$0xff]
    %v711 = vld [vmem:[#allocation17 + $0x240] sm:$0xff]
    %v712 = vld [vmem:[#allocation17 + $0x248] sm:$0xff]
    %v713 = vld [vmem:[#allocation17 + $0x250] sm:$0xff]
    %v714 = vld [vmem:[#allocation17 + $0x258] sm:$0xff]
    %v715 = vld [vmem:[#allocation17 + $0x260] sm:$0xff]
    %v716 = vld [vmem:[#allocation17 + $0x268] sm:$0xff]
    %v717 = vld [vmem:[#allocation17 + $0x270] sm:$0xff]
    %v718 = vld [vmem:[#allocation17 + $0x278] sm:$0xff]
    %v719 = vld [vmem:[#allocation17 + $0x280] sm:$0xff]
    %v720 = vld [vmem:[#allocation17 + $0x288] sm:$0xff]
    %v721 = vld [vmem:[#allocation17 + $0x290] sm:$0xff]
    %v722 = vld [vmem:[#allocation17 + $0x298] sm:$0xff]
    %v723 = vld [vmem:[#allocation17 + $0x2a0] sm:$0xff]
    %v724 = vld [vmem:[#allocation17 + $0x2a8] sm:$0xff]
    %v725 = vld [vmem:[#allocation17 + $0x2b0] sm:$0xff]
    %v726 = vld [vmem:[#allocation17 + $0x2b8] sm:$0xff]
    %v727 = vld [vmem:[#allocation17 + $0x2c0] sm:$0xff]
    %v728 = vld [vmem:[#allocation17 + $0x2c8] sm:$0xff]
    %v729 = vld [vmem:[#allocation17 + $0x2d0] sm:$0xff]
    %v730 = vld [vmem:[#allocation17 + $0x2d8] sm:$0xff]
    %v731 = vld [vmem:[#allocation17 + $0x2e0] sm:$0xff]
    %v732 = vld [vmem:[#allocation17 + $0x2e8] sm:$0xff]
    %v733 = vld [vmem:[#allocation17 + $0x2f0] sm:$0xff]
    %v734 = vld [vmem:[#allocation17 + $0x2f8] sm:$0xff]
    %v735 = vld [vmem:[#allocation19] sm:$0x3f]
    %v737 = vlaneseq
    %v738 = vshrl.u32 %v737, 7
    %v739 = vsub.s32 0, %v738
    %v740 = vrot.slane %v735, %v739
    %v741 = vlaneseq
    %v742 = vshrl.u32 %v741, 7
    %v743 = vsub.s32 1, %v742
    %v744 = vrot.slane %v735, %v743
    %v745 = vlaneseq
    %v746 = vshrl.u32 %v745, 7
    %v747 = vsub.s32 2, %v746
    %v748 = vrot.slane %v735, %v747
    %v749 = vlaneseq
    %v750 = vshrl.u32 %v749, 7
    %v751 = vsub.s32 3, %v750
    %v752 = vrot.slane %v735, %v751
    %v753 = vlaneseq
    %v754 = vshrl.u32 %v753, 7
    %v755 = vsub.s32 4, %v754
    %v756 = vrot.slane %v735, %v755
    %v757 = vlaneseq
    %v758 = vshrl.u32 %v757, 7
    %v759 = vsub.s32 5, %v758
    %v760 = vrot.slane %v735, %v759
    %767 = vmatprep.subr.mxu0 %v640
    %768 = vmatpush1.msra.mxu0 %v639
    %769 = vmatprep.subr.mxu0 %v646
    %770 = vmatpush1.msra.mxu0 %v645
    %771 = vmatprep.subr.mxu0 %v652
    %772 = vmatpush1.msra.mxu0 %v651
    %773 = vmatprep.subr.mxu0 %v658
    %774 = vmatpush1.msra.mxu0 %v657
    %775 = vmatprep.subr.mxu0 %v664
    %776 = vmatpush1.msra.mxu0 %v663
    %777 = vmatprep.subr.mxu0 %v670
    %778 = vmatpush1.msra.mxu0 %v669
    %779 = vmatprep.subr.mxu0 %v676
    %780 = vmatpush1.msra.mxu0 %v675
    %781 = vmatprep.subr.mxu0 %v682
    %782 = vmatpush1.msra.mxu0 %v681
    %783 = vmatprep.subr.mxu0 %v688
    %784 = vmatpush1.msra.mxu0 %v687
    %785 = vmatprep.subr.mxu0 %v694
    %786 = vmatpush1.msra.mxu0 %v693
    %787 = vmatprep.subr.mxu0 %v700
    %788 = vmatpush1.msra.mxu0 %v699
    %789 = vmatprep.subr.mxu0 %v706
    %790 = vmatpush1.msra.mxu0 %v705
    %791 = vmatprep.subr.mxu0 %v712
    %792 = vmatpush1.msra.mxu0 %v711
    %793 = vmatprep.subr.mxu0 %v718
    %794 = vmatpush1.msra.mxu0 %v717
    %795 = vmatprep.subr.mxu0 %v724
    %796 = vmatpush1.msra.mxu0 %v723
    %797 = vmatprep.subr.mxu0 %v730
    %798 = vmatpush1.msra.mxu0 %v729
    %799 = vmatprep.subr.mxu0 0.0
    %800 = vmatpush1.msra.mxu0 0.0
    %801 = vmatprep.subr.mxu0 0.0
    %802 = vmatpush1.msra.mxu0 0.0
    %803 = vmatprep.subr.mxu0 0.0
    %804 = vmatpush1.msra.mxu0 0.0
    %805 = vmatprep.subr.mxu0 0.0
    %806 = vmatpush1.msra.mxu0 0.0
    %807 = vmatprep.subr.mxu0 0.0
    %808 = vmatpush1.msra.mxu0 0.0
    %809 = vmatprep.subr.mxu0 0.0
    %810 = vmatpush1.msra.mxu0 0.0
    %811 = vmatprep.subr.mxu0 0.0
    %812 = vmatpush1.msra.mxu0 0.0
    %813 = vmatprep.subr.mxu0 0.0
    %814 = vmatpush1.msra.mxu0 0.0
    %815 = vmatprep.subr.mxu0 0.0
    %816 = vmatpush1.msra.mxu0 0.0
    %817 = vmatprep.subr.mxu0 0.0
    %818 = vmatpush1.msra.mxu0 0.0
    %819 = vmatprep.subr.mxu0 0.0
    %820 = vmatpush1.msra.mxu0 0.0
    %821 = vmatprep.subr.mxu0 0.0
    %822 = vmatpush1.msra.mxu0 0.0
    %823 = vmatprep.subr.mxu0 0.0
    %824 = vmatpush1.msra.mxu0 0.0
    %825 = vmatprep.subr.mxu0 0.0
    %826 = vmatpush1.msra.mxu0 0.0
    %827 = vmatprep.subr.mxu0 0.0
    %828 = vmatpush1.msra.mxu0 0.0
    %829 = vmatprep.subr.mxu0 0.0
    %830 = vmatpush1.msra.mxu0 0.0
    %831 = vmatprep.mubr.f32.mxu0 0.0
    %832 = vmatmul.mubr.f32.gmra.mrb[0].mxu0 %v636
    %v833 = vpop.f32.mrb[0].mxu0
    %v834 = vadd.f32 %v740, %v833
    %v835 = vpop.f32.mrb[0].mxu0
    %v836 = vadd.f32 %v744, %v835
    %837 = vdwg.mxu0
    %838 = vmatprep.subr.mxu0 %v642
    %839 = vmatpush1.msra.mxu0 %v641
    %840 = vmatprep.subr.mxu0 %v648
    %841 = vmatpush1.msra.mxu0 %v647
    %842 = vmatprep.subr.mxu0 %v654
    %843 = vmatpush1.msra.mxu0 %v653
    %844 = vmatprep.subr.mxu0 %v660
    %845 = vmatpush1.msra.mxu0 %v659
    %846 = vmatprep.subr.mxu0 %v666
    %847 = vmatpush1.msra.mxu0 %v665
    %848 = vmatprep.subr.mxu0 %v672
    %849 = vmatpush1.msra.mxu0 %v671
    %850 = vmatprep.subr.mxu0 %v678
    %851 = vmatpush1.msra.mxu0 %v677
    %852 = vmatprep.subr.mxu0 %v684
    %853 = vmatpush1.msra.mxu0 %v683
    %854 = vmatprep.subr.mxu0 %v690
    %855 = vmatpush1.msra.mxu0 %v689
    %856 = vmatprep.subr.mxu0 %v696
    %857 = vmatpush1.msra.mxu0 %v695
    %858 = vmatprep.subr.mxu0 %v702
    %859 = vmatpush1.msra.mxu0 %v701
    %860 = vmatprep.subr.mxu0 %v708
    %861 = vmatpush1.msra.mxu0 %v707
    %862 = vmatprep.subr.mxu0 %v714
    %863 = vmatpush1.msra.mxu0 %v713
    %864 = vmatprep.subr.mxu0 %v720
    %865 = vmatpush1.msra.mxu0 %v719
    %866 = vmatprep.subr.mxu0 %v726
    %867 = vmatpush1.msra.mxu0 %v725
    %868 = vmatprep.subr.mxu0 %v732
    %869 = vmatpush1.msra.mxu0 %v731
    %870 = vmatprep.subr.mxu0 0.0
    %871 = vmatpush1.msra.mxu0 0.0
    %872 = vmatprep.subr.mxu0 0.0
    %873 = vmatpush1.msra.mxu0 0.0
    %874 = vmatprep.subr.mxu0 0.0
    %875 = vmatpush1.msra.mxu0 0.0
    %876 = vmatprep.subr.mxu0 0.0
    %877 = vmatpush1.msra.mxu0 0.0
    %878 = vmatprep.subr.mxu0 0.0
    %879 = vmatpush1.msra.mxu0 0.0
    %880 = vmatprep.subr.mxu0 0.0
    %881 = vmatpush1.msra.mxu0 0.0
    %882 = vmatprep.subr.mxu0 0.0
    %883 = vmatpush1.msra.mxu0 0.0
    %884 = vmatprep.subr.mxu0 0.0
    %885 = vmatpush1.msra.mxu0 0.0
    %886 = vmatprep.subr.mxu0 0.0
    %887 = vmatpush1.msra.mxu0 0.0
    %888 = vmatprep.subr.mxu0 0.0
    %889 = vmatpush1.msra.mxu0 0.0
    %890 = vmatprep.subr.mxu0 0.0
    %891 = vmatpush1.msra.mxu0 0.0
    %892 = vmatprep.subr.mxu0 0.0
    %893 = vmatpush1.msra.mxu0 0.0
    %894 = vmatprep.subr.mxu0 0.0
    %895 = vmatpush1.msra.mxu0 0.0
    %896 = vmatprep.subr.mxu0 0.0
    %897 = vmatpush1.msra.mxu0 0.0
    %898 = vmatprep.subr.mxu0 0.0
    %899 = vmatpush1.msra.mxu0 0.0
    %900 = vmatprep.subr.mxu0 0.0
    %901 = vmatpush1.msra.mxu0 0.0
    %902 = vmatprep.mubr.f32.mxu0 0.0
    %903 = vmatmul.mubr.f32.gmra.mrb[0].mxu0 %v636
    %v904 = vpop.f32.mrb[0].mxu0
    %v905 = vadd.f32 %v748, %v904
    %v906 = vpop.f32.mrb[0].mxu0
    %v907 = vadd.f32 %v752, %v906
    %908 = vdwg.mxu0
    %909 = vmatprep.subr.mxu0 %v644
    %910 = vmatpush1.msra.mxu0 %v643
    %911 = vmatprep.subr.mxu0 %v650
    %912 = vmatpush1.msra.mxu0 %v649
    %913 = vmatprep.subr.mxu0 %v656
    %914 = vmatpush1.msra.mxu0 %v655
    %915 = vmatprep.subr.mxu0 %v662
    %916 = vmatpush1.msra.mxu0 %v661
    %917 = vmatprep.subr.mxu0 %v668
    %918 = vmatpush1.msra.mxu0 %v667
    %919 = vmatprep.subr.mxu0 %v674
    %920 = vmatpush1.msra.mxu0 %v673
    %921 = vmatprep.subr.mxu0 %v680
    %922 = vmatpush1.msra.mxu0 %v679
    %923 = vmatprep.subr.mxu0 %v686
    %924 = vmatpush1.msra.mxu0 %v685
    %925 = vmatprep.subr.mxu0 %v692
    %926 = vmatpush1.msra.mxu0 %v691
    %927 = vmatprep.subr.mxu0 %v698
    %928 = vmatpush1.msra.mxu0 %v697
    %929 = vmatprep.subr.mxu0 %v704
    %930 = vmatpush1.msra.mxu0 %v703
    %931 = vmatprep.subr.mxu0 %v710
    %932 = vmatpush1.msra.mxu0 %v709
    %933 = vmatprep.subr.mxu0 %v716
    %934 = vmatpush1.msra.mxu0 %v715
    %935 = vmatprep.subr.mxu0 %v722
    %936 = vmatpush1.msra.mxu0 %v721
    %937 = vmatprep.subr.mxu0 %v728
    %938 = vmatpush1.msra.mxu0 %v727
    %939 = vmatprep.subr.mxu0 %v734
    %940 = vmatpush1.msra.mxu0 %v733
    %941 = vmatprep.subr.mxu0 0.0
    %942 = vmatpush1.msra.mxu0 0.0
    %943 = vmatprep.subr.mxu0 0.0
    %944 = vmatpush1.msra.mxu0 0.0
    %945 = vmatprep.subr.mxu0 0.0
    %946 = vmatpush1.msra.mxu0 0.0
    %947 = vmatprep.subr.mxu0 0.0
    %948 = vmatpush1.msra.mxu0 0.0
    %949 = vmatprep.subr.mxu0 0.0
    %950 = vmatpush1.msra.mxu0 0.0
    %951 = vmatprep.subr.mxu0 0.0
    %952 = vmatpush1.msra.mxu0 0.0
    %953 = vmatprep.subr.mxu0 0.0
    %954 = vmatpush1.msra.mxu0 0.0
    %955 = vmatprep.subr.mxu0 0.0
    %956 = vmatpush1.msra.mxu0 0.0
    %957 = vmatprep.subr.mxu0 0.0
    %958 = vmatpush1.msra.mxu0 0.0
    %959 = vmatprep.subr.mxu0 0.0
    %960 = vmatpush1.msra.mxu0 0.0
    %961 = vmatprep.subr.mxu0 0.0
    %962 = vmatpush1.msra.mxu0 0.0
    %963 = vmatprep.subr.mxu0 0.0
    %964 = vmatpush1.msra.mxu0 0.0
    %965 = vmatprep.subr.mxu0 0.0
    %966 = vmatpush1.msra.mxu0 0.0
    %967 = vmatprep.subr.mxu0 0.0
    %968 = vmatpush1.msra.mxu0 0.0
    %969 = vmatprep.subr.mxu0 0.0
    %970 = vmatpush1.msra.mxu0 0.0
    %971 = vmatprep.subr.mxu0 0.0
    %972 = vmatpush1.msra.mxu0 0.0
    %973 = vmatprep.mubr.f32.mxu0 0.0
    %974 = vmatmul.mubr.f32.gmra.mrb[0].mxu0 %v636
    %v975 = vpop.f32.mrb[0].mxu0
    %v976 = vadd.f32 %v756, %v975
    %v977 = vpop.f32.mrb[0].mxu0
    %v978 = vadd.f32 %v760, %v977
    %979 = vdwg.mxu0
    %v980 = vmax.f32 %v834, 0.0
    %v981 = vmax.f32 %v836, 0.0
    %v982 = vmax.f32 %v905, 0.0
    %v983 = vmax.f32 %v907, 0.0
    %v984 = vmax.f32 %v976, 0.0
    %v985 = vmax.f32 %v978, 0.0
    %v986 = vld [vmem:[#allocation20] sm:$0xff]
    %v987 = vld [vmem:[#allocation20 + $0x8] sm:$0xff]
    %v988 = vld [vmem:[#allocation20 + $0x10] sm:$0xff]
    %v989 = vld [vmem:[#allocation20 + $0x18] sm:$0xff]
    %v990 = vld [vmem:[#allocation20 + $0x20] sm:$0xff]
    %v991 = vld [vmem:[#allocation20 + $0x28] sm:$0xff]
    %v992 = vld [vmem:[#allocation20 + $0x30] sm:$0xff]
    %v993 = vld [vmem:[#allocation20 + $0x38] sm:$0xff]
    %v994 = vld [vmem:[#allocation20 + $0x40] sm:$0xff]
    %v995 = vld [vmem:[#allocation20 + $0x48] sm:$0xff]
    %v996 = vld [vmem:[#allocation20 + $0x50] sm:$0xff]
    %v997 = vld [vmem:[#allocation20 + $0x58] sm:$0xff]
    %v998 = vld [vmem:[#allocation20 + $0x60] sm:$0xff]
    %v999 = vld [vmem:[#allocation20 + $0x68] sm:$0xff]
    %v1000 = vld [vmem:[#allocation20 + $0x70] sm:$0xff]
    %v1001 = vld [vmem:[#allocation20 + $0x78] sm:$0xff]
    %v1002 = vld [vmem:[#allocation20 + $0x80] sm:$0xff]
    %v1003 = vld [vmem:[#allocation20 + $0x88] sm:$0xff]
    %v1004 = vld [vmem:[#allocation20 + $0x90] sm:$0xff]
    %v1005 = vld [vmem:[#allocation20 + $0x98] sm:$0xff]
    %v1006 = vld [vmem:[#allocation20 + $0xa0] sm:$0xff]
    %v1007 = vld [vmem:[#allocation20 + $0xa8] sm:$0xff]
    %v1008 = vld [vmem:[#allocation20 + $0xb0] sm:$0xff]
    %v1009 = vld [vmem:[#allocation20 + $0xb8] sm:$0xff]
    %v1010 = vld [vmem:[#allocation20 + $0xc0] sm:$0xff]
    %v1011 = vld [vmem:[#allocation20 + $0xc8] sm:$0xff]
    %v1012 = vld [vmem:[#allocation20 + $0xd0] sm:$0xff]
    %v1013 = vld [vmem:[#allocation20 + $0xd8] sm:$0xff]
    %v1014 = vld [vmem:[#allocation20 + $0xe0] sm:$0xff]
    %v1015 = vld [vmem:[#allocation20 + $0xe8] sm:$0xff]
    %v1016 = vld [vmem:[#allocation20 + $0xf0] sm:$0xff]
    %v1017 = vld [vmem:[#allocation20 + $0xf8] sm:$0xff]
    %v1018 = vld [vmem:[#allocation20 + $0x100] sm:$0xff]
    %v1019 = vld [vmem:[#allocation20 + $0x108] sm:$0xff]
    %v1020 = vld [vmem:[#allocation20 + $0x110] sm:$0xff]
    %v1021 = vld [vmem:[#allocation20 + $0x118] sm:$0xff]
    %v1022 = vld [vmem:[#allocation20 + $0x120] sm:$0xff]
    %v1023 = vld [vmem:[#allocation20 + $0x128] sm:$0xff]
    %v1024 = vld [vmem:[#allocation20 + $0x130] sm:$0xff]
    %v1025 = vld [vmem:[#allocation20 + $0x138] sm:$0xff]
    %v1026 = vld [vmem:[#allocation20 + $0x140] sm:$0xff]
    %v1027 = vld [vmem:[#allocation20 + $0x148] sm:$0xff]
    %v1028 = vld [vmem:[#allocation20 + $0x150] sm:$0xff]
    %v1029 = vld [vmem:[#allocation20 + $0x158] sm:$0xff]
    %v1030 = vld [vmem:[#allocation20 + $0x160] sm:$0xff]
    %v1031 = vld [vmem:[#allocation20 + $0x168] sm:$0xff]
    %v1032 = vld [vmem:[#allocation20 + $0x170] sm:$0xff]
    %v1033 = vld [vmem:[#allocation20 + $0x178] sm:$0xff]
    %v1034 = vld [vmem:[#allocation20 + $0x180] sm:$0xff]
    %v1035 = vld [vmem:[#allocation20 + $0x188] sm:$0xff]
    %v1036 = vld [vmem:[#allocation20 + $0x190] sm:$0xff]
    %v1037 = vld [vmem:[#allocation20 + $0x198] sm:$0xff]
    %v1038 = vld [vmem:[#allocation20 + $0x1a0] sm:$0xff]
    %v1039 = vld [vmem:[#allocation20 + $0x1a8] sm:$0xff]
    %v1040 = vld [vmem:[#allocation20 + $0x1b0] sm:$0xff]
    %v1041 = vld [vmem:[#allocation20 + $0x1b8] sm:$0xff]
    %v1042 = vld [vmem:[#allocation20 + $0x1c0] sm:$0xff]
    %v1043 = vld [vmem:[#allocation20 + $0x1c8] sm:$0xff]
    %v1044 = vld [vmem:[#allocation20 + $0x1d0] sm:$0xff]
    %v1045 = vld [vmem:[#allocation20 + $0x1d8] sm:$0xff]
    %v1046 = vld [vmem:[#allocation20 + $0x1e0] sm:$0xff]
    %v1047 = vld [vmem:[#allocation20 + $0x1e8] sm:$0xff]
    %v1048 = vld [vmem:[#allocation20 + $0x1f0] sm:$0xff]
    %v1049 = vld [vmem:[#allocation20 + $0x1f8] sm:$0xff]
    %v1050 = vld [vmem:[#allocation20 + $0x200] sm:$0xff]
    %v1051 = vld [vmem:[#allocation20 + $0x208] sm:$0xff]
    %v1052 = vld [vmem:[#allocation20 + $0x210] sm:$0xff]
    %v1053 = vld [vmem:[#allocation20 + $0x218] sm:$0xff]
    %v1054 = vld [vmem:[#allocation20 + $0x220] sm:$0xff]
    %v1055 = vld [vmem:[#allocation20 + $0x228] sm:$0xff]
    %v1056 = vld [vmem:[#allocation20 + $0x230] sm:$0xff]
    %v1057 = vld [vmem:[#allocation20 + $0x238] sm:$0xff]
    %v1058 = vld [vmem:[#allocation20 + $0x240] sm:$0xff]
    %v1059 = vld [vmem:[#allocation20 + $0x248] sm:$0xff]
    %v1060 = vld [vmem:[#allocation20 + $0x250] sm:$0xff]
    %v1061 = vld [vmem:[#allocation20 + $0x258] sm:$0xff]
    %v1062 = vld [vmem:[#allocation20 + $0x260] sm:$0xff]
    %v1063 = vld [vmem:[#allocation20 + $0x268] sm:$0xff]
    %v1064 = vld [vmem:[#allocation20 + $0x270] sm:$0xff]
    %v1065 = vld [vmem:[#allocation20 + $0x278] sm:$0xff]
    %v1066 = vld [vmem:[#allocation20 + $0x280] sm:$0xff]
    %v1067 = vld [vmem:[#allocation20 + $0x288] sm:$0xff]
    %v1068 = vld [vmem:[#allocation20 + $0x290] sm:$0xff]
    %v1069 = vld [vmem:[#allocation20 + $0x298] sm:$0xff]
    %v1070 = vld [vmem:[#allocation20 + $0x2a0] sm:$0xff]
    %v1071 = vld [vmem:[#allocation20 + $0x2a8] sm:$0xff]
    %v1072 = vld [vmem:[#allocation20 + $0x2b0] sm:$0xff]
    %v1073 = vld [vmem:[#allocation20 + $0x2b8] sm:$0xff]
    %v1074 = vld [vmem:[#allocation20 + $0x2c0] sm:$0xff]
    %v1075 = vld [vmem:[#allocation20 + $0x2c8] sm:$0xff]
    %v1076 = vld [vmem:[#allocation20 + $0x2d0] sm:$0xff]
    %v1077 = vld [vmem:[#allocation20 + $0x2d8] sm:$0xff]
    %v1078 = vld [vmem:[#allocation20 + $0x2e0] sm:$0xff]
    %v1079 = vld [vmem:[#allocation20 + $0x2e8] sm:$0xff]
    %v1080 = vld [vmem:[#allocation20 + $0x2f0] sm:$0xff]
    %v1081 = vld [vmem:[#allocation20 + $0x2f8] sm:$0xff]
    %v1082 = vld [vmem:[#allocation20 + $0x300] sm:$0xff]
    %v1083 = vld [vmem:[#allocation20 + $0x308] sm:$0xff]
    %v1084 = vld [vmem:[#allocation20 + $0x310] sm:$0xff]
    %v1085 = vld [vmem:[#allocation20 + $0x318] sm:$0xff]
    %v1086 = vld [vmem:[#allocation20 + $0x320] sm:$0xff]
    %v1087 = vld [vmem:[#allocation20 + $0x328] sm:$0xff]
    %v1088 = vld [vmem:[#allocation20 + $0x330] sm:$0xff]
    %v1089 = vld [vmem:[#allocation20 + $0x338] sm:$0xff]
    %v1090 = vld [vmem:[#allocation20 + $0x340] sm:$0xff]
    %v1091 = vld [vmem:[#allocation20 + $0x348] sm:$0xff]
    %v1092 = vld [vmem:[#allocation20 + $0x350] sm:$0xff]
    %v1093 = vld [vmem:[#allocation20 + $0x358] sm:$0xff]
    %v1094 = vld [vmem:[#allocation20 + $0x360] sm:$0xff]
    %v1095 = vld [vmem:[#allocation20 + $0x368] sm:$0xff]
    %v1096 = vld [vmem:[#allocation20 + $0x370] sm:$0xff]
    %v1097 = vld [vmem:[#allocation20 + $0x378] sm:$0xff]
    %v1098 = vld [vmem:[#allocation20 + $0x380] sm:$0xff]
    %v1099 = vld [vmem:[#allocation20 + $0x388] sm:$0xff]
    %v1100 = vld [vmem:[#allocation20 + $0x390] sm:$0xff]
    %v1101 = vld [vmem:[#allocation20 + $0x398] sm:$0xff]
    %v1102 = vld [vmem:[#allocation20 + $0x3a0] sm:$0xff]
    %v1103 = vld [vmem:[#allocation20 + $0x3a8] sm:$0xff]
    %v1104 = vld [vmem:[#allocation20 + $0x3b0] sm:$0xff]
    %v1105 = vld [vmem:[#allocation20 + $0x3b8] sm:$0xff]
    %v1106 = vld [vmem:[#allocation20 + $0x3c0] sm:$0xff]
    %v1107 = vld [vmem:[#allocation20 + $0x3c8] sm:$0xff]
    %v1108 = vld [vmem:[#allocation20 + $0x3d0] sm:$0xff]
    %v1109 = vld [vmem:[#allocation20 + $0x3d8] sm:$0xff]
    %v1110 = vld [vmem:[#allocation20 + $0x3e0] sm:$0xff]
    %v1111 = vld [vmem:[#allocation20 + $0x3e8] sm:$0xff]
    %v1112 = vld [vmem:[#allocation20 + $0x3f0] sm:$0xff]
    %v1113 = vld [vmem:[#allocation20 + $0x3f8] sm:$0xff]
    %v1114 = vld [vmem:[#allocation20 + $0x400] sm:$0xff]
    %v1115 = vld [vmem:[#allocation20 + $0x408] sm:$0xff]
    %v1116 = vld [vmem:[#allocation20 + $0x410] sm:$0xff]
    %v1117 = vld [vmem:[#allocation20 + $0x418] sm:$0xff]
    %v1118 = vld [vmem:[#allocation20 + $0x420] sm:$0xff]
    %v1119 = vld [vmem:[#allocation20 + $0x428] sm:$0xff]
    %v1120 = vld [vmem:[#allocation20 + $0x430] sm:$0xff]
    %v1121 = vld [vmem:[#allocation20 + $0x438] sm:$0xff]
    %v1122 = vld [vmem:[#allocation20 + $0x440] sm:$0xff]
    %v1123 = vld [vmem:[#allocation20 + $0x448] sm:$0xff]
    %v1124 = vld [vmem:[#allocation20 + $0x450] sm:$0xff]
    %v1125 = vld [vmem:[#allocation20 + $0x458] sm:$0xff]
    %v1126 = vld [vmem:[#allocation20 + $0x460] sm:$0xff]
    %v1127 = vld [vmem:[#allocation20 + $0x468] sm:$0xff]
    %v1128 = vld [vmem:[#allocation20 + $0x470] sm:$0xff]
    %v1129 = vld [vmem:[#allocation20 + $0x478] sm:$0xff]
    %v1130 = vld [vmem:[#allocation20 + $0x480] sm:$0xff]
    %v1131 = vld [vmem:[#allocation20 + $0x488] sm:$0xff]
    %v1132 = vld [vmem:[#allocation20 + $0x490] sm:$0xff]
    %v1133 = vld [vmem:[#allocation20 + $0x498] sm:$0xff]
    %v1134 = vld [vmem:[#allocation20 + $0x4a0] sm:$0xff]
    %v1135 = vld [vmem:[#allocation20 + $0x4a8] sm:$0xff]
    %v1136 = vld [vmem:[#allocation20 + $0x4b0] sm:$0xff]
    %v1137 = vld [vmem:[#allocation20 + $0x4b8] sm:$0xff]
    %v1138 = vld [vmem:[#allocation20 + $0x4c0] sm:$0xff]
    %v1139 = vld [vmem:[#allocation20 + $0x4c8] sm:$0xff]
    %v1140 = vld [vmem:[#allocation20 + $0x4d0] sm:$0xff]
    %v1141 = vld [vmem:[#allocation20 + $0x4d8] sm:$0xff]
    %v1142 = vld [vmem:[#allocation20 + $0x4e0] sm:$0xff]
    %v1143 = vld [vmem:[#allocation20 + $0x4e8] sm:$0xff]
    %v1144 = vld [vmem:[#allocation20 + $0x4f0] sm:$0xff]
    %v1145 = vld [vmem:[#allocation20 + $0x4f8] sm:$0xff]
    %v1146 = vld [vmem:[#allocation20 + $0x500] sm:$0xff]
    %v1147 = vld [vmem:[#allocation20 + $0x508] sm:$0xff]
    %v1148 = vld [vmem:[#allocation20 + $0x510] sm:$0xff]
    %v1149 = vld [vmem:[#allocation20 + $0x518] sm:$0xff]
    %v1150 = vld [vmem:[#allocation20 + $0x520] sm:$0xff]
    %v1151 = vld [vmem:[#allocation20 + $0x528] sm:$0xff]
    %v1152 = vld [vmem:[#allocation20 + $0x530] sm:$0xff]
    %v1153 = vld [vmem:[#allocation20 + $0x538] sm:$0xff]
    %v1154 = vld [vmem:[#allocation20 + $0x540] sm:$0xff]
    %v1155 = vld [vmem:[#allocation20 + $0x548] sm:$0xff]
    %v1156 = vld [vmem:[#allocation20 + $0x550] sm:$0xff]
    %v1157 = vld [vmem:[#allocation20 + $0x558] sm:$0xff]
    %v1158 = vld [vmem:[#allocation20 + $0x560] sm:$0xff]
    %v1159 = vld [vmem:[#allocation20 + $0x568] sm:$0xff]
    %v1160 = vld [vmem:[#allocation20 + $0x570] sm:$0xff]
    %v1161 = vld [vmem:[#allocation20 + $0x578] sm:$0xff]
    %v1162 = vld [vmem:[#allocation20 + $0x580] sm:$0xff]
    %v1163 = vld [vmem:[#allocation20 + $0x588] sm:$0xff]
    %v1164 = vld [vmem:[#allocation20 + $0x590] sm:$0xff]
    %v1165 = vld [vmem:[#allocation20 + $0x598] sm:$0xff]
    %v1166 = vld [vmem:[#allocation20 + $0x5a0] sm:$0xff]
    %v1167 = vld [vmem:[#allocation20 + $0x5a8] sm:$0xff]
    %v1168 = vld [vmem:[#allocation20 + $0x5b0] sm:$0xff]
    %v1169 = vld [vmem:[#allocation20 + $0x5b8] sm:$0xff]
    %v1170 = vld [vmem:[#allocation20 + $0x5c0] sm:$0xff]
    %v1171 = vld [vmem:[#allocation20 + $0x5c8] sm:$0xff]
    %v1172 = vld [vmem:[#allocation20 + $0x5d0] sm:$0xff]
    %v1173 = vld [vmem:[#allocation20 + $0x5d8] sm:$0xff]
    %v1174 = vld [vmem:[#allocation20 + $0x5e0] sm:$0xff]
    %v1175 = vld [vmem:[#allocation20 + $0x5e8] sm:$0xff]
    %v1176 = vld [vmem:[#allocation20 + $0x5f0] sm:$0xff]
    %v1177 = vld [vmem:[#allocation20 + $0x5f8] sm:$0xff]
    %v1178 = vld [vmem:[#allocation20 + $0x600] sm:$0xff]
    %v1179 = vld [vmem:[#allocation20 + $0x608] sm:$0xff]
    %v1180 = vld [vmem:[#allocation20 + $0x610] sm:$0xff]
    %v1181 = vld [vmem:[#allocation20 + $0x618] sm:$0xff]
    %v1182 = vld [vmem:[#allocation20 + $0x620] sm:$0xff]
    %v1183 = vld [vmem:[#allocation20 + $0x628] sm:$0xff]
    %v1184 = vld [vmem:[#allocation20 + $0x630] sm:$0xff]
    %v1185 = vld [vmem:[#allocation20 + $0x638] sm:$0xff]
    %v1186 = vld [vmem:[#allocation20 + $0x640] sm:$0xff]
    %v1187 = vld [vmem:[#allocation20 + $0x648] sm:$0xff]
    %v1188 = vld [vmem:[#allocation20 + $0x650] sm:$0xff]
    %v1189 = vld [vmem:[#allocation20 + $0x658] sm:$0xff]
    %v1190 = vld [vmem:[#allocation20 + $0x660] sm:$0xff]
    %v1191 = vld [vmem:[#allocation20 + $0x668] sm:$0xff]
    %v1192 = vld [vmem:[#allocation20 + $0x670] sm:$0xff]
    %v1193 = vld [vmem:[#allocation20 + $0x678] sm:$0xff]
    %v1194 = vld [vmem:[#allocation20 + $0x680] sm:$0xff]
    %v1195 = vld [vmem:[#allocation20 + $0x688] sm:$0xff]
    %v1196 = vld [vmem:[#allocation20 + $0x690] sm:$0xff]
    %v1197 = vld [vmem:[#allocation20 + $0x698] sm:$0xff]
    %v1198 = vld [vmem:[#allocation20 + $0x6a0] sm:$0xff]
    %v1199 = vld [vmem:[#allocation20 + $0x6a8] sm:$0xff]
    %v1200 = vld [vmem:[#allocation20 + $0x6b0] sm:$0xff]
    %v1201 = vld [vmem:[#allocation20 + $0x6b8] sm:$0xff]
    %v1202 = vld [vmem:[#allocation20 + $0x6c0] sm:$0xff]
    %v1203 = vld [vmem:[#allocation20 + $0x6c8] sm:$0xff]
    %v1204 = vld [vmem:[#allocation20 + $0x6d0] sm:$0xff]
    %v1205 = vld [vmem:[#allocation20 + $0x6d8] sm:$0xff]
    %v1206 = vld [vmem:[#allocation20 + $0x6e0] sm:$0xff]
    %v1207 = vld [vmem:[#allocation20 + $0x6e8] sm:$0xff]
    %v1208 = vld [vmem:[#allocation20 + $0x6f0] sm:$0xff]
    %v1209 = vld [vmem:[#allocation20 + $0x6f8] sm:$0xff]
    %v1210 = vld [vmem:[#allocation20 + $0x700] sm:$0xff]
    %v1211 = vld [vmem:[#allocation20 + $0x708] sm:$0xff]
    %v1212 = vld [vmem:[#allocation20 + $0x710] sm:$0xff]
    %v1213 = vld [vmem:[#allocation20 + $0x718] sm:$0xff]
    %v1214 = vld [vmem:[#allocation20 + $0x720] sm:$0xff]
    %v1215 = vld [vmem:[#allocation20 + $0x728] sm:$0xff]
    %v1216 = vld [vmem:[#allocation20 + $0x730] sm:$0xff]
    %v1217 = vld [vmem:[#allocation20 + $0x738] sm:$0xff]
    %v1218 = vld [vmem:[#allocation20 + $0x740] sm:$0xff]
    %v1219 = vld [vmem:[#allocation20 + $0x748] sm:$0xff]
    %v1220 = vld [vmem:[#allocation20 + $0x750] sm:$0xff]
    %v1221 = vld [vmem:[#allocation20 + $0x758] sm:$0xff]
    %v1222 = vld [vmem:[#allocation20 + $0x760] sm:$0xff]
    %v1223 = vld [vmem:[#allocation20 + $0x768] sm:$0xff]
    %v1224 = vld [vmem:[#allocation20 + $0x770] sm:$0xff]
    %v1225 = vld [vmem:[#allocation20 + $0x778] sm:$0xff]
    %v1226 = vld [vmem:[#allocation20 + $0x780] sm:$0xff]
    %v1227 = vld [vmem:[#allocation20 + $0x788] sm:$0xff]
    %v1228 = vld [vmem:[#allocation20 + $0x790] sm:$0xff]
    %v1229 = vld [vmem:[#allocation20 + $0x798] sm:$0xff]
    %v1230 = vld [vmem:[#allocation20 + $0x7a0] sm:$0xff]
    %v1231 = vld [vmem:[#allocation20 + $0x7a8] sm:$0xff]
    %v1232 = vld [vmem:[#allocation20 + $0x7b0] sm:$0xff]
    %v1233 = vld [vmem:[#allocation20 + $0x7b8] sm:$0xff]
    %v1234 = vld [vmem:[#allocation20 + $0x7c0] sm:$0xff]
    %v1235 = vld [vmem:[#allocation20 + $0x7c8] sm:$0xff]
    %v1236 = vld [vmem:[#allocation20 + $0x7d0] sm:$0xff]
    %v1237 = vld [vmem:[#allocation20 + $0x7d8] sm:$0xff]
    %v1238 = vld [vmem:[#allocation20 + $0x7e0] sm:$0xff]
    %v1239 = vld [vmem:[#allocation20 + $0x7e8] sm:$0xff]
    %v1240 = vld [vmem:[#allocation20 + $0x7f0] sm:$0xff]
    %v1241 = vld [vmem:[#allocation20 + $0x7f8] sm:$0xff]
    %v1242 = vld [vmem:[#allocation20 + $0x800] sm:$0xff]
    %v1243 = vld [vmem:[#allocation20 + $0x808] sm:$0xff]
    %v1244 = vld [vmem:[#allocation20 + $0x810] sm:$0xff]
    %v1245 = vld [vmem:[#allocation20 + $0x818] sm:$0xff]
    %v1246 = vld [vmem:[#allocation20 + $0x820] sm:$0xff]
    %v1247 = vld [vmem:[#allocation20 + $0x828] sm:$0xff]
    %v1248 = vld [vmem:[#allocation20 + $0x830] sm:$0xff]
    %v1249 = vld [vmem:[#allocation20 + $0x838] sm:$0xff]
    %v1250 = vld [vmem:[#allocation20 + $0x840] sm:$0xff]
    %v1251 = vld [vmem:[#allocation20 + $0x848] sm:$0xff]
    %v1252 = vld [vmem:[#allocation20 + $0x850] sm:$0xff]
    %v1253 = vld [vmem:[#allocation20 + $0x858] sm:$0xff]
    %v1254 = vld [vmem:[#allocation20 + $0x860] sm:$0xff]
    %v1255 = vld [vmem:[#allocation20 + $0x868] sm:$0xff]
    %v1256 = vld [vmem:[#allocation20 + $0x870] sm:$0xff]
    %v1257 = vld [vmem:[#allocation20 + $0x878] sm:$0xff]
    %v1258 = vld [vmem:[#allocation20 + $0x880] sm:$0xff]
    %v1259 = vld [vmem:[#allocation20 + $0x888] sm:$0xff]
    %v1260 = vld [vmem:[#allocation20 + $0x890] sm:$0xff]
    %v1261 = vld [vmem:[#allocation20 + $0x898] sm:$0xff]
    %v1262 = vld [vmem:[#allocation20 + $0x8a0] sm:$0xff]
    %v1263 = vld [vmem:[#allocation20 + $0x8a8] sm:$0xff]
    %v1264 = vld [vmem:[#allocation20 + $0x8b0] sm:$0xff]
    %v1265 = vld [vmem:[#allocation20 + $0x8b8] sm:$0xff]
    %v1266 = vld [vmem:[#allocation20 + $0x8c0] sm:$0xff]
    %v1267 = vld [vmem:[#allocation20 + $0x8c8] sm:$0xff]
    %v1268 = vld [vmem:[#allocation20 + $0x8d0] sm:$0xff]
    %v1269 = vld [vmem:[#allocation20 + $0x8d8] sm:$0xff]
    %v1270 = vld [vmem:[#allocation20 + $0x8e0] sm:$0xff]
    %v1271 = vld [vmem:[#allocation20 + $0x8e8] sm:$0xff]
    %v1272 = vld [vmem:[#allocation20 + $0x8f0] sm:$0xff]
    %v1273 = vld [vmem:[#allocation20 + $0x8f8] sm:$0xff]
    %v1274 = vld [vmem:[#allocation20 + $0x900] sm:$0xff]
    %v1275 = vld [vmem:[#allocation20 + $0x908] sm:$0xff]
    %v1276 = vld [vmem:[#allocation20 + $0x910] sm:$0xff]
    %v1277 = vld [vmem:[#allocation20 + $0x918] sm:$0xff]
    %v1278 = vld [vmem:[#allocation20 + $0x920] sm:$0xff]
    %v1279 = vld [vmem:[#allocation20 + $0x928] sm:$0xff]
    %v1280 = vld [vmem:[#allocation20 + $0x930] sm:$0xff]
    %v1281 = vld [vmem:[#allocation20 + $0x938] sm:$0xff]
    %v1282 = vld [vmem:[#allocation20 + $0x940] sm:$0xff]
    %v1283 = vld [vmem:[#allocation20 + $0x948] sm:$0xff]
    %v1284 = vld [vmem:[#allocation20 + $0x950] sm:$0xff]
    %v1285 = vld [vmem:[#allocation20 + $0x958] sm:$0xff]
    %v1286 = vld [vmem:[#allocation20 + $0x960] sm:$0xff]
    %v1287 = vld [vmem:[#allocation20 + $0x968] sm:$0xff]
    %v1288 = vld [vmem:[#allocation20 + $0x970] sm:$0xff]
    %v1289 = vld [vmem:[#allocation20 + $0x978] sm:$0xff]
    %v1290 = vld [vmem:[#allocation20 + $0x980] sm:$0xff]
    %v1291 = vld [vmem:[#allocation20 + $0x988] sm:$0xff]
    %v1292 = vld [vmem:[#allocation20 + $0x990] sm:$0xff]
    %v1293 = vld [vmem:[#allocation20 + $0x998] sm:$0xff]
    %v1294 = vld [vmem:[#allocation20 + $0x9a0] sm:$0xff]
    %v1295 = vld [vmem:[#allocation20 + $0x9a8] sm:$0xff]
    %v1296 = vld [vmem:[#allocation20 + $0x9b0] sm:$0xff]
    %v1297 = vld [vmem:[#allocation20 + $0x9b8] sm:$0xff]
    %v1298 = vld [vmem:[#allocation20 + $0x9c0] sm:$0xff]
    %v1299 = vld [vmem:[#allocation20 + $0x9c8] sm:$0xff]
    %v1300 = vld [vmem:[#allocation20 + $0x9d0] sm:$0xff]
    %v1301 = vld [vmem:[#allocation20 + $0x9d8] sm:$0xff]
    %v1302 = vld [vmem:[#allocation20 + $0x9e0] sm:$0xff]
    %v1303 = vld [vmem:[#allocation20 + $0x9e8] sm:$0xff]
    %v1304 = vld [vmem:[#allocation20 + $0x9f0] sm:$0xff]
    %v1305 = vld [vmem:[#allocation20 + $0x9f8] sm:$0xff]
    %v1306 = vld [vmem:[#allocation20 + $0xa00] sm:$0xff]
    %v1307 = vld [vmem:[#allocation20 + $0xa08] sm:$0xff]
    %v1308 = vld [vmem:[#allocation20 + $0xa10] sm:$0xff]
    %v1309 = vld [vmem:[#allocation20 + $0xa18] sm:$0xff]
    %v1310 = vld [vmem:[#allocation20 + $0xa20] sm:$0xff]
    %v1311 = vld [vmem:[#allocation20 + $0xa28] sm:$0xff]
    %v1312 = vld [vmem:[#allocation20 + $0xa30] sm:$0xff]
    %v1313 = vld [vmem:[#allocation20 + $0xa38] sm:$0xff]
    %v1314 = vld [vmem:[#allocation20 + $0xa40] sm:$0xff]
    %v1315 = vld [vmem:[#allocation20 + $0xa48] sm:$0xff]
    %v1316 = vld [vmem:[#allocation20 + $0xa50] sm:$0xff]
    %v1317 = vld [vmem:[#allocation20 + $0xa58] sm:$0xff]
    %v1318 = vld [vmem:[#allocation20 + $0xa60] sm:$0xff]
    %v1319 = vld [vmem:[#allocation20 + $0xa68] sm:$0xff]
    %v1320 = vld [vmem:[#allocation20 + $0xa70] sm:$0xff]
    %v1321 = vld [vmem:[#allocation20 + $0xa78] sm:$0xff]
    %v1322 = vld [vmem:[#allocation20 + $0xa80] sm:$0xff]
    %v1323 = vld [vmem:[#allocation20 + $0xa88] sm:$0xff]
    %v1324 = vld [vmem:[#allocation20 + $0xa90] sm:$0xff]
    %v1325 = vld [vmem:[#allocation20 + $0xa98] sm:$0xff]
    %v1326 = vld [vmem:[#allocation20 + $0xaa0] sm:$0xff]
    %v1327 = vld [vmem:[#allocation20 + $0xaa8] sm:$0xff]
    %v1328 = vld [vmem:[#allocation20 + $0xab0] sm:$0xff]
    %v1329 = vld [vmem:[#allocation20 + $0xab8] sm:$0xff]
    %v1330 = vld [vmem:[#allocation20 + $0xac0] sm:$0xff]
    %v1331 = vld [vmem:[#allocation20 + $0xac8] sm:$0xff]
    %v1332 = vld [vmem:[#allocation20 + $0xad0] sm:$0xff]
    %v1333 = vld [vmem:[#allocation20 + $0xad8] sm:$0xff]
    %v1334 = vld [vmem:[#allocation20 + $0xae0] sm:$0xff]
    %v1335 = vld [vmem:[#allocation20 + $0xae8] sm:$0xff]
    %v1336 = vld [vmem:[#allocation20 + $0xaf0] sm:$0xff]
    %v1337 = vld [vmem:[#allocation20 + $0xaf8] sm:$0xff]
    %v1338 = vld [vmem:[#allocation20 + $0xb00] sm:$0xff]
    %v1339 = vld [vmem:[#allocation20 + $0xb08] sm:$0xff]
    %v1340 = vld [vmem:[#allocation20 + $0xb10] sm:$0xff]
    %v1341 = vld [vmem:[#allocation20 + $0xb18] sm:$0xff]
    %v1342 = vld [vmem:[#allocation20 + $0xb20] sm:$0xff]
    %v1343 = vld [vmem:[#allocation20 + $0xb28] sm:$0xff]
    %v1344 = vld [vmem:[#allocation20 + $0xb30] sm:$0xff]
    %v1345 = vld [vmem:[#allocation20 + $0xb38] sm:$0xff]
    %v1346 = vld [vmem:[#allocation20 + $0xb40] sm:$0xff]
    %v1347 = vld [vmem:[#allocation20 + $0xb48] sm:$0xff]
    %v1348 = vld [vmem:[#allocation20 + $0xb50] sm:$0xff]
    %v1349 = vld [vmem:[#allocation20 + $0xb58] sm:$0xff]
    %v1350 = vld [vmem:[#allocation20 + $0xb60] sm:$0xff]
    %v1351 = vld [vmem:[#allocation20 + $0xb68] sm:$0xff]
    %v1352 = vld [vmem:[#allocation20 + $0xb70] sm:$0xff]
    %v1353 = vld [vmem:[#allocation20 + $0xb78] sm:$0xff]
    %v1354 = vld [vmem:[#allocation20 + $0xb80] sm:$0xff]
    %v1355 = vld [vmem:[#allocation20 + $0xb88] sm:$0xff]
    %v1356 = vld [vmem:[#allocation20 + $0xb90] sm:$0xff]
    %v1357 = vld [vmem:[#allocation20 + $0xb98] sm:$0xff]
    %v1358 = vld [vmem:[#allocation20 + $0xba0] sm:$0xff]
    %v1359 = vld [vmem:[#allocation20 + $0xba8] sm:$0xff]
    %v1360 = vld [vmem:[#allocation20 + $0xbb0] sm:$0xff]
    %v1361 = vld [vmem:[#allocation20 + $0xbb8] sm:$0xff]
    %v1362 = vld [vmem:[#allocation20 + $0xbc0] sm:$0xff]
    %v1363 = vld [vmem:[#allocation20 + $0xbc8] sm:$0xff]
    %v1364 = vld [vmem:[#allocation20 + $0xbd0] sm:$0xff]
    %v1365 = vld [vmem:[#allocation20 + $0xbd8] sm:$0xff]
    %v1366 = vld [vmem:[#allocation20 + $0xbe0] sm:$0xff]
    %v1367 = vld [vmem:[#allocation20 + $0xbe8] sm:$0xff]
    %v1368 = vld [vmem:[#allocation20 + $0xbf0] sm:$0xff]
    %v1369 = vld [vmem:[#allocation20 + $0xbf8] sm:$0xff]
    %v1370 = vld [vmem:[#allocation20 + $0xc00] sm:$0xff]
    %v1371 = vld [vmem:[#allocation20 + $0xc08] sm:$0xff]
    %v1372 = vld [vmem:[#allocation20 + $0xc10] sm:$0xff]
    %v1373 = vld [vmem:[#allocation20 + $0xc18] sm:$0xff]
    %v1374 = vld [vmem:[#allocation20 + $0xc20] sm:$0xff]
    %v1375 = vld [vmem:[#allocation20 + $0xc28] sm:$0xff]
    %v1376 = vld [vmem:[#allocation20 + $0xc30] sm:$0xff]
    %v1377 = vld [vmem:[#allocation20 + $0xc38] sm:$0xff]
    %v1378 = vld [vmem:[#allocation20 + $0xc40] sm:$0xff]
    %v1379 = vld [vmem:[#allocation20 + $0xc48] sm:$0xff]
    %v1380 = vld [vmem:[#allocation20 + $0xc50] sm:$0xff]
    %v1381 = vld [vmem:[#allocation20 + $0xc58] sm:$0xff]
    %v1382 = vld [vmem:[#allocation20 + $0xc60] sm:$0xff]
    %v1383 = vld [vmem:[#allocation20 + $0xc68] sm:$0xff]
    %v1384 = vld [vmem:[#allocation20 + $0xc70] sm:$0xff]
    %v1385 = vld [vmem:[#allocation20 + $0xc78] sm:$0xff]
    %v1386 = vld [vmem:[#allocation20 + $0xc80] sm:$0xff]
    %v1387 = vld [vmem:[#allocation20 + $0xc88] sm:$0xff]
    %v1388 = vld [vmem:[#allocation20 + $0xc90] sm:$0xff]
    %v1389 = vld [vmem:[#allocation20 + $0xc98] sm:$0xff]
    %v1390 = vld [vmem:[#allocation20 + $0xca0] sm:$0xff]
    %v1391 = vld [vmem:[#allocation20 + $0xca8] sm:$0xff]
    %v1392 = vld [vmem:[#allocation20 + $0xcb0] sm:$0xff]
    %v1393 = vld [vmem:[#allocation20 + $0xcb8] sm:$0xff]
    %v1394 = vld [vmem:[#allocation20 + $0xcc0] sm:$0xff]
    %v1395 = vld [vmem:[#allocation20 + $0xcc8] sm:$0xff]
    %v1396 = vld [vmem:[#allocation20 + $0xcd0] sm:$0xff]
    %v1397 = vld [vmem:[#allocation20 + $0xcd8] sm:$0xff]
    %v1398 = vld [vmem:[#allocation20 + $0xce0] sm:$0xff]
    %v1399 = vld [vmem:[#allocation20 + $0xce8] sm:$0xff]
    %v1400 = vld [vmem:[#allocation20 + $0xcf0] sm:$0xff]
    %v1401 = vld [vmem:[#allocation20 + $0xcf8] sm:$0xff]
    %v1402 = vld [vmem:[#allocation20 + $0xd00] sm:$0xff]
    %v1403 = vld [vmem:[#allocation20 + $0xd08] sm:$0xff]
    %v1404 = vld [vmem:[#allocation20 + $0xd10] sm:$0xff]
    %v1405 = vld [vmem:[#allocation20 + $0xd18] sm:$0xff]
    %v1406 = vld [vmem:[#allocation20 + $0xd20] sm:$0xff]
    %v1407 = vld [vmem:[#allocation20 + $0xd28] sm:$0xff]
    %v1408 = vld [vmem:[#allocation20 + $0xd30] sm:$0xff]
    %v1409 = vld [vmem:[#allocation20 + $0xd38] sm:$0xff]
    %v1410 = vld [vmem:[#allocation20 + $0xd40] sm:$0xff]
    %v1411 = vld [vmem:[#allocation20 + $0xd48] sm:$0xff]
    %v1412 = vld [vmem:[#allocation20 + $0xd50] sm:$0xff]
    %v1413 = vld [vmem:[#allocation20 + $0xd58] sm:$0xff]
    %v1414 = vld [vmem:[#allocation20 + $0xd60] sm:$0xff]
    %v1415 = vld [vmem:[#allocation20 + $0xd68] sm:$0xff]
    %v1416 = vld [vmem:[#allocation20 + $0xd70] sm:$0xff]
    %v1417 = vld [vmem:[#allocation20 + $0xd78] sm:$0xff]
    %v1418 = vld [vmem:[#allocation20 + $0xd80] sm:$0xff]
    %v1419 = vld [vmem:[#allocation20 + $0xd88] sm:$0xff]
    %v1420 = vld [vmem:[#allocation20 + $0xd90] sm:$0xff]
    %v1421 = vld [vmem:[#allocation20 + $0xd98] sm:$0xff]
    %v1422 = vld [vmem:[#allocation20 + $0xda0] sm:$0xff]
    %v1423 = vld [vmem:[#allocation20 + $0xda8] sm:$0xff]
    %v1424 = vld [vmem:[#allocation20 + $0xdb0] sm:$0xff]
    %v1425 = vld [vmem:[#allocation20 + $0xdb8] sm:$0xff]
    %v1426 = vld [vmem:[#allocation20 + $0xdc0] sm:$0xff]
    %v1427 = vld [vmem:[#allocation20 + $0xdc8] sm:$0xff]
    %v1428 = vld [vmem:[#allocation20 + $0xdd0] sm:$0xff]
    %v1429 = vld [vmem:[#allocation20 + $0xdd8] sm:$0xff]
    %v1430 = vld [vmem:[#allocation20 + $0xde0] sm:$0xff]
    %v1431 = vld [vmem:[#allocation20 + $0xde8] sm:$0xff]
    %v1432 = vld [vmem:[#allocation20 + $0xdf0] sm:$0xff]
    %v1433 = vld [vmem:[#allocation20 + $0xdf8] sm:$0xff]
    %v1434 = vld [vmem:[#allocation20 + $0xe00] sm:$0xff]
    %v1435 = vld [vmem:[#allocation20 + $0xe08] sm:$0xff]
    %v1436 = vld [vmem:[#allocation20 + $0xe10] sm:$0xff]
    %v1437 = vld [vmem:[#allocation20 + $0xe18] sm:$0xff]
    %v1438 = vld [vmem:[#allocation20 + $0xe20] sm:$0xff]
    %v1439 = vld [vmem:[#allocation20 + $0xe28] sm:$0xff]
    %v1440 = vld [vmem:[#allocation20 + $0xe30] sm:$0xff]
    %v1441 = vld [vmem:[#allocation20 + $0xe38] sm:$0xff]
    %v1442 = vld [vmem:[#allocation20 + $0xe40] sm:$0xff]
    %v1443 = vld [vmem:[#allocation20 + $0xe48] sm:$0xff]
    %v1444 = vld [vmem:[#allocation20 + $0xe50] sm:$0xff]
    %v1445 = vld [vmem:[#allocation20 + $0xe58] sm:$0xff]
    %v1446 = vld [vmem:[#allocation20 + $0xe60] sm:$0xff]
    %v1447 = vld [vmem:[#allocation20 + $0xe68] sm:$0xff]
    %v1448 = vld [vmem:[#allocation20 + $0xe70] sm:$0xff]
    %v1449 = vld [vmem:[#allocation20 + $0xe78] sm:$0xff]
    %v1450 = vld [vmem:[#allocation20 + $0xe80] sm:$0xff]
    %v1451 = vld [vmem:[#allocation20 + $0xe88] sm:$0xff]
    %v1452 = vld [vmem:[#allocation20 + $0xe90] sm:$0xff]
    %v1453 = vld [vmem:[#allocation20 + $0xe98] sm:$0xff]
    %v1454 = vld [vmem:[#allocation20 + $0xea0] sm:$0xff]
    %v1455 = vld [vmem:[#allocation20 + $0xea8] sm:$0xff]
    %v1456 = vld [vmem:[#allocation20 + $0xeb0] sm:$0xff]
    %v1457 = vld [vmem:[#allocation20 + $0xeb8] sm:$0xff]
    %v1458 = vld [vmem:[#allocation20 + $0xec0] sm:$0xff]
    %v1459 = vld [vmem:[#allocation20 + $0xec8] sm:$0xff]
    %v1460 = vld [vmem:[#allocation20 + $0xed0] sm:$0xff]
    %v1461 = vld [vmem:[#allocation20 + $0xed8] sm:$0xff]
    %v1462 = vld [vmem:[#allocation20 + $0xee0] sm:$0xff]
    %v1463 = vld [vmem:[#allocation20 + $0xee8] sm:$0xff]
    %v1464 = vld [vmem:[#allocation20 + $0xef0] sm:$0xff]
    %v1465 = vld [vmem:[#allocation20 + $0xef8] sm:$0xff]
    %v1466 = vld [vmem:[#allocation20 + $0xf00] sm:$0xff]
    %v1467 = vld [vmem:[#allocation20 + $0xf08] sm:$0xff]
    %v1468 = vld [vmem:[#allocation20 + $0xf10] sm:$0xff]
    %v1469 = vld [vmem:[#allocation20 + $0xf18] sm:$0xff]
    %v1470 = vld [vmem:[#allocation20 + $0xf20] sm:$0xff]
    %v1471 = vld [vmem:[#allocation20 + $0xf28] sm:$0xff]
    %v1472 = vld [vmem:[#allocation20 + $0xf30] sm:$0xff]
    %v1473 = vld [vmem:[#allocation20 + $0xf38] sm:$0xff]
    %v1474 = vld [vmem:[#allocation20 + $0xf40] sm:$0xff]
    %v1475 = vld [vmem:[#allocation20 + $0xf48] sm:$0xff]
    %v1476 = vld [vmem:[#allocation20 + $0xf50] sm:$0xff]
    %v1477 = vld [vmem:[#allocation20 + $0xf58] sm:$0xff]
    %v1478 = vld [vmem:[#allocation20 + $0xf60] sm:$0xff]
    %v1479 = vld [vmem:[#allocation20 + $0xf68] sm:$0xff]
    %v1480 = vld [vmem:[#allocation20 + $0xf70] sm:$0xff]
    %v1481 = vld [vmem:[#allocation20 + $0xf78] sm:$0xff]
    %v1482 = vld [vmem:[#allocation20 + $0xf80] sm:$0xff]
    %v1483 = vld [vmem:[#allocation20 + $0xf88] sm:$0xff]
    %v1484 = vld [vmem:[#allocation20 + $0xf90] sm:$0xff]
    %v1485 = vld [vmem:[#allocation20 + $0xf98] sm:$0xff]
    %v1486 = vld [vmem:[#allocation20 + $0xfa0] sm:$0xff]
    %v1487 = vld [vmem:[#allocation20 + $0xfa8] sm:$0xff]
    %v1488 = vld [vmem:[#allocation20 + $0xfb0] sm:$0xff]
    %v1489 = vld [vmem:[#allocation20 + $0xfb8] sm:$0xff]
    %v1490 = vld [vmem:[#allocation20 + $0xfc0] sm:$0xff]
    %v1491 = vld [vmem:[#allocation20 + $0xfc8] sm:$0xff]
    %v1492 = vld [vmem:[#allocation20 + $0xfd0] sm:$0xff]
    %v1493 = vld [vmem:[#allocation20 + $0xfd8] sm:$0xff]
    %v1494 = vld [vmem:[#allocation20 + $0xfe0] sm:$0xff]
    %v1495 = vld [vmem:[#allocation20 + $0xfe8] sm:$0xff]
    %v1496 = vld [vmem:[#allocation20 + $0xff0] sm:$0xff]
    %v1497 = vld [vmem:[#allocation20 + $0xff8] sm:$0xff]
    %v1498 = vld [vmem:[#allocation20 + $0x1000] sm:$0xff]
    %v1499 = vld [vmem:[#allocation20 + $0x1008] sm:$0xff]
    %v1500 = vld [vmem:[#allocation20 + $0x1010] sm:$0xff]
    %v1501 = vld [vmem:[#allocation20 + $0x1018] sm:$0xff]
    %v1502 = vld [vmem:[#allocation20 + $0x1020] sm:$0xff]
    %v1503 = vld [vmem:[#allocation20 + $0x1028] sm:$0xff]
    %v1504 = vld [vmem:[#allocation20 + $0x1030] sm:$0xff]
    %v1505 = vld [vmem:[#allocation20 + $0x1038] sm:$0xff]
    %v1506 = vld [vmem:[#allocation20 + $0x1040] sm:$0xff]
    %v1507 = vld [vmem:[#allocation20 + $0x1048] sm:$0xff]
    %v1508 = vld [vmem:[#allocation20 + $0x1050] sm:$0xff]
    %v1509 = vld [vmem:[#allocation20 + $0x1058] sm:$0xff]
    %v1510 = vld [vmem:[#allocation20 + $0x1060] sm:$0xff]
    %v1511 = vld [vmem:[#allocation20 + $0x1068] sm:$0xff]
    %v1512 = vld [vmem:[#allocation20 + $0x1070] sm:$0xff]
    %v1513 = vld [vmem:[#allocation20 + $0x1078] sm:$0xff]
    %v1514 = vld [vmem:[#allocation20 + $0x1080] sm:$0xff]
    %v1515 = vld [vmem:[#allocation20 + $0x1088] sm:$0xff]
    %v1516 = vld [vmem:[#allocation20 + $0x1090] sm:$0xff]
    %v1517 = vld [vmem:[#allocation20 + $0x1098] sm:$0xff]
    %v1518 = vld [vmem:[#allocation20 + $0x10a0] sm:$0xff]
    %v1519 = vld [vmem:[#allocation20 + $0x10a8] sm:$0xff]
    %v1520 = vld [vmem:[#allocation20 + $0x10b0] sm:$0xff]
    %v1521 = vld [vmem:[#allocation20 + $0x10b8] sm:$0xff]
    %v1522 = vld [vmem:[#allocation20 + $0x10c0] sm:$0xff]
    %v1523 = vld [vmem:[#allocation20 + $0x10c8] sm:$0xff]
    %v1524 = vld [vmem:[#allocation20 + $0x10d0] sm:$0xff]
    %v1525 = vld [vmem:[#allocation20 + $0x10d8] sm:$0xff]
    %v1526 = vld [vmem:[#allocation20 + $0x10e0] sm:$0xff]
    %v1527 = vld [vmem:[#allocation20 + $0x10e8] sm:$0xff]
    %v1528 = vld [vmem:[#allocation20 + $0x10f0] sm:$0xff]
    %v1529 = vld [vmem:[#allocation20 + $0x10f8] sm:$0xff]
    %v1530 = vld [vmem:[#allocation20 + $0x1100] sm:$0xff]
    %v1531 = vld [vmem:[#allocation20 + $0x1108] sm:$0xff]
    %v1532 = vld [vmem:[#allocation20 + $0x1110] sm:$0xff]
    %v1533 = vld [vmem:[#allocation20 + $0x1118] sm:$0xff]
    %v1534 = vld [vmem:[#allocation20 + $0x1120] sm:$0xff]
    %v1535 = vld [vmem:[#allocation20 + $0x1128] sm:$0xff]
    %v1536 = vld [vmem:[#allocation20 + $0x1130] sm:$0xff]
    %v1537 = vld [vmem:[#allocation20 + $0x1138] sm:$0xff]
    %v1538 = vld [vmem:[#allocation20 + $0x1140] sm:$0xff]
    %v1539 = vld [vmem:[#allocation20 + $0x1148] sm:$0xff]
    %v1540 = vld [vmem:[#allocation20 + $0x1150] sm:$0xff]
    %v1541 = vld [vmem:[#allocation20 + $0x1158] sm:$0xff]
    %v1542 = vld [vmem:[#allocation20 + $0x1160] sm:$0xff]
    %v1543 = vld [vmem:[#allocation20 + $0x1168] sm:$0xff]
    %v1544 = vld [vmem:[#allocation20 + $0x1170] sm:$0xff]
    %v1545 = vld [vmem:[#allocation20 + $0x1178] sm:$0xff]
    %v1546 = vld [vmem:[#allocation20 + $0x1180] sm:$0xff]
    %v1547 = vld [vmem:[#allocation20 + $0x1188] sm:$0xff]
    %v1548 = vld [vmem:[#allocation20 + $0x1190] sm:$0xff]
    %v1549 = vld [vmem:[#allocation20 + $0x1198] sm:$0xff]
    %v1550 = vld [vmem:[#allocation20 + $0x11a0] sm:$0xff]
    %v1551 = vld [vmem:[#allocation20 + $0x11a8] sm:$0xff]
    %v1552 = vld [vmem:[#allocation20 + $0x11b0] sm:$0xff]
    %v1553 = vld [vmem:[#allocation20 + $0x11b8] sm:$0xff]
    %v1554 = vld [vmem:[#allocation20 + $0x11c0] sm:$0xff]
    %v1555 = vld [vmem:[#allocation20 + $0x11c8] sm:$0xff]
    %v1556 = vld [vmem:[#allocation20 + $0x11d0] sm:$0xff]
    %v1557 = vld [vmem:[#allocation20 + $0x11d8] sm:$0xff]
    %v1558 = vld [vmem:[#allocation20 + $0x11e0] sm:$0xff]
    %v1559 = vld [vmem:[#allocation20 + $0x11e8] sm:$0xff]
    %v1560 = vld [vmem:[#allocation20 + $0x11f0] sm:$0xff]
    %v1561 = vld [vmem:[#allocation20 + $0x11f8] sm:$0xff]
    %v1562 = vld [vmem:[#allocation22] sm:$0x3f]
    %v1564 = vlaneseq
    %v1565 = vshrl.u32 %v1564, 7
    %v1566 = vsub.s32 0, %v1565
    %v1567 = vrot.slane %v1562, %v1566
    %v1568 = vlaneseq
    %v1569 = vshrl.u32 %v1568, 7
    %v1570 = vsub.s32 1, %v1569
    %v1571 = vrot.slane %v1562, %v1570
    %v1572 = vlaneseq
    %v1573 = vshrl.u32 %v1572, 7
    %v1574 = vsub.s32 2, %v1573
    %v1575 = vrot.slane %v1562, %v1574
    %v1576 = vlaneseq
    %v1577 = vshrl.u32 %v1576, 7
    %v1578 = vsub.s32 3, %v1577
    %v1579 = vrot.slane %v1562, %v1578
    %v1580 = vlaneseq
    %v1581 = vshrl.u32 %v1580, 7
    %v1582 = vsub.s32 4, %v1581
    %v1583 = vrot.slane %v1562, %v1582
    %v1584 = vlaneseq
    %v1585 = vshrl.u32 %v1584, 7
    %v1586 = vsub.s32 5, %v1585
    %v1587 = vrot.slane %v1562, %v1586
    %1594 = vmatprep.subr.mxu0 %v987
    %1595 = vmatpush1.msra.mxu0 %v986
    %1596 = vmatprep.subr.mxu0 %v993
    %1597 = vmatpush1.msra.mxu0 %v992
    %1598 = vmatprep.subr.mxu0 %v999
    %1599 = vmatpush1.msra.mxu0 %v998
    %1600 = vmatprep.subr.mxu0 %v1005
    %1601 = vmatpush1.msra.mxu0 %v1004
    %1602 = vmatprep.subr.mxu0 %v1011
    %1603 = vmatpush1.msra.mxu0 %v1010
    %1604 = vmatprep.subr.mxu0 %v1017
    %1605 = vmatpush1.msra.mxu0 %v1016
    %1606 = vmatprep.subr.mxu0 %v1023
    %1607 = vmatpush1.msra.mxu0 %v1022
    %1608 = vmatprep.subr.mxu0 %v1029
    %1609 = vmatpush1.msra.mxu0 %v1028
    %1610 = vmatprep.subr.mxu0 %v1035
    %1611 = vmatpush1.msra.mxu0 %v1034
    %1612 = vmatprep.subr.mxu0 %v1041
    %1613 = vmatpush1.msra.mxu0 %v1040
    %1614 = vmatprep.subr.mxu0 %v1047
    %1615 = vmatpush1.msra.mxu0 %v1046
    %1616 = vmatprep.subr.mxu0 %v1053
    %1617 = vmatpush1.msra.mxu0 %v1052
    %1618 = vmatprep.subr.mxu0 %v1059
    %1619 = vmatpush1.msra.mxu0 %v1058
    %1620 = vmatprep.subr.mxu0 %v1065
    %1621 = vmatpush1.msra.mxu0 %v1064
    %1622 = vmatprep.subr.mxu0 %v1071
    %1623 = vmatpush1.msra.mxu0 %v1070
    %1624 = vmatprep.subr.mxu0 %v1077
    %1625 = vmatpush1.msra.mxu0 %v1076
    %1626 = vmatprep.subr.mxu0 %v1083
    %1627 = vmatpush1.msra.mxu0 %v1082
    %1628 = vmatprep.subr.mxu0 %v1089
    %1629 = vmatpush1.msra.mxu0 %v1088
    %1630 = vmatprep.subr.mxu0 %v1095
    %1631 = vmatpush1.msra.mxu0 %v1094
    %1632 = vmatprep.subr.mxu0 %v1101
    %1633 = vmatpush1.msra.mxu0 %v1100
    %1634 = vmatprep.subr.mxu0 %v1107
    %1635 = vmatpush1.msra.mxu0 %v1106
    %1636 = vmatprep.subr.mxu0 %v1113
    %1637 = vmatpush1.msra.mxu0 %v1112
    %1638 = vmatprep.subr.mxu0 %v1119
    %1639 = vmatpush1.msra.mxu0 %v1118
    %1640 = vmatprep.subr.mxu0 %v1125
    %1641 = vmatpush1.msra.mxu0 %v1124
    %1642 = vmatprep.subr.mxu0 %v1131
    %1643 = vmatpush1.msra.mxu0 %v1130
    %1644 = vmatprep.subr.mxu0 %v1137
    %1645 = vmatpush1.msra.mxu0 %v1136
    %1646 = vmatprep.subr.mxu0 %v1143
    %1647 = vmatpush1.msra.mxu0 %v1142
    %1648 = vmatprep.subr.mxu0 %v1149
    %1649 = vmatpush1.msra.mxu0 %v1148
    %1650 = vmatprep.subr.mxu0 %v1155
    %1651 = vmatpush1.msra.mxu0 %v1154
    %1652 = vmatprep.subr.mxu0 %v1161
    %1653 = vmatpush1.msra.mxu0 %v1160
    %1654 = vmatprep.subr.mxu0 %v1167
    %1655 = vmatpush1.msra.mxu0 %v1166
    %1656 = vmatprep.subr.mxu0 %v1173
    %1657 = vmatpush1.msra.mxu0 %v1172
    %1658 = vmatprep.mubr.f32.mxu0 %v981
    %1659 = vmatmul.mubr.f32.gmra.mrb[0].mxu0 %v980
    %v1660 = vpop.f32.mrb[0].mxu0
    %v1661 = vadd.f32 %v1567, %v1660
    %v1662 = vpop.f32.mrb[0].mxu0
    %v1663 = vadd.f32 %v1571, %v1662
    %1664 = vdwg.mxu0
    %1665 = vmatprep.subr.mxu0 %v1179
    %1666 = vmatpush1.msra.mxu0 %v1178
    %1667 = vmatprep.subr.mxu0 %v1185
    %1668 = vmatpush1.msra.mxu0 %v1184
    %1669 = vmatprep.subr.mxu0 %v1191
    %1670 = vmatpush1.msra.mxu0 %v1190
    %1671 = vmatprep.subr.mxu0 %v1197
    %1672 = vmatpush1.msra.mxu0 %v1196
    %1673 = vmatprep.subr.mxu0 %v1203
    %1674 = vmatpush1.msra.mxu0 %v1202
    %1675 = vmatprep.subr.mxu0 %v1209
    %1676 = vmatpush1.msra.mxu0 %v1208
    %1677 = vmatprep.subr.mxu0 %v1215
    %1678 = vmatpush1.msra.mxu0 %v1214
    %1679 = vmatprep.subr.mxu0 %v1221
    %1680 = vmatpush1.msra.mxu0 %v1220
    %1681 = vmatprep.subr.mxu0 %v1227
    %1682 = vmatpush1.msra.mxu0 %v1226
    %1683 = vmatprep.subr.mxu0 %v1233
    %1684 = vmatpush1.msra.mxu0 %v1232
    %1685 = vmatprep.subr.mxu0 %v1239
    %1686 = vmatpush1.msra.mxu0 %v1238
    %1687 = vmatprep.subr.mxu0 %v1245
    %1688 = vmatpush1.msra.mxu0 %v1244
    %1689 = vmatprep.subr.mxu0 %v1251
    %1690 = vmatpush1.msra.mxu0 %v1250
    %1691 = vmatprep.subr.mxu0 %v1257
    %1692 = vmatpush1.msra.mxu0 %v1256
    %1693 = vmatprep.subr.mxu0 %v1263
    %1694 = vmatpush1.msra.mxu0 %v1262
    %1695 = vmatprep.subr.mxu0 %v1269
    %1696 = vmatpush1.msra.mxu0 %v1268
    %1697 = vmatprep.subr.mxu0 %v1275
    %1698 = vmatpush1.msra.mxu0 %v1274
    %1699 = vmatprep.subr.mxu0 %v1281
    %1700 = vmatpush1.msra.mxu0 %v1280
    %1701 = vmatprep.subr.mxu0 %v1287
    %1702 = vmatpush1.msra.mxu0 %v1286
    %1703 = vmatprep.subr.mxu0 %v1293
    %1704 = vmatpush1.msra.mxu0 %v1292
    %1705 = vmatprep.subr.mxu0 %v1299
    %1706 = vmatpush1.msra.mxu0 %v1298
    %1707 = vmatprep.subr.mxu0 %v1305
    %1708 = vmatpush1.msra.mxu0 %v1304
    %1709 = vmatprep.subr.mxu0 %v1311
    %1710 = vmatpush1.msra.mxu0 %v1310
    %1711 = vmatprep.subr.mxu0 %v1317
    %1712 = vmatpush1.msra.mxu0 %v1316
    %1713 = vmatprep.subr.mxu0 %v1323
    %1714 = vmatpush1.msra.mxu0 %v1322
    %1715 = vmatprep.subr.mxu0 %v1329
    %1716 = vmatpush1.msra.mxu0 %v1328
    %1717 = vmatprep.subr.mxu0 %v1335
    %1718 = vmatpush1.msra.mxu0 %v1334
    %1719 = vmatprep.subr.mxu0 %v1341
    %1720 = vmatpush1.msra.mxu0 %v1340
    %1721 = vmatprep.subr.mxu0 %v1347
    %1722 = vmatpush1.msra.mxu0 %v1346
    %1723 = vmatprep.subr.mxu0 %v1353
    %1724 = vmatpush1.msra.mxu0 %v1352
    %1725 = vmatprep.subr.mxu0 %v1359
    %1726 = vmatpush1.msra.mxu0 %v1358
    %1727 = vmatprep.subr.mxu0 %v1365
    %1728 = vmatpush1.msra.mxu0 %v1364
    %1729 = vmatprep.mubr.f32.mxu0 %v983
    %1730 = vmatmul.mubr.f32.gmra.mrb[0].mxu0 %v982
    %v1731 = vpop.f32.mrb[0].mxu0
    %v1732 = vadd.f32 %v1661, %v1731
    %v1733 = vpop.f32.mrb[0].mxu0
    %v1734 = vadd.f32 %v1663, %v1733
    %1735 = vdwg.mxu0
    %1736 = vmatprep.subr.mxu0 %v1371
    %1737 = vmatpush1.msra.mxu0 %v1370
    %1738 = vmatprep.subr.mxu0 %v1377
    %1739 = vmatpush1.msra.mxu0 %v1376
    %1740 = vmatprep.subr.mxu0 %v1383
    %1741 = vmatpush1.msra.mxu0 %v1382
    %1742 = vmatprep.subr.mxu0 %v1389
    %1743 = vmatpush1.msra.mxu0 %v1388
    %1744 = vmatprep.subr.mxu0 %v1395
    %1745 = vmatpush1.msra.mxu0 %v1394
    %1746 = vmatprep.subr.mxu0 %v1401
    %1747 = vmatpush1.msra.mxu0 %v1400
    %1748 = vmatprep.subr.mxu0 %v1407
    %1749 = vmatpush1.msra.mxu0 %v1406
    %1750 = vmatprep.subr.mxu0 %v1413
    %1751 = vmatpush1.msra.mxu0 %v1412
    %1752 = vmatprep.subr.mxu0 %v1419
    %1753 = vmatpush1.msra.mxu0 %v1418
    %1754 = vmatprep.subr.mxu0 %v1425
    %1755 = vmatpush1.msra.mxu0 %v1424
    %1756 = vmatprep.subr.mxu0 %v1431
    %1757 = vmatpush1.msra.mxu0 %v1430
    %1758 = vmatprep.subr.mxu0 %v1437
    %1759 = vmatpush1.msra.mxu0 %v1436
    %1760 = vmatprep.subr.mxu0 %v1443
    %1761 = vmatpush1.msra.mxu0 %v1442
    %1762 = vmatprep.subr.mxu0 %v1449
    %1763 = vmatpush1.msra.mxu0 %v1448
    %1764 = vmatprep.subr.mxu0 %v1455
    %1765 = vmatpush1.msra.mxu0 %v1454
    %1766 = vmatprep.subr.mxu0 %v1461
    %1767 = vmatpush1.msra.mxu0 %v1460
    %1768 = vmatprep.subr.mxu0 %v1467
    %1769 = vmatpush1.msra.mxu0 %v1466
    %1770 = vmatprep.subr.mxu0 %v1473
    %1771 = vmatpush1.msra.mxu0 %v1472
    %1772 = vmatprep.subr.mxu0 %v1479
    %1773 = vmatpush1.msra.mxu0 %v1478
    %1774 = vmatprep.subr.mxu0 %v1485
    %1775 = vmatpush1.msra.mxu0 %v1484
    %1776 = vmatprep.subr.mxu0 %v1491
    %1777 = vmatpush1.msra.mxu0 %v1490
    %1778 = vmatprep.subr.mxu0 %v1497
    %1779 = vmatpush1.msra.mxu0 %v1496
    %1780 = vmatprep.subr.mxu0 %v1503
    %1781 = vmatpush1.msra.mxu0 %v1502
    %1782 = vmatprep.subr.mxu0 %v1509
    %1783 = vmatpush1.msra.mxu0 %v1508
    %1784 = vmatprep.subr.mxu0 %v1515
    %1785 = vmatpush1.msra.mxu0 %v1514
    %1786 = vmatprep.subr.mxu0 %v1521
    %1787 = vmatpush1.msra.mxu0 %v1520
    %1788 = vmatprep.subr.mxu0 %v1527
    %1789 = vmatpush1.msra.mxu0 %v1526
    %1790 = vmatprep.subr.mxu0 %v1533
    %1791 = vmatpush1.msra.mxu0 %v1532
    %1792 = vmatprep.subr.mxu0 %v1539
    %1793 = vmatpush1.msra.mxu0 %v1538
    %1794 = vmatprep.subr.mxu0 %v1545
    %1795 = vmatpush1.msra.mxu0 %v1544
    %1796 = vmatprep.subr.mxu0 %v1551
    %1797 = vmatpush1.msra.mxu0 %v1550
    %1798 = vmatprep.subr.mxu0 %v1557
    %1799 = vmatpush1.msra.mxu0 %v1556
    %1800 = vmatprep.mubr.f32.mxu0 %v985
    %1801 = vmatmul.mubr.f32.gmra.mrb[0].mxu0 %v984
    %v1802 = vpop.f32.mrb[0].mxu0
    %v1803 = vadd.f32 %v1732, %v1802
    %v1804 = vpop.f32.mrb[0].mxu0
    %v1805 = vadd.f32 %v1734, %v1804
    %1806 = vdwg.mxu0
    %1807 = vmatprep.subr.mxu0 %v989
    %1808 = vmatpush1.msra.mxu0 %v988
    %1809 = vmatprep.subr.mxu0 %v995
    %1810 = vmatpush1.msra.mxu0 %v994
    %1811 = vmatprep.subr.mxu0 %v1001
    %1812 = vmatpush1.msra.mxu0 %v1000
    %1813 = vmatprep.subr.mxu0 %v1007
    %1814 = vmatpush1.msra.mxu0 %v1006
    %1815 = vmatprep.subr.mxu0 %v1013
    %1816 = vmatpush1.msra.mxu0 %v1012
    %1817 = vmatprep.subr.mxu0 %v1019
    %1818 = vmatpush1.msra.mxu0 %v1018
    %1819 = vmatprep.subr.mxu0 %v1025
    %1820 = vmatpush1.msra.mxu0 %v1024
    %1821 = vmatprep.subr.mxu0 %v1031
    %1822 = vmatpush1.msra.mxu0 %v1030
    %1823 = vmatprep.subr.mxu0 %v1037
    %1824 = vmatpush1.msra.mxu0 %v1036
    %1825 = vmatprep.subr.mxu0 %v1043
    %1826 = vmatpush1.msra.mxu0 %v1042
    %1827 = vmatprep.subr.mxu0 %v1049
    %1828 = vmatpush1.msra.mxu0 %v1048
    %1829 = vmatprep.subr.mxu0 %v1055
    %1830 = vmatpush1.msra.mxu0 %v1054
    %1831 = vmatprep.subr.mxu0 %v1061
    %1832 = vmatpush1.msra.mxu0 %v1060
    %1833 = vmatprep.subr.mxu0 %v1067
    %1834 = vmatpush1.msra.mxu0 %v1066
    %1835 = vmatprep.subr.mxu0 %v1073
    %1836 = vmatpush1.msra.mxu0 %v1072
    %1837 = vmatprep.subr.mxu0 %v1079
    %1838 = vmatpush1.msra.mxu0 %v1078
    %1839 = vmatprep.subr.mxu0 %v1085
    %1840 = vmatpush1.msra.mxu0 %v1084
    %1841 = vmatprep.subr.mxu0 %v1091
    %1842 = vmatpush1.msra.mxu0 %v1090
    %1843 = vmatprep.subr.mxu0 %v1097
    %1844 = vmatpush1.msra.mxu0 %v1096
    %1845 = vmatprep.subr.mxu0 %v1103
    %1846 = vmatpush1.msra.mxu0 %v1102
    %1847 = vmatprep.subr.mxu0 %v1109
    %1848 = vmatpush1.msra.mxu0 %v1108
    %1849 = vmatprep.subr.mxu0 %v1115
    %1850 = vmatpush1.msra.mxu0 %v1114
    %1851 = vmatprep.subr.mxu0 %v1121
    %1852 = vmatpush1.msra.mxu0 %v1120
    %1853 = vmatprep.subr.mxu0 %v1127
    %1854 = vmatpush1.msra.mxu0 %v1126
    %1855 = vmatprep.subr.mxu0 %v1133
    %1856 = vmatpush1.msra.mxu0 %v1132
    %1857 = vmatprep.subr.mxu0 %v1139
    %1858 = vmatpush1.msra.mxu0 %v1138
    %1859 = vmatprep.subr.mxu0 %v1145
    %1860 = vmatpush1.msra.mxu0 %v1144
    %1861 = vmatprep.subr.mxu0 %v1151
    %1862 = vmatpush1.msra.mxu0 %v1150
    %1863 = vmatprep.subr.mxu0 %v1157
    %1864 = vmatpush1.msra.mxu0 %v1156
    %1865 = vmatprep.subr.mxu0 %v1163
    %1866 = vmatpush1.msra.mxu0 %v1162
    %1867 = vmatprep.subr.mxu0 %v1169
    %1868 = vmatpush1.msra.mxu0 %v1168
    %1869 = vmatprep.subr.mxu0 %v1175
    %1870 = vmatpush1.msra.mxu0 %v1174
    %1871 = vmatprep.mubr.f32.mxu0 %v981
    %1872 = vmatmul.mubr.f32.gmra.mrb[0].mxu0 %v980
    %v1873 = vpop.f32.mrb[0].mxu0
    %v1874 = vadd.f32 %v1575, %v1873
    %v1875 = vpop.f32.mrb[0].mxu0
    %v1876 = vadd.f32 %v1579, %v1875
    %1877 = vdwg.mxu0
    %1878 = vmatprep.subr.mxu0 %v1181
    %1879 = vmatpush1.msra.mxu0 %v1180
    %1880 = vmatprep.subr.mxu0 %v1187
    %1881 = vmatpush1.msra.mxu0 %v1186
    %1882 = vmatprep.subr.mxu0 %v1193
    %1883 = vmatpush1.msra.mxu0 %v1192
    %1884 = vmatprep.subr.mxu0 %v1199
    %1885 = vmatpush1.msra.mxu0 %v1198
    %1886 = vmatprep.subr.mxu0 %v1205
    %1887 = vmatpush1.msra.mxu0 %v1204
    %1888 = vmatprep.subr.mxu0 %v1211
    %1889 = vmatpush1.msra.mxu0 %v1210
    %1890 = vmatprep.subr.mxu0 %v1217
    %1891 = vmatpush1.msra.mxu0 %v1216
    %1892 = vmatprep.subr.mxu0 %v1223
    %1893 = vmatpush1.msra.mxu0 %v1222
    %1894 = vmatprep.subr.mxu0 %v1229
    %1895 = vmatpush1.msra.mxu0 %v1228
    %1896 = vmatprep.subr.mxu0 %v1235
    %1897 = vmatpush1.msra.mxu0 %v1234
    %1898 = vmatprep.subr.mxu0 %v1241
    %1899 = vmatpush1.msra.mxu0 %v1240
    %1900 = vmatprep.subr.mxu0 %v1247
    %1901 = vmatpush1.msra.mxu0 %v1246
    %1902 = vmatprep.subr.mxu0 %v1253
    %1903 = vmatpush1.msra.mxu0 %v1252
    %1904 = vmatprep.subr.mxu0 %v1259
    %1905 = vmatpush1.msra.mxu0 %v1258
    %1906 = vmatprep.subr.mxu0 %v1265
    %1907 = vmatpush1.msra.mxu0 %v1264
    %1908 = vmatprep.subr.mxu0 %v1271
    %1909 = vmatpush1.msra.mxu0 %v1270
    %1910 = vmatprep.subr.mxu0 %v1277
    %1911 = vmatpush1.msra.mxu0 %v1276
    %1912 = vmatprep.subr.mxu0 %v1283
    %1913 = vmatpush1.msra.mxu0 %v1282
    %1914 = vmatprep.subr.mxu0 %v1289
    %1915 = vmatpush1.msra.mxu0 %v1288
    %1916 = vmatprep.subr.mxu0 %v1295
    %1917 = vmatpush1.msra.mxu0 %v1294
    %1918 = vmatprep.subr.mxu0 %v1301
    %1919 = vmatpush1.msra.mxu0 %v1300
    %1920 = vmatprep.subr.mxu0 %v1307
    %1921 = vmatpush1.msra.mxu0 %v1306
    %1922 = vmatprep.subr.mxu0 %v1313
    %1923 = vmatpush1.msra.mxu0 %v1312
    %1924 = vmatprep.subr.mxu0 %v1319
    %1925 = vmatpush1.msra.mxu0 %v1318
    %1926 = vmatprep.subr.mxu0 %v1325
    %1927 = vmatpush1.msra.mxu0 %v1324
    %1928 = vmatprep.subr.mxu0 %v1331
    %1929 = vmatpush1.msra.mxu0 %v1330
    %1930 = vmatprep.subr.mxu0 %v1337
    %1931 = vmatpush1.msra.mxu0 %v1336
    %1932 = vmatprep.subr.mxu0 %v1343
    %1933 = vmatpush1.msra.mxu0 %v1342
    %1934 = vmatprep.subr.mxu0 %v1349
    %1935 = vmatpush1.msra.mxu0 %v1348
    %1936 = vmatprep.subr.mxu0 %v1355
    %1937 = vmatpush1.msra.mxu0 %v1354
    %1938 = vmatprep.subr.mxu0 %v1361
    %1939 = vmatpush1.msra.mxu0 %v1360
    %1940 = vmatprep.subr.mxu0 %v1367
    %1941 = vmatpush1.msra.mxu0 %v1366
    %1942 = vmatprep.mubr.f32.mxu0 %v983
    %1943 = vmatmul.mubr.f32.gmra.mrb[0].mxu0 %v982
    %v1944 = vpop.f32.mrb[0].mxu0
    %v1945 = vadd.f32 %v1874, %v1944
    %v1946 = vpop.f32.mrb[0].mxu0
    %v1947 = vadd.f32 %v1876, %v1946
    %1948 = vdwg.mxu0
    %1949 = vmatprep.subr.mxu0 %v1373
    %1950 = vmatpush1.msra.mxu0 %v1372
    %1951 = vmatprep.subr.mxu0 %v1379
    %1952 = vmatpush1.msra.mxu0 %v1378
    %1953 = vmatprep.subr.mxu0 %v1385
    %1954 = vmatpush1.msra.mxu0 %v1384
    %1955 = vmatprep.subr.mxu0 %v1391
    %1956 = vmatpush1.msra.mxu0 %v1390
    %1957 = vmatprep.subr.mxu0 %v1397
    %1958 = vmatpush1.msra.mxu0 %v1396
    %1959 = vmatprep.subr.mxu0 %v1403
    %1960 = vmatpush1.msra.mxu0 %v1402
    %1961 = vmatprep.subr.mxu0 %v1409
    %1962 = vmatpush1.msra.mxu0 %v1408
    %1963 = vmatprep.subr.mxu0 %v1415
    %1964 = vmatpush1.msra.mxu0 %v1414
    %1965 = vmatprep.subr.mxu0 %v1421
    %1966 = vmatpush1.msra.mxu0 %v1420
    %1967 = vmatprep.subr.mxu0 %v1427
    %1968 = vmatpush1.msra.mxu0 %v1426
    %1969 = vmatprep.subr.mxu0 %v1433
    %1970 = vmatpush1.msra.mxu0 %v1432
    %1971 = vmatprep.subr.mxu0 %v1439
    %1972 = vmatpush1.msra.mxu0 %v1438
    %1973 = vmatprep.subr.mxu0 %v1445
    %1974 = vmatpush1.msra.mxu0 %v1444
    %1975 = vmatprep.subr.mxu0 %v1451
    %1976 = vmatpush1.msra.mxu0 %v1450
    %1977 = vmatprep.subr.mxu0 %v1457
    %1978 = vmatpush1.msra.mxu0 %v1456
    %1979 = vmatprep.subr.mxu0 %v1463
    %1980 = vmatpush1.msra.mxu0 %v1462
    %1981 = vmatprep.subr.mxu0 %v1469
    %1982 = vmatpush1.msra.mxu0 %v1468
    %1983 = vmatprep.subr.mxu0 %v1475
    %1984 = vmatpush1.msra.mxu0 %v1474
    %1985 = vmatprep.subr.mxu0 %v1481
    %1986 = vmatpush1.msra.mxu0 %v1480
    %1987 = vmatprep.subr.mxu0 %v1487
    %1988 = vmatpush1.msra.mxu0 %v1486
    %1989 = vmatprep.subr.mxu0 %v1493
    %1990 = vmatpush1.msra.mxu0 %v1492
    %1991 = vmatprep.subr.mxu0 %v1499
    %1992 = vmatpush1.msra.mxu0 %v1498
    %1993 = vmatprep.subr.mxu0 %v1505
    %1994 = vmatpush1.msra.mxu0 %v1504
    %1995 = vmatprep.subr.mxu0 %v1511
    %1996 = vmatpush1.msra.mxu0 %v1510
    %1997 = vmatprep.subr.mxu0 %v1517
    %1998 = vmatpush1.msra.mxu0 %v1516
    %1999 = vmatprep.subr.mxu0 %v1523
    %2000 = vmatpush1.msra.mxu0 %v1522
    %2001 = vmatprep.subr.mxu0 %v1529
    %2002 = vmatpush1.msra.mxu0 %v1528
    %2003 = vmatprep.subr.mxu0 %v1535
    %2004 = vmatpush1.msra.mxu0 %v1534
    %2005 = vmatprep.subr.mxu0 %v1541
    %2006 = vmatpush1.msra.mxu0 %v1540
    %2007 = vmatprep.subr.mxu0 %v1547
    %2008 = vmatpush1.msra.mxu0 %v1546
    %2009 = vmatprep.subr.mxu0 %v1553
    %2010 = vmatpush1.msra.mxu0 %v1552
    %2011 = vmatprep.subr.mxu0 %v1559
    %2012 = vmatpush1.msra.mxu0 %v1558
    %2013 = vmatprep.mubr.f32.mxu0 %v985
    %2014 = vmatmul.mubr.f32.gmra.mrb[0].mxu0 %v984
    %v2015 = vpop.f32.mrb[0].mxu0
    %v2016 = vadd.f32 %v1945, %v2015
    %v2017 = vpop.f32.mrb[0].mxu0
    %v2018 = vadd.f32 %v1947, %v2017
    %2019 = vdwg.mxu0
    %2020 = vmatprep.subr.mxu0 %v991
    %2021 = vmatpush1.msra.mxu0 %v990
    %2022 = vmatprep.subr.mxu0 %v997
    %2023 = vmatpush1.msra.mxu0 %v996
    %2024 = vmatprep.subr.mxu0 %v1003
    %2025 = vmatpush1.msra.mxu0 %v1002
    %2026 = vmatprep.subr.mxu0 %v1009
    %2027 = vmatpush1.msra.mxu0 %v1008
    %2028 = vmatprep.subr.mxu0 %v1015
    %2029 = vmatpush1.msra.mxu0 %v1014
    %2030 = vmatprep.subr.mxu0 %v1021
    %2031 = vmatpush1.msra.mxu0 %v1020
    %2032 = vmatprep.subr.mxu0 %v1027
    %2033 = vmatpush1.msra.mxu0 %v1026
    %2034 = vmatprep.subr.mxu0 %v1033
    %2035 = vmatpush1.msra.mxu0 %v1032
    %2036 = vmatprep.subr.mxu0 %v1039
    %2037 = vmatpush1.msra.mxu0 %v1038
    %2038 = vmatprep.subr.mxu0 %v1045
    %2039 = vmatpush1.msra.mxu0 %v1044
    %2040 = vmatprep.subr.mxu0 %v1051
    %2041 = vmatpush1.msra.mxu0 %v1050
    %2042 = vmatprep.subr.mxu0 %v1057
    %2043 = vmatpush1.msra.mxu0 %v1056
    %2044 = vmatprep.subr.mxu0 %v1063
    %2045 = vmatpush1.msra.mxu0 %v1062
    %2046 = vmatprep.subr.mxu0 %v1069
    %2047 = vmatpush1.msra.mxu0 %v1068
    %2048 = vmatprep.subr.mxu0 %v1075
    %2049 = vmatpush1.msra.mxu0 %v1074
    %2050 = vmatprep.subr.mxu0 %v1081
    %2051 = vmatpush1.msra.mxu0 %v1080
    %2052 = vmatprep.subr.mxu0 %v1087
    %2053 = vmatpush1.msra.mxu0 %v1086
    %2054 = vmatprep.subr.mxu0 %v1093
    %2055 = vmatpush1.msra.mxu0 %v1092
    %2056 = vmatprep.subr.mxu0 %v1099
    %2057 = vmatpush1.msra.mxu0 %v1098
    %2058 = vmatprep.subr.mxu0 %v1105
    %2059 = vmatpush1.msra.mxu0 %v1104
    %2060 = vmatprep.subr.mxu0 %v1111
    %2061 = vmatpush1.msra.mxu0 %v1110
    %2062 = vmatprep.subr.mxu0 %v1117
    %2063 = vmatpush1.msra.mxu0 %v1116
    %2064 = vmatprep.subr.mxu0 %v1123
    %2065 = vmatpush1.msra.mxu0 %v1122
    %2066 = vmatprep.subr.mxu0 %v1129
    %2067 = vmatpush1.msra.mxu0 %v1128
    %2068 = vmatprep.subr.mxu0 %v1135
    %2069 = vmatpush1.msra.mxu0 %v1134
    %2070 = vmatprep.subr.mxu0 %v1141
    %2071 = vmatpush1.msra.mxu0 %v1140
    %2072 = vmatprep.subr.mxu0 %v1147
    %2073 = vmatpush1.msra.mxu0 %v1146
    %2074 = vmatprep.subr.mxu0 %v1153
    %2075 = vmatpush1.msra.mxu0 %v1152
    %2076 = vmatprep.subr.mxu0 %v1159
    %2077 = vmatpush1.msra.mxu0 %v1158
    %2078 = vmatprep.subr.mxu0 %v1165
    %2079 = vmatpush1.msra.mxu0 %v1164
    %2080 = vmatprep.subr.mxu0 %v1171
    %2081 = vmatpush1.msra.mxu0 %v1170
    %2082 = vmatprep.subr.mxu0 %v1177
    %2083 = vmatpush1.msra.mxu0 %v1176
    %2084 = vmatprep.mubr.f32.mxu0 %v981
    %2085 = vmatmul.mubr.f32.gmra.mrb[0].mxu0 %v980
    %v2086 = vpop.f32.mrb[0].mxu0
    %v2087 = vadd.f32 %v1583, %v2086
    %v2088 = vpop.f32.mrb[0].mxu0
    %v2089 = vadd.f32 %v1587, %v2088
    %2090 = vdwg.mxu0
    %2091 = vmatprep.subr.mxu0 %v1183
    %2092 = vmatpush1.msra.mxu0 %v1182
    %2093 = vmatprep.subr.mxu0 %v1189
    %2094 = vmatpush1.msra.mxu0 %v1188
    %2095 = vmatprep.subr.mxu0 %v1195
    %2096 = vmatpush1.msra.mxu0 %v1194
    %2097 = vmatprep.subr.mxu0 %v1201
    %2098 = vmatpush1.msra.mxu0 %v1200
    %2099 = vmatprep.subr.mxu0 %v1207
    %2100 = vmatpush1.msra.mxu0 %v1206
    %2101 = vmatprep.subr.mxu0 %v1213
    %2102 = vmatpush1.msra.mxu0 %v1212
    %2103 = vmatprep.subr.mxu0 %v1219
    %2104 = vmatpush1.msra.mxu0 %v1218
    %2105 = vmatprep.subr.mxu0 %v1225
    %2106 = vmatpush1.msra.mxu0 %v1224
    %2107 = vmatprep.subr.mxu0 %v1231
    %2108 = vmatpush1.msra.mxu0 %v1230
    %2109 = vmatprep.subr.mxu0 %v1237
    %2110 = vmatpush1.msra.mxu0 %v1236
    %2111 = vmatprep.subr.mxu0 %v1243
    %2112 = vmatpush1.msra.mxu0 %v1242
    %2113 = vmatprep.subr.mxu0 %v1249
    %2114 = vmatpush1.msra.mxu0 %v1248
    %2115 = vmatprep.subr.mxu0 %v1255
    %2116 = vmatpush1.msra.mxu0 %v1254
    %2117 = vmatprep.subr.mxu0 %v1261
    %2118 = vmatpush1.msra.mxu0 %v1260
    %2119 = vmatprep.subr.mxu0 %v1267
    %2120 = vmatpush1.msra.mxu0 %v1266
    %2121 = vmatprep.subr.mxu0 %v1273
    %2122 = vmatpush1.msra.mxu0 %v1272
    %2123 = vmatprep.subr.mxu0 %v1279
    %2124 = vmatpush1.msra.mxu0 %v1278
    %2125 = vmatprep.subr.mxu0 %v1285
    %2126 = vmatpush1.msra.mxu0 %v1284
    %2127 = vmatprep.subr.mxu0 %v1291
    %2128 = vmatpush1.msra.mxu0 %v1290
    %2129 = vmatprep.subr.mxu0 %v1297
    %2130 = vmatpush1.msra.mxu0 %v1296
    %2131 = vmatprep.subr.mxu0 %v1303
    %2132 = vmatpush1.msra.mxu0 %v1302
    %2133 = vmatprep.subr.mxu0 %v1309
    %2134 = vmatpush1.msra.mxu0 %v1308
    %2135 = vmatprep.subr.mxu0 %v1315
    %2136 = vmatpush1.msra.mxu0 %v1314
    %2137 = vmatprep.subr.mxu0 %v1321
    %2138 = vmatpush1.msra.mxu0 %v1320
    %2139 = vmatprep.subr.mxu0 %v1327
    %2140 = vmatpush1.msra.mxu0 %v1326
    %2141 = vmatprep.subr.mxu0 %v1333
    %2142 = vmatpush1.msra.mxu0 %v1332
    %2143 = vmatprep.subr.mxu0 %v1339
    %2144 = vmatpush1.msra.mxu0 %v1338
    %2145 = vmatprep.subr.mxu0 %v1345
    %2146 = vmatpush1.msra.mxu0 %v1344
    %2147 = vmatprep.subr.mxu0 %v1351
    %2148 = vmatpush1.msra.mxu0 %v1350
    %2149 = vmatprep.subr.mxu0 %v1357
    %2150 = vmatpush1.msra.mxu0 %v1356
    %2151 = vmatprep.subr.mxu0 %v1363
    %2152 = vmatpush1.msra.mxu0 %v1362
    %2153 = vmatprep.subr.mxu0 %v1369
    %2154 = vmatpush1.msra.mxu0 %v1368
    %2155 = vmatprep.mubr.f32.mxu0 %v983
    %2156 = vmatmul.mubr.f32.gmra.mrb[0].mxu0 %v982
    %v2157 = vpop.f32.mrb[0].mxu0
    %v2158 = vadd.f32 %v2087, %v2157
    %v2159 = vpop.f32.mrb[0].mxu0
    %v2160 = vadd.f32 %v2089, %v2159
    %2161 = vdwg.mxu0
    %2162 = vmatprep.subr.mxu0 %v1375
    %2163 = vmatpush1.msra.mxu0 %v1374
    %2164 = vmatprep.subr.mxu0 %v1381
    %2165 = vmatpush1.msra.mxu0 %v1380
    %2166 = vmatprep.subr.mxu0 %v1387
    %2167 = vmatpush1.msra.mxu0 %v1386
    %2168 = vmatprep.subr.mxu0 %v1393
    %2169 = vmatpush1.msra.mxu0 %v1392
    %2170 = vmatprep.subr.mxu0 %v1399
    %2171 = vmatpush1.msra.mxu0 %v1398
    %2172 = vmatprep.subr.mxu0 %v1405
    %2173 = vmatpush1.msra.mxu0 %v1404
    %2174 = vmatprep.subr.mxu0 %v1411
    %2175 = vmatpush1.msra.mxu0 %v1410
    %2176 = vmatprep.subr.mxu0 %v1417
    %2177 = vmatpush1.msra.mxu0 %v1416
    %2178 = vmatprep.subr.mxu0 %v1423
    %2179 = vmatpush1.msra.mxu0 %v1422
    %2180 = vmatprep.subr.mxu0 %v1429
    %2181 = vmatpush1.msra.mxu0 %v1428
    %2182 = vmatprep.subr.mxu0 %v1435
    %2183 = vmatpush1.msra.mxu0 %v1434
    %2184 = vmatprep.subr.mxu0 %v1441
    %2185 = vmatpush1.msra.mxu0 %v1440
    %2186 = vmatprep.subr.mxu0 %v1447
    %2187 = vmatpush1.msra.mxu0 %v1446
    %2188 = vmatprep.subr.mxu0 %v1453
    %2189 = vmatpush1.msra.mxu0 %v1452
    %2190 = vmatprep.subr.mxu0 %v1459
    %2191 = vmatpush1.msra.mxu0 %v1458
    %2192 = vmatprep.subr.mxu0 %v1465
    %2193 = vmatpush1.msra.mxu0 %v1464
    %2194 = vmatprep.subr.mxu0 %v1471
    %2195 = vmatpush1.msra.mxu0 %v1470
    %2196 = vmatprep.subr.mxu0 %v1477
    %2197 = vmatpush1.msra.mxu0 %v1476
    %2198 = vmatprep.subr.mxu0 %v1483
    %2199 = vmatpush1.msra.mxu0 %v1482
    %2200 = vmatprep.subr.mxu0 %v1489
    %2201 = vmatpush1.msra.mxu0 %v1488
    %2202 = vmatprep.subr.mxu0 %v1495
    %2203 = vmatpush1.msra.mxu0 %v1494
    %2204 = vmatprep.subr.mxu0 %v1501
    %2205 = vmatpush1.msra.mxu0 %v1500
    %2206 = vmatprep.subr.mxu0 %v1507
    %2207 = vmatpush1.msra.mxu0 %v1506
    %2208 = vmatprep.subr.mxu0 %v1513
    %2209 = vmatpush1.msra.mxu0 %v1512
    %2210 = vmatprep.subr.mxu0 %v1519
    %2211 = vmatpush1.msra.mxu0 %v1518
    %2212 = vmatprep.subr.mxu0 %v1525
    %2213 = vmatpush1.msra.mxu0 %v1524
    %2214 = vmatprep.subr.mxu0 %v1531
    %2215 = vmatpush1.msra.mxu0 %v1530
    %2216 = vmatprep.subr.mxu0 %v1537
    %2217 = vmatpush1.msra.mxu0 %v1536
    %2218 = vmatprep.subr.mxu0 %v1543
    %2219 = vmatpush1.msra.mxu0 %v1542
    %2220 = vmatprep.subr.mxu0 %v1549
    %2221 = vmatpush1.msra.mxu0 %v1548
    %2222 = vmatprep.subr.mxu0 %v1555
    %2223 = vmatpush1.msra.mxu0 %v1554
    %2224 = vmatprep.subr.mxu0 %v1561
    %2225 = vmatpush1.msra.mxu0 %v1560
    %2226 = vmatprep.mubr.f32.mxu0 %v985
    %2227 = vmatmul.mubr.f32.gmra.mrb[0].mxu0 %v984
    %v2228 = vpop.f32.mrb[0].mxu0
    %v2229 = vadd.f32 %v2158, %v2228
    %v2230 = vpop.f32.mrb[0].mxu0
    %v2231 = vadd.f32 %v2160, %v2230
    %2232 = vdwg.mxu0
    %v2233 = vmax.f32 %v1803, 0.0
    %v2234 = vmax.f32 %v1805, 0.0
    %v2235 = vmax.f32 %v2016, 0.0
    %v2236 = vmax.f32 %v2018, 0.0
    %v2237 = vmax.f32 %v2229, 0.0
    %v2238 = vmax.f32 %v2231, 0.0
    %v2239 = vld [vmem:[#allocation23] sm:$0xff]
    %v2240 = vld [vmem:[#allocation23 + $0x8] sm:$0xff]
    %v2241 = vld [vmem:[#allocation23 + $0x10] sm:$0xff]
    %v2242 = vld [vmem:[#allocation23 + $0x18] sm:$0xff]
    %v2243 = vld [vmem:[#allocation23 + $0x20] sm:$0xff]
    %v2244 = vld [vmem:[#allocation23 + $0x28] sm:$0xff]
    %v2245 = vld [vmem:[#allocation23 + $0x30] sm:$0xff]
    %v2246 = vld [vmem:[#allocation23 + $0x38] sm:$0xff]
    %v2247 = vld [vmem:[#allocation23 + $0x40] sm:$0xff]
    %v2248 = vld [vmem:[#allocation23 + $0x48] sm:$0xff]
    %v2249 = vld [vmem:[#allocation23 + $0x50] sm:$0xff]
    %v2250 = vld [vmem:[#allocation23 + $0x58] sm:$0xff]
    %v2251 = vld [vmem:[#allocation23 + $0x60] sm:$0xff]
    %v2252 = vld [vmem:[#allocation23 + $0x68] sm:$0xff]
    %v2253 = vld [vmem:[#allocation23 + $0x70] sm:$0xff]
    %v2254 = vld [vmem:[#allocation23 + $0x78] sm:$0xff]
    %v2255 = vld [vmem:[#allocation23 + $0x80] sm:$0xff]
    %v2256 = vld [vmem:[#allocation23 + $0x88] sm:$0xff]
    %v2257 = vld [vmem:[#allocation23 + $0x90] sm:$0xff]
    %v2258 = vld [vmem:[#allocation23 + $0x98] sm:$0xff]
    %v2259 = vld [vmem:[#allocation23 + $0xa0] sm:$0xff]
    %v2260 = vld [vmem:[#allocation23 + $0xa8] sm:$0xff]
    %v2261 = vld [vmem:[#allocation23 + $0xb0] sm:$0xff]
    %v2262 = vld [vmem:[#allocation23 + $0xb8] sm:$0xff]
    %v2263 = vld [vmem:[#allocation23 + $0xc0] sm:$0xff]
    %v2264 = vld [vmem:[#allocation23 + $0xc8] sm:$0xff]
    %v2265 = vld [vmem:[#allocation23 + $0xd0] sm:$0xff]
    %v2266 = vld [vmem:[#allocation23 + $0xd8] sm:$0xff]
    %v2267 = vld [vmem:[#allocation23 + $0xe0] sm:$0xff]
    %v2268 = vld [vmem:[#allocation23 + $0xe8] sm:$0xff]
    %v2269 = vld [vmem:[#allocation23 + $0xf0] sm:$0xff]
    %v2270 = vld [vmem:[#allocation23 + $0xf8] sm:$0xff]
    %v2271 = vld [vmem:[#allocation23 + $0x100] sm:$0xff]
    %v2272 = vld [vmem:[#allocation23 + $0x108] sm:$0xff]
    %v2273 = vld [vmem:[#allocation23 + $0x110] sm:$0xff]
    %v2274 = vld [vmem:[#allocation23 + $0x118] sm:$0xff]
    %v2275 = vld [vmem:[#allocation23 + $0x120] sm:$0xff]
    %v2276 = vld [vmem:[#allocation23 + $0x128] sm:$0xff]
    %v2277 = vld [vmem:[#allocation23 + $0x130] sm:$0xff]
    %v2278 = vld [vmem:[#allocation23 + $0x138] sm:$0xff]
    %v2279 = vld [vmem:[#allocation23 + $0x140] sm:$0xff]
    %v2280 = vld [vmem:[#allocation23 + $0x148] sm:$0xff]
    %v2281 = vld [vmem:[#allocation23 + $0x150] sm:$0xff]
    %v2282 = vld [vmem:[#allocation23 + $0x158] sm:$0xff]
    %v2283 = vld [vmem:[#allocation23 + $0x160] sm:$0xff]
    %v2284 = vld [vmem:[#allocation23 + $0x168] sm:$0xff]
    %v2285 = vld [vmem:[#allocation23 + $0x170] sm:$0xff]
    %v2286 = vld [vmem:[#allocation23 + $0x178] sm:$0xff]
    %v2287 = vld [vmem:[#allocation23 + $0x180] sm:$0xff]
    %v2288 = vld [vmem:[#allocation23 + $0x188] sm:$0xff]
    %v2289 = vld [vmem:[#allocation23 + $0x190] sm:$0xff]
    %v2290 = vld [vmem:[#allocation23 + $0x198] sm:$0xff]
    %v2291 = vld [vmem:[#allocation23 + $0x1a0] sm:$0xff]
    %v2292 = vld [vmem:[#allocation23 + $0x1a8] sm:$0xff]
    %v2293 = vld [vmem:[#allocation23 + $0x1b0] sm:$0xff]
    %v2294 = vld [vmem:[#allocation23 + $0x1b8] sm:$0xff]
    %v2295 = vld [vmem:[#allocation23 + $0x1c0] sm:$0xff]
    %v2296 = vld [vmem:[#allocation23 + $0x1c8] sm:$0xff]
    %v2297 = vld [vmem:[#allocation23 + $0x1d0] sm:$0xff]
    %v2298 = vld [vmem:[#allocation23 + $0x1d8] sm:$0xff]
    %v2299 = vld [vmem:[#allocation23 + $0x1e0] sm:$0xff]
    %v2300 = vld [vmem:[#allocation23 + $0x1e8] sm:$0xff]
    %v2301 = vld [vmem:[#allocation23 + $0x1f0] sm:$0xff]
    %v2302 = vld [vmem:[#allocation23 + $0x1f8] sm:$0xff]
    %v2303 = vld [vmem:[#allocation23 + $0x200] sm:$0xff]
    %v2304 = vld [vmem:[#allocation23 + $0x208] sm:$0xff]
    %v2305 = vld [vmem:[#allocation23 + $0x210] sm:$0xff]
    %v2306 = vld [vmem:[#allocation23 + $0x218] sm:$0xff]
    %v2307 = vld [vmem:[#allocation23 + $0x220] sm:$0xff]
    %v2308 = vld [vmem:[#allocation23 + $0x228] sm:$0xff]
    %v2309 = vld [vmem:[#allocation23 + $0x230] sm:$0xff]
    %v2310 = vld [vmem:[#allocation23 + $0x238] sm:$0xff]
    %v2311 = vld [vmem:[#allocation23 + $0x240] sm:$0xff]
    %v2312 = vld [vmem:[#allocation23 + $0x248] sm:$0xff]
    %v2313 = vld [vmem:[#allocation23 + $0x250] sm:$0xff]
    %v2314 = vld [vmem:[#allocation23 + $0x258] sm:$0xff]
    %v2315 = vld [vmem:[#allocation23 + $0x260] sm:$0xff]
    %v2316 = vld [vmem:[#allocation23 + $0x268] sm:$0xff]
    %v2317 = vld [vmem:[#allocation23 + $0x270] sm:$0xff]
    %v2318 = vld [vmem:[#allocation23 + $0x278] sm:$0xff]
    %v2319 = vld [vmem:[#allocation23 + $0x280] sm:$0xff]
    %v2320 = vld [vmem:[#allocation23 + $0x288] sm:$0xff]
    %v2321 = vld [vmem:[#allocation23 + $0x290] sm:$0xff]
    %v2322 = vld [vmem:[#allocation23 + $0x298] sm:$0xff]
    %v2323 = vld [vmem:[#allocation23 + $0x2a0] sm:$0xff]
    %v2324 = vld [vmem:[#allocation23 + $0x2a8] sm:$0xff]
    %v2325 = vld [vmem:[#allocation23 + $0x2b0] sm:$0xff]
    %v2326 = vld [vmem:[#allocation23 + $0x2b8] sm:$0xff]
    %v2327 = vld [vmem:[#allocation23 + $0x2c0] sm:$0xff]
    %v2328 = vld [vmem:[#allocation23 + $0x2c8] sm:$0xff]
    %v2329 = vld [vmem:[#allocation23 + $0x2d0] sm:$0xff]
    %v2330 = vld [vmem:[#allocation23 + $0x2d8] sm:$0xff]
    %v2331 = vld [vmem:[#allocation23 + $0x2e0] sm:$0xff]
    %v2332 = vld [vmem:[#allocation23 + $0x2e8] sm:$0xff]
    %v2333 = vld [vmem:[#allocation23 + $0x2f0] sm:$0xff]
    %v2334 = vld [vmem:[#allocation23 + $0x2f8] sm:$0xff]
    %v2335 = vld [vmem:[#allocation23 + $0x300] sm:$0xff]
    %v2336 = vld [vmem:[#allocation23 + $0x308] sm:$0xff]
    %v2337 = vld [vmem:[#allocation23 + $0x310] sm:$0xff]
    %v2338 = vld [vmem:[#allocation23 + $0x318] sm:$0xff]
    %v2339 = vld [vmem:[#allocation23 + $0x320] sm:$0xff]
    %v2340 = vld [vmem:[#allocation23 + $0x328] sm:$0xff]
    %v2341 = vld [vmem:[#allocation23 + $0x330] sm:$0xff]
    %v2342 = vld [vmem:[#allocation23 + $0x338] sm:$0xff]
    %v2343 = vld [vmem:[#allocation23 + $0x340] sm:$0xff]
    %v2344 = vld [vmem:[#allocation23 + $0x348] sm:$0xff]
    %v2345 = vld [vmem:[#allocation23 + $0x350] sm:$0xff]
    %v2346 = vld [vmem:[#allocation23 + $0x358] sm:$0xff]
    %v2347 = vld [vmem:[#allocation23 + $0x360] sm:$0xff]
    %v2348 = vld [vmem:[#allocation23 + $0x368] sm:$0xff]
    %v2349 = vld [vmem:[#allocation23 + $0x370] sm:$0xff]
    %v2350 = vld [vmem:[#allocation23 + $0x378] sm:$0xff]
    %v2351 = vld [vmem:[#allocation23 + $0x380] sm:$0xff]
    %v2352 = vld [vmem:[#allocation23 + $0x388] sm:$0xff]
    %v2353 = vld [vmem:[#allocation23 + $0x390] sm:$0xff]
    %v2354 = vld [vmem:[#allocation23 + $0x398] sm:$0xff]
    %v2355 = vld [vmem:[#allocation23 + $0x3a0] sm:$0xff]
    %v2356 = vld [vmem:[#allocation23 + $0x3a8] sm:$0xff]
    %v2357 = vld [vmem:[#allocation23 + $0x3b0] sm:$0xff]
    %v2358 = vld [vmem:[#allocation23 + $0x3b8] sm:$0xff]
    %v2359 = vld [vmem:[#allocation23 + $0x3c0] sm:$0xff]
    %v2360 = vld [vmem:[#allocation23 + $0x3c8] sm:$0xff]
    %v2361 = vld [vmem:[#allocation23 + $0x3d0] sm:$0xff]
    %v2362 = vld [vmem:[#allocation23 + $0x3d8] sm:$0xff]
    %v2363 = vld [vmem:[#allocation23 + $0x3e0] sm:$0xff]
    %v2364 = vld [vmem:[#allocation23 + $0x3e8] sm:$0xff]
    %v2365 = vld [vmem:[#allocation23 + $0x3f0] sm:$0xff]
    %v2366 = vld [vmem:[#allocation23 + $0x3f8] sm:$0xff]
    %v2367 = vld [vmem:[#allocation23 + $0x400] sm:$0xff]
    %v2368 = vld [vmem:[#allocation23 + $0x408] sm:$0xff]
    %v2369 = vld [vmem:[#allocation23 + $0x410] sm:$0xff]
    %v2370 = vld [vmem:[#allocation23 + $0x418] sm:$0xff]
    %v2371 = vld [vmem:[#allocation23 + $0x420] sm:$0xff]
    %v2372 = vld [vmem:[#allocation23 + $0x428] sm:$0xff]
    %v2373 = vld [vmem:[#allocation23 + $0x430] sm:$0xff]
    %v2374 = vld [vmem:[#allocation23 + $0x438] sm:$0xff]
    %v2375 = vld [vmem:[#allocation23 + $0x440] sm:$0xff]
    %v2376 = vld [vmem:[#allocation23 + $0x448] sm:$0xff]
    %v2377 = vld [vmem:[#allocation23 + $0x450] sm:$0xff]
    %v2378 = vld [vmem:[#allocation23 + $0x458] sm:$0xff]
    %v2379 = vld [vmem:[#allocation23 + $0x460] sm:$0xff]
    %v2380 = vld [vmem:[#allocation23 + $0x468] sm:$0xff]
    %v2381 = vld [vmem:[#allocation23 + $0x470] sm:$0xff]
    %v2382 = vld [vmem:[#allocation23 + $0x478] sm:$0xff]
    %v2383 = vld [vmem:[#allocation23 + $0x480] sm:$0xff]
    %v2384 = vld [vmem:[#allocation23 + $0x488] sm:$0xff]
    %v2385 = vld [vmem:[#allocation23 + $0x490] sm:$0xff]
    %v2386 = vld [vmem:[#allocation23 + $0x498] sm:$0xff]
    %v2387 = vld [vmem:[#allocation23 + $0x4a0] sm:$0xff]
    %v2388 = vld [vmem:[#allocation23 + $0x4a8] sm:$0xff]
    %v2389 = vld [vmem:[#allocation23 + $0x4b0] sm:$0xff]
    %v2390 = vld [vmem:[#allocation23 + $0x4b8] sm:$0xff]
    %v2391 = vld [vmem:[#allocation23 + $0x4c0] sm:$0xff]
    %v2392 = vld [vmem:[#allocation23 + $0x4c8] sm:$0xff]
    %v2393 = vld [vmem:[#allocation23 + $0x4d0] sm:$0xff]
    %v2394 = vld [vmem:[#allocation23 + $0x4d8] sm:$0xff]
    %v2395 = vld [vmem:[#allocation23 + $0x4e0] sm:$0xff]
    %v2396 = vld [vmem:[#allocation23 + $0x4e8] sm:$0xff]
    %v2397 = vld [vmem:[#allocation23 + $0x4f0] sm:$0xff]
    %v2398 = vld [vmem:[#allocation23 + $0x4f8] sm:$0xff]
    %v2399 = vld [vmem:[#allocation23 + $0x500] sm:$0xff]
    %v2400 = vld [vmem:[#allocation23 + $0x508] sm:$0xff]
    %v2401 = vld [vmem:[#allocation23 + $0x510] sm:$0xff]
    %v2402 = vld [vmem:[#allocation23 + $0x518] sm:$0xff]
    %v2403 = vld [vmem:[#allocation23 + $0x520] sm:$0xff]
    %v2404 = vld [vmem:[#allocation23 + $0x528] sm:$0xff]
    %v2405 = vld [vmem:[#allocation23 + $0x530] sm:$0xff]
    %v2406 = vld [vmem:[#allocation23 + $0x538] sm:$0xff]
    %v2407 = vld [vmem:[#allocation23 + $0x540] sm:$0xff]
    %v2408 = vld [vmem:[#allocation23 + $0x548] sm:$0xff]
    %v2409 = vld [vmem:[#allocation23 + $0x550] sm:$0xff]
    %v2410 = vld [vmem:[#allocation23 + $0x558] sm:$0xff]
    %v2411 = vld [vmem:[#allocation23 + $0x560] sm:$0xff]
    %v2412 = vld [vmem:[#allocation23 + $0x568] sm:$0xff]
    %v2413 = vld [vmem:[#allocation23 + $0x570] sm:$0xff]
    %v2414 = vld [vmem:[#allocation23 + $0x578] sm:$0xff]
    %v2415 = vld [vmem:[#allocation23 + $0x580] sm:$0xff]
    %v2416 = vld [vmem:[#allocation23 + $0x588] sm:$0xff]
    %v2417 = vld [vmem:[#allocation23 + $0x590] sm:$0xff]
    %v2418 = vld [vmem:[#allocation23 + $0x598] sm:$0xff]
    %v2419 = vld [vmem:[#allocation23 + $0x5a0] sm:$0xff]
    %v2420 = vld [vmem:[#allocation23 + $0x5a8] sm:$0xff]
    %v2421 = vld [vmem:[#allocation23 + $0x5b0] sm:$0xff]
    %v2422 = vld [vmem:[#allocation23 + $0x5b8] sm:$0xff]
    %v2423 = vld [vmem:[#allocation23 + $0x5c0] sm:$0xff]
    %v2424 = vld [vmem:[#allocation23 + $0x5c8] sm:$0xff]
    %v2425 = vld [vmem:[#allocation23 + $0x5d0] sm:$0xff]
    %v2426 = vld [vmem:[#allocation23 + $0x5d8] sm:$0xff]
    %v2427 = vld [vmem:[#allocation23 + $0x5e0] sm:$0xff]
    %v2428 = vld [vmem:[#allocation23 + $0x5e8] sm:$0xff]
    %v2429 = vld [vmem:[#allocation23 + $0x5f0] sm:$0xff]
    %v2430 = vld [vmem:[#allocation23 + $0x5f8] sm:$0xff]
    %v2431 = vld [vmem:[#allocation23 + $0x600] sm:$0xff]
    %v2432 = vld [vmem:[#allocation23 + $0x608] sm:$0xff]
    %v2433 = vld [vmem:[#allocation23 + $0x610] sm:$0xff]
    %v2434 = vld [vmem:[#allocation23 + $0x618] sm:$0xff]
    %v2435 = vld [vmem:[#allocation23 + $0x620] sm:$0xff]
    %v2436 = vld [vmem:[#allocation23 + $0x628] sm:$0xff]
    %v2437 = vld [vmem:[#allocation23 + $0x630] sm:$0xff]
    %v2438 = vld [vmem:[#allocation23 + $0x638] sm:$0xff]
    %v2439 = vld [vmem:[#allocation23 + $0x640] sm:$0xff]
    %v2440 = vld [vmem:[#allocation23 + $0x648] sm:$0xff]
    %v2441 = vld [vmem:[#allocation23 + $0x650] sm:$0xff]
    %v2442 = vld [vmem:[#allocation23 + $0x658] sm:$0xff]
    %v2443 = vld [vmem:[#allocation23 + $0x660] sm:$0xff]
    %v2444 = vld [vmem:[#allocation23 + $0x668] sm:$0xff]
    %v2445 = vld [vmem:[#allocation23 + $0x670] sm:$0xff]
    %v2446 = vld [vmem:[#allocation23 + $0x678] sm:$0xff]
    %v2447 = vld [vmem:[#allocation23 + $0x680] sm:$0xff]
    %v2448 = vld [vmem:[#allocation23 + $0x688] sm:$0xff]
    %v2449 = vld [vmem:[#allocation23 + $0x690] sm:$0xff]
    %v2450 = vld [vmem:[#allocation23 + $0x698] sm:$0xff]
    %v2451 = vld [vmem:[#allocation23 + $0x6a0] sm:$0xff]
    %v2452 = vld [vmem:[#allocation23 + $0x6a8] sm:$0xff]
    %v2453 = vld [vmem:[#allocation23 + $0x6b0] sm:$0xff]
    %v2454 = vld [vmem:[#allocation23 + $0x6b8] sm:$0xff]
    %v2455 = vld [vmem:[#allocation23 + $0x6c0] sm:$0xff]
    %v2456 = vld [vmem:[#allocation23 + $0x6c8] sm:$0xff]
    %v2457 = vld [vmem:[#allocation23 + $0x6d0] sm:$0xff]
    %v2458 = vld [vmem:[#allocation23 + $0x6d8] sm:$0xff]
    %v2459 = vld [vmem:[#allocation23 + $0x6e0] sm:$0xff]
    %v2460 = vld [vmem:[#allocation23 + $0x6e8] sm:$0xff]
    %v2461 = vld [vmem:[#allocation23 + $0x6f0] sm:$0xff]
    %v2462 = vld [vmem:[#allocation23 + $0x6f8] sm:$0xff]
    %v2463 = vld [vmem:[#allocation23 + $0x700] sm:$0xff]
    %v2464 = vld [vmem:[#allocation23 + $0x708] sm:$0xff]
    %v2465 = vld [vmem:[#allocation23 + $0x710] sm:$0xff]
    %v2466 = vld [vmem:[#allocation23 + $0x718] sm:$0xff]
    %v2467 = vld [vmem:[#allocation23 + $0x720] sm:$0xff]
    %v2468 = vld [vmem:[#allocation23 + $0x728] sm:$0xff]
    %v2469 = vld [vmem:[#allocation23 + $0x730] sm:$0xff]
    %v2470 = vld [vmem:[#allocation23 + $0x738] sm:$0xff]
    %v2471 = vld [vmem:[#allocation23 + $0x740] sm:$0xff]
    %v2472 = vld [vmem:[#allocation23 + $0x748] sm:$0xff]
    %v2473 = vld [vmem:[#allocation23 + $0x750] sm:$0xff]
    %v2474 = vld [vmem:[#allocation23 + $0x758] sm:$0xff]
    %v2475 = vld [vmem:[#allocation23 + $0x760] sm:$0xff]
    %v2476 = vld [vmem:[#allocation23 + $0x768] sm:$0xff]
    %v2477 = vld [vmem:[#allocation23 + $0x770] sm:$0xff]
    %v2478 = vld [vmem:[#allocation23 + $0x778] sm:$0xff]
    %v2479 = vld [vmem:[#allocation23 + $0x780] sm:$0xff]
    %v2480 = vld [vmem:[#allocation23 + $0x788] sm:$0xff]
    %v2481 = vld [vmem:[#allocation23 + $0x790] sm:$0xff]
    %v2482 = vld [vmem:[#allocation23 + $0x798] sm:$0xff]
    %v2483 = vld [vmem:[#allocation23 + $0x7a0] sm:$0xff]
    %v2484 = vld [vmem:[#allocation23 + $0x7a8] sm:$0xff]
    %v2485 = vld [vmem:[#allocation23 + $0x7b0] sm:$0xff]
    %v2486 = vld [vmem:[#allocation23 + $0x7b8] sm:$0xff]
    %v2487 = vld [vmem:[#allocation23 + $0x7c0] sm:$0xff]
    %v2488 = vld [vmem:[#allocation23 + $0x7c8] sm:$0xff]
    %v2489 = vld [vmem:[#allocation23 + $0x7d0] sm:$0xff]
    %v2490 = vld [vmem:[#allocation23 + $0x7d8] sm:$0xff]
    %v2491 = vld [vmem:[#allocation23 + $0x7e0] sm:$0xff]
    %v2492 = vld [vmem:[#allocation23 + $0x7e8] sm:$0xff]
    %v2493 = vld [vmem:[#allocation23 + $0x7f0] sm:$0xff]
    %v2494 = vld [vmem:[#allocation23 + $0x7f8] sm:$0xff]
    %v2495 = vld [vmem:[#allocation23 + $0x800] sm:$0xff]
    %v2496 = vld [vmem:[#allocation23 + $0x808] sm:$0xff]
    %v2497 = vld [vmem:[#allocation23 + $0x810] sm:$0xff]
    %v2498 = vld [vmem:[#allocation23 + $0x818] sm:$0xff]
    %v2499 = vld [vmem:[#allocation23 + $0x820] sm:$0xff]
    %v2500 = vld [vmem:[#allocation23 + $0x828] sm:$0xff]
    %v2501 = vld [vmem:[#allocation23 + $0x830] sm:$0xff]
    %v2502 = vld [vmem:[#allocation23 + $0x838] sm:$0xff]
    %v2503 = vld [vmem:[#allocation23 + $0x840] sm:$0xff]
    %v2504 = vld [vmem:[#allocation23 + $0x848] sm:$0xff]
    %v2505 = vld [vmem:[#allocation23 + $0x850] sm:$0xff]
    %v2506 = vld [vmem:[#allocation23 + $0x858] sm:$0xff]
    %v2507 = vld [vmem:[#allocation23 + $0x860] sm:$0xff]
    %v2508 = vld [vmem:[#allocation23 + $0x868] sm:$0xff]
    %v2509 = vld [vmem:[#allocation23 + $0x870] sm:$0xff]
    %v2510 = vld [vmem:[#allocation23 + $0x878] sm:$0xff]
    %v2511 = vld [vmem:[#allocation23 + $0x880] sm:$0xff]
    %v2512 = vld [vmem:[#allocation23 + $0x888] sm:$0xff]
    %v2513 = vld [vmem:[#allocation23 + $0x890] sm:$0xff]
    %v2514 = vld [vmem:[#allocation23 + $0x898] sm:$0xff]
    %v2515 = vld [vmem:[#allocation23 + $0x8a0] sm:$0xff]
    %v2516 = vld [vmem:[#allocation23 + $0x8a8] sm:$0xff]
    %v2517 = vld [vmem:[#allocation23 + $0x8b0] sm:$0xff]
    %v2518 = vld [vmem:[#allocation23 + $0x8b8] sm:$0xff]
    %v2519 = vld [vmem:[#allocation23 + $0x8c0] sm:$0xff]
    %v2520 = vld [vmem:[#allocation23 + $0x8c8] sm:$0xff]
    %v2521 = vld [vmem:[#allocation23 + $0x8d0] sm:$0xff]
    %v2522 = vld [vmem:[#allocation23 + $0x8d8] sm:$0xff]
    %v2523 = vld [vmem:[#allocation23 + $0x8e0] sm:$0xff]
    %v2524 = vld [vmem:[#allocation23 + $0x8e8] sm:$0xff]
    %v2525 = vld [vmem:[#allocation23 + $0x8f0] sm:$0xff]
    %v2526 = vld [vmem:[#allocation23 + $0x8f8] sm:$0xff]
    %v2527 = vld [vmem:[#allocation23 + $0x900] sm:$0xff]
    %v2528 = vld [vmem:[#allocation23 + $0x908] sm:$0xff]
    %v2529 = vld [vmem:[#allocation23 + $0x910] sm:$0xff]
    %v2530 = vld [vmem:[#allocation23 + $0x918] sm:$0xff]
    %v2531 = vld [vmem:[#allocation23 + $0x920] sm:$0xff]
    %v2532 = vld [vmem:[#allocation23 + $0x928] sm:$0xff]
    %v2533 = vld [vmem:[#allocation23 + $0x930] sm:$0xff]
    %v2534 = vld [vmem:[#allocation23 + $0x938] sm:$0xff]
    %v2535 = vld [vmem:[#allocation23 + $0x940] sm:$0xff]
    %v2536 = vld [vmem:[#allocation23 + $0x948] sm:$0xff]
    %v2537 = vld [vmem:[#allocation23 + $0x950] sm:$0xff]
    %v2538 = vld [vmem:[#allocation23 + $0x958] sm:$0xff]
    %v2539 = vld [vmem:[#allocation23 + $0x960] sm:$0xff]
    %v2540 = vld [vmem:[#allocation23 + $0x968] sm:$0xff]
    %v2541 = vld [vmem:[#allocation23 + $0x970] sm:$0xff]
    %v2542 = vld [vmem:[#allocation23 + $0x978] sm:$0xff]
    %v2543 = vld [vmem:[#allocation23 + $0x980] sm:$0xff]
    %v2544 = vld [vmem:[#allocation23 + $0x988] sm:$0xff]
    %v2545 = vld [vmem:[#allocation23 + $0x990] sm:$0xff]
    %v2546 = vld [vmem:[#allocation23 + $0x998] sm:$0xff]
    %v2547 = vld [vmem:[#allocation23 + $0x9a0] sm:$0xff]
    %v2548 = vld [vmem:[#allocation23 + $0x9a8] sm:$0xff]
    %v2549 = vld [vmem:[#allocation23 + $0x9b0] sm:$0xff]
    %v2550 = vld [vmem:[#allocation23 + $0x9b8] sm:$0xff]
    %v2551 = vld [vmem:[#allocation23 + $0x9c0] sm:$0xff]
    %v2552 = vld [vmem:[#allocation23 + $0x9c8] sm:$0xff]
    %v2553 = vld [vmem:[#allocation23 + $0x9d0] sm:$0xff]
    %v2554 = vld [vmem:[#allocation23 + $0x9d8] sm:$0xff]
    %v2555 = vld [vmem:[#allocation23 + $0x9e0] sm:$0xff]
    %v2556 = vld [vmem:[#allocation23 + $0x9e8] sm:$0xff]
    %v2557 = vld [vmem:[#allocation23 + $0x9f0] sm:$0xff]
    %v2558 = vld [vmem:[#allocation23 + $0x9f8] sm:$0xff]
    %v2559 = vld [vmem:[#allocation23 + $0xa00] sm:$0xff]
    %v2560 = vld [vmem:[#allocation23 + $0xa08] sm:$0xff]
    %v2561 = vld [vmem:[#allocation23 + $0xa10] sm:$0xff]
    %v2562 = vld [vmem:[#allocation23 + $0xa18] sm:$0xff]
    %v2563 = vld [vmem:[#allocation23 + $0xa20] sm:$0xff]
    %v2564 = vld [vmem:[#allocation23 + $0xa28] sm:$0xff]
    %v2565 = vld [vmem:[#allocation23 + $0xa30] sm:$0xff]
    %v2566 = vld [vmem:[#allocation23 + $0xa38] sm:$0xff]
    %v2567 = vld [vmem:[#allocation23 + $0xa40] sm:$0xff]
    %v2568 = vld [vmem:[#allocation23 + $0xa48] sm:$0xff]
    %v2569 = vld [vmem:[#allocation23 + $0xa50] sm:$0xff]
    %v2570 = vld [vmem:[#allocation23 + $0xa58] sm:$0xff]
    %v2571 = vld [vmem:[#allocation23 + $0xa60] sm:$0xff]
    %v2572 = vld [vmem:[#allocation23 + $0xa68] sm:$0xff]
    %v2573 = vld [vmem:[#allocation23 + $0xa70] sm:$0xff]
    %v2574 = vld [vmem:[#allocation23 + $0xa78] sm:$0xff]
    %v2575 = vld [vmem:[#allocation23 + $0xa80] sm:$0xff]
    %v2576 = vld [vmem:[#allocation23 + $0xa88] sm:$0xff]
    %v2577 = vld [vmem:[#allocation23 + $0xa90] sm:$0xff]
    %v2578 = vld [vmem:[#allocation23 + $0xa98] sm:$0xff]
    %v2579 = vld [vmem:[#allocation23 + $0xaa0] sm:$0xff]
    %v2580 = vld [vmem:[#allocation23 + $0xaa8] sm:$0xff]
    %v2581 = vld [vmem:[#allocation23 + $0xab0] sm:$0xff]
    %v2582 = vld [vmem:[#allocation23 + $0xab8] sm:$0xff]
    %v2583 = vld [vmem:[#allocation23 + $0xac0] sm:$0xff]
    %v2584 = vld [vmem:[#allocation23 + $0xac8] sm:$0xff]
    %v2585 = vld [vmem:[#allocation23 + $0xad0] sm:$0xff]
    %v2586 = vld [vmem:[#allocation23 + $0xad8] sm:$0xff]
    %v2587 = vld [vmem:[#allocation23 + $0xae0] sm:$0xff]
    %v2588 = vld [vmem:[#allocation23 + $0xae8] sm:$0xff]
    %v2589 = vld [vmem:[#allocation23 + $0xaf0] sm:$0xff]
    %v2590 = vld [vmem:[#allocation23 + $0xaf8] sm:$0xff]
    %v2591 = vld [vmem:[#allocation23 + $0xb00] sm:$0xff]
    %v2592 = vld [vmem:[#allocation23 + $0xb08] sm:$0xff]
    %v2593 = vld [vmem:[#allocation23 + $0xb10] sm:$0xff]
    %v2594 = vld [vmem:[#allocation23 + $0xb18] sm:$0xff]
    %v2595 = vld [vmem:[#allocation23 + $0xb20] sm:$0xff]
    %v2596 = vld [vmem:[#allocation23 + $0xb28] sm:$0xff]
    %v2597 = vld [vmem:[#allocation23 + $0xb30] sm:$0xff]
    %v2598 = vld [vmem:[#allocation23 + $0xb38] sm:$0xff]
    %v2599 = vld [vmem:[#allocation23 + $0xb40] sm:$0xff]
    %v2600 = vld [vmem:[#allocation23 + $0xb48] sm:$0xff]
    %v2601 = vld [vmem:[#allocation23 + $0xb50] sm:$0xff]
    %v2602 = vld [vmem:[#allocation23 + $0xb58] sm:$0xff]
    %v2603 = vld [vmem:[#allocation23 + $0xb60] sm:$0xff]
    %v2604 = vld [vmem:[#allocation23 + $0xb68] sm:$0xff]
    %v2605 = vld [vmem:[#allocation23 + $0xb70] sm:$0xff]
    %v2606 = vld [vmem:[#allocation23 + $0xb78] sm:$0xff]
    %v2607 = vld [vmem:[#allocation23 + $0xb80] sm:$0xff]
    %v2608 = vld [vmem:[#allocation23 + $0xb88] sm:$0xff]
    %v2609 = vld [vmem:[#allocation23 + $0xb90] sm:$0xff]
    %v2610 = vld [vmem:[#allocation23 + $0xb98] sm:$0xff]
    %v2611 = vld [vmem:[#allocation23 + $0xba0] sm:$0xff]
    %v2612 = vld [vmem:[#allocation23 + $0xba8] sm:$0xff]
    %v2613 = vld [vmem:[#allocation23 + $0xbb0] sm:$0xff]
    %v2614 = vld [vmem:[#allocation23 + $0xbb8] sm:$0xff]
    %v2615 = vld [vmem:[#allocation23 + $0xbc0] sm:$0xff]
    %v2616 = vld [vmem:[#allocation23 + $0xbc8] sm:$0xff]
    %v2617 = vld [vmem:[#allocation23 + $0xbd0] sm:$0xff]
    %v2618 = vld [vmem:[#allocation23 + $0xbd8] sm:$0xff]
    %v2619 = vld [vmem:[#allocation23 + $0xbe0] sm:$0xff]
    %v2620 = vld [vmem:[#allocation23 + $0xbe8] sm:$0xff]
    %v2621 = vld [vmem:[#allocation23 + $0xbf0] sm:$0xff]
    %v2622 = vld [vmem:[#allocation23 + $0xbf8] sm:$0xff]
    %v2623 = vld [vmem:[#allocation23 + $0xc00] sm:$0xff]
    %v2624 = vld [vmem:[#allocation23 + $0xc08] sm:$0xff]
    %v2625 = vld [vmem:[#allocation23 + $0xc10] sm:$0xff]
    %v2626 = vld [vmem:[#allocation23 + $0xc18] sm:$0xff]
    %v2627 = vld [vmem:[#allocation23 + $0xc20] sm:$0xff]
    %v2628 = vld [vmem:[#allocation23 + $0xc28] sm:$0xff]
    %v2629 = vld [vmem:[#allocation23 + $0xc30] sm:$0xff]
    %v2630 = vld [vmem:[#allocation23 + $0xc38] sm:$0xff]
    %v2631 = vld [vmem:[#allocation23 + $0xc40] sm:$0xff]
    %v2632 = vld [vmem:[#allocation23 + $0xc48] sm:$0xff]
    %v2633 = vld [vmem:[#allocation23 + $0xc50] sm:$0xff]
    %v2634 = vld [vmem:[#allocation23 + $0xc58] sm:$0xff]
    %v2635 = vld [vmem:[#allocation23 + $0xc60] sm:$0xff]
    %v2636 = vld [vmem:[#allocation23 + $0xc68] sm:$0xff]
    %v2637 = vld [vmem:[#allocation23 + $0xc70] sm:$0xff]
    %v2638 = vld [vmem:[#allocation23 + $0xc78] sm:$0xff]
    %v2639 = vld [vmem:[#allocation23 + $0xc80] sm:$0xff]
    %v2640 = vld [vmem:[#allocation23 + $0xc88] sm:$0xff]
    %v2641 = vld [vmem:[#allocation23 + $0xc90] sm:$0xff]
    %v2642 = vld [vmem:[#allocation23 + $0xc98] sm:$0xff]
    %v2643 = vld [vmem:[#allocation23 + $0xca0] sm:$0xff]
    %v2644 = vld [vmem:[#allocation23 + $0xca8] sm:$0xff]
    %v2645 = vld [vmem:[#allocation23 + $0xcb0] sm:$0xff]
    %v2646 = vld [vmem:[#allocation23 + $0xcb8] sm:$0xff]
    %v2647 = vld [vmem:[#allocation23 + $0xcc0] sm:$0xff]
    %v2648 = vld [vmem:[#allocation23 + $0xcc8] sm:$0xff]
    %v2649 = vld [vmem:[#allocation23 + $0xcd0] sm:$0xff]
    %v2650 = vld [vmem:[#allocation23 + $0xcd8] sm:$0xff]
    %v2651 = vld [vmem:[#allocation23 + $0xce0] sm:$0xff]
    %v2652 = vld [vmem:[#allocation23 + $0xce8] sm:$0xff]
    %v2653 = vld [vmem:[#allocation23 + $0xcf0] sm:$0xff]
    %v2654 = vld [vmem:[#allocation23 + $0xcf8] sm:$0xff]
    %v2655 = vld [vmem:[#allocation23 + $0xd00] sm:$0xff]
    %v2656 = vld [vmem:[#allocation23 + $0xd08] sm:$0xff]
    %v2657 = vld [vmem:[#allocation23 + $0xd10] sm:$0xff]
    %v2658 = vld [vmem:[#allocation23 + $0xd18] sm:$0xff]
    %v2659 = vld [vmem:[#allocation23 + $0xd20] sm:$0xff]
    %v2660 = vld [vmem:[#allocation23 + $0xd28] sm:$0xff]
    %v2661 = vld [vmem:[#allocation23 + $0xd30] sm:$0xff]
    %v2662 = vld [vmem:[#allocation23 + $0xd38] sm:$0xff]
    %v2663 = vld [vmem:[#allocation23 + $0xd40] sm:$0xff]
    %v2664 = vld [vmem:[#allocation23 + $0xd48] sm:$0xff]
    %v2665 = vld [vmem:[#allocation23 + $0xd50] sm:$0xff]
    %v2666 = vld [vmem:[#allocation23 + $0xd58] sm:$0xff]
    %v2667 = vld [vmem:[#allocation23 + $0xd60] sm:$0xff]
    %v2668 = vld [vmem:[#allocation23 + $0xd68] sm:$0xff]
    %v2669 = vld [vmem:[#allocation23 + $0xd70] sm:$0xff]
    %v2670 = vld [vmem:[#allocation23 + $0xd78] sm:$0xff]
    %v2671 = vld [vmem:[#allocation23 + $0xd80] sm:$0xff]
    %v2672 = vld [vmem:[#allocation23 + $0xd88] sm:$0xff]
    %v2673 = vld [vmem:[#allocation23 + $0xd90] sm:$0xff]
    %v2674 = vld [vmem:[#allocation23 + $0xd98] sm:$0xff]
    %v2675 = vld [vmem:[#allocation23 + $0xda0] sm:$0xff]
    %v2676 = vld [vmem:[#allocation23 + $0xda8] sm:$0xff]
    %v2677 = vld [vmem:[#allocation23 + $0xdb0] sm:$0xff]
    %v2678 = vld [vmem:[#allocation23 + $0xdb8] sm:$0xff]
    %v2679 = vld [vmem:[#allocation23 + $0xdc0] sm:$0xff]
    %v2680 = vld [vmem:[#allocation23 + $0xdc8] sm:$0xff]
    %v2681 = vld [vmem:[#allocation23 + $0xdd0] sm:$0xff]
    %v2682 = vld [vmem:[#allocation23 + $0xdd8] sm:$0xff]
    %v2683 = vld [vmem:[#allocation23 + $0xde0] sm:$0xff]
    %v2684 = vld [vmem:[#allocation23 + $0xde8] sm:$0xff]
    %v2685 = vld [vmem:[#allocation23 + $0xdf0] sm:$0xff]
    %v2686 = vld [vmem:[#allocation23 + $0xdf8] sm:$0xff]
    %v2687 = vld [vmem:[#allocation23 + $0xe00] sm:$0xff]
    %v2688 = vld [vmem:[#allocation23 + $0xe08] sm:$0xff]
    %v2689 = vld [vmem:[#allocation23 + $0xe10] sm:$0xff]
    %v2690 = vld [vmem:[#allocation23 + $0xe18] sm:$0xff]
    %v2691 = vld [vmem:[#allocation23 + $0xe20] sm:$0xff]
    %v2692 = vld [vmem:[#allocation23 + $0xe28] sm:$0xff]
    %v2693 = vld [vmem:[#allocation23 + $0xe30] sm:$0xff]
    %v2694 = vld [vmem:[#allocation23 + $0xe38] sm:$0xff]
    %v2695 = vld [vmem:[#allocation23 + $0xe40] sm:$0xff]
    %v2696 = vld [vmem:[#allocation23 + $0xe48] sm:$0xff]
    %v2697 = vld [vmem:[#allocation23 + $0xe50] sm:$0xff]
    %v2698 = vld [vmem:[#allocation23 + $0xe58] sm:$0xff]
    %v2699 = vld [vmem:[#allocation23 + $0xe60] sm:$0xff]
    %v2700 = vld [vmem:[#allocation23 + $0xe68] sm:$0xff]
    %v2701 = vld [vmem:[#allocation23 + $0xe70] sm:$0xff]
    %v2702 = vld [vmem:[#allocation23 + $0xe78] sm:$0xff]
    %v2703 = vld [vmem:[#allocation23 + $0xe80] sm:$0xff]
    %v2704 = vld [vmem:[#allocation23 + $0xe88] sm:$0xff]
    %v2705 = vld [vmem:[#allocation23 + $0xe90] sm:$0xff]
    %v2706 = vld [vmem:[#allocation23 + $0xe98] sm:$0xff]
    %v2707 = vld [vmem:[#allocation23 + $0xea0] sm:$0xff]
    %v2708 = vld [vmem:[#allocation23 + $0xea8] sm:$0xff]
    %v2709 = vld [vmem:[#allocation23 + $0xeb0] sm:$0xff]
    %v2710 = vld [vmem:[#allocation23 + $0xeb8] sm:$0xff]
    %v2711 = vld [vmem:[#allocation23 + $0xec0] sm:$0xff]
    %v2712 = vld [vmem:[#allocation23 + $0xec8] sm:$0xff]
    %v2713 = vld [vmem:[#allocation23 + $0xed0] sm:$0xff]
    %v2714 = vld [vmem:[#allocation23 + $0xed8] sm:$0xff]
    %v2715 = vld [vmem:[#allocation23 + $0xee0] sm:$0xff]
    %v2716 = vld [vmem:[#allocation23 + $0xee8] sm:$0xff]
    %v2717 = vld [vmem:[#allocation23 + $0xef0] sm:$0xff]
    %v2718 = vld [vmem:[#allocation23 + $0xef8] sm:$0xff]
    %v2719 = vld [vmem:[#allocation23 + $0xf00] sm:$0xff]
    %v2720 = vld [vmem:[#allocation23 + $0xf08] sm:$0xff]
    %v2721 = vld [vmem:[#allocation23 + $0xf10] sm:$0xff]
    %v2722 = vld [vmem:[#allocation23 + $0xf18] sm:$0xff]
    %v2723 = vld [vmem:[#allocation23 + $0xf20] sm:$0xff]
    %v2724 = vld [vmem:[#allocation23 + $0xf28] sm:$0xff]
    %v2725 = vld [vmem:[#allocation23 + $0xf30] sm:$0xff]
    %v2726 = vld [vmem:[#allocation23 + $0xf38] sm:$0xff]
    %v2727 = vld [vmem:[#allocation23 + $0xf40] sm:$0xff]
    %v2728 = vld [vmem:[#allocation23 + $0xf48] sm:$0xff]
    %v2729 = vld [vmem:[#allocation23 + $0xf50] sm:$0xff]
    %v2730 = vld [vmem:[#allocation23 + $0xf58] sm:$0xff]
    %v2731 = vld [vmem:[#allocation23 + $0xf60] sm:$0xff]
    %v2732 = vld [vmem:[#allocation23 + $0xf68] sm:$0xff]
    %v2733 = vld [vmem:[#allocation23 + $0xf70] sm:$0xff]
    %v2734 = vld [vmem:[#allocation23 + $0xf78] sm:$0xff]
    %v2735 = vld [vmem:[#allocation23 + $0xf80] sm:$0xff]
    %v2736 = vld [vmem:[#allocation23 + $0xf88] sm:$0xff]
    %v2737 = vld [vmem:[#allocation23 + $0xf90] sm:$0xff]
    %v2738 = vld [vmem:[#allocation23 + $0xf98] sm:$0xff]
    %v2739 = vld [vmem:[#allocation23 + $0xfa0] sm:$0xff]
    %v2740 = vld [vmem:[#allocation23 + $0xfa8] sm:$0xff]
    %v2741 = vld [vmem:[#allocation23 + $0xfb0] sm:$0xff]
    %v2742 = vld [vmem:[#allocation23 + $0xfb8] sm:$0xff]
    %v2743 = vld [vmem:[#allocation23 + $0xfc0] sm:$0xff]
    %v2744 = vld [vmem:[#allocation23 + $0xfc8] sm:$0xff]
    %v2745 = vld [vmem:[#allocation23 + $0xfd0] sm:$0xff]
    %v2746 = vld [vmem:[#allocation23 + $0xfd8] sm:$0xff]
    %v2747 = vld [vmem:[#allocation23 + $0xfe0] sm:$0xff]
    %v2748 = vld [vmem:[#allocation23 + $0xfe8] sm:$0xff]
    %v2749 = vld [vmem:[#allocation23 + $0xff0] sm:$0xff]
    %v2750 = vld [vmem:[#allocation23 + $0xff8] sm:$0xff]
    %v2751 = vld [vmem:[#allocation23 + $0x1000] sm:$0xff]
    %v2752 = vld [vmem:[#allocation23 + $0x1008] sm:$0xff]
    %v2753 = vld [vmem:[#allocation23 + $0x1010] sm:$0xff]
    %v2754 = vld [vmem:[#allocation23 + $0x1018] sm:$0xff]
    %v2755 = vld [vmem:[#allocation23 + $0x1020] sm:$0xff]
    %v2756 = vld [vmem:[#allocation23 + $0x1028] sm:$0xff]
    %v2757 = vld [vmem:[#allocation23 + $0x1030] sm:$0xff]
    %v2758 = vld [vmem:[#allocation23 + $0x1038] sm:$0xff]
    %v2759 = vld [vmem:[#allocation23 + $0x1040] sm:$0xff]
    %v2760 = vld [vmem:[#allocation23 + $0x1048] sm:$0xff]
    %v2761 = vld [vmem:[#allocation23 + $0x1050] sm:$0xff]
    %v2762 = vld [vmem:[#allocation23 + $0x1058] sm:$0xff]
    %v2763 = vld [vmem:[#allocation23 + $0x1060] sm:$0xff]
    %v2764 = vld [vmem:[#allocation23 + $0x1068] sm:$0xff]
    %v2765 = vld [vmem:[#allocation23 + $0x1070] sm:$0xff]
    %v2766 = vld [vmem:[#allocation23 + $0x1078] sm:$0xff]
    %v2767 = vld [vmem:[#allocation23 + $0x1080] sm:$0xff]
    %v2768 = vld [vmem:[#allocation23 + $0x1088] sm:$0xff]
    %v2769 = vld [vmem:[#allocation23 + $0x1090] sm:$0xff]
    %v2770 = vld [vmem:[#allocation23 + $0x1098] sm:$0xff]
    %v2771 = vld [vmem:[#allocation23 + $0x10a0] sm:$0xff]
    %v2772 = vld [vmem:[#allocation23 + $0x10a8] sm:$0xff]
    %v2773 = vld [vmem:[#allocation23 + $0x10b0] sm:$0xff]
    %v2774 = vld [vmem:[#allocation23 + $0x10b8] sm:$0xff]
    %v2775 = vld [vmem:[#allocation23 + $0x10c0] sm:$0xff]
    %v2776 = vld [vmem:[#allocation23 + $0x10c8] sm:$0xff]
    %v2777 = vld [vmem:[#allocation23 + $0x10d0] sm:$0xff]
    %v2778 = vld [vmem:[#allocation23 + $0x10d8] sm:$0xff]
    %v2779 = vld [vmem:[#allocation23 + $0x10e0] sm:$0xff]
    %v2780 = vld [vmem:[#allocation23 + $0x10e8] sm:$0xff]
    %v2781 = vld [vmem:[#allocation23 + $0x10f0] sm:$0xff]
    %v2782 = vld [vmem:[#allocation23 + $0x10f8] sm:$0xff]
    %v2783 = vld [vmem:[#allocation23 + $0x1100] sm:$0xff]
    %v2784 = vld [vmem:[#allocation23 + $0x1108] sm:$0xff]
    %v2785 = vld [vmem:[#allocation23 + $0x1110] sm:$0xff]
    %v2786 = vld [vmem:[#allocation23 + $0x1118] sm:$0xff]
    %v2787 = vld [vmem:[#allocation23 + $0x1120] sm:$0xff]
    %v2788 = vld [vmem:[#allocation23 + $0x1128] sm:$0xff]
    %v2789 = vld [vmem:[#allocation23 + $0x1130] sm:$0xff]
    %v2790 = vld [vmem:[#allocation23 + $0x1138] sm:$0xff]
    %v2791 = vld [vmem:[#allocation23 + $0x1140] sm:$0xff]
    %v2792 = vld [vmem:[#allocation23 + $0x1148] sm:$0xff]
    %v2793 = vld [vmem:[#allocation23 + $0x1150] sm:$0xff]
    %v2794 = vld [vmem:[#allocation23 + $0x1158] sm:$0xff]
    %v2795 = vld [vmem:[#allocation23 + $0x1160] sm:$0xff]
    %v2796 = vld [vmem:[#allocation23 + $0x1168] sm:$0xff]
    %v2797 = vld [vmem:[#allocation23 + $0x1170] sm:$0xff]
    %v2798 = vld [vmem:[#allocation23 + $0x1178] sm:$0xff]
    %v2799 = vld [vmem:[#allocation23 + $0x1180] sm:$0xff]
    %v2800 = vld [vmem:[#allocation23 + $0x1188] sm:$0xff]
    %v2801 = vld [vmem:[#allocation23 + $0x1190] sm:$0xff]
    %v2802 = vld [vmem:[#allocation23 + $0x1198] sm:$0xff]
    %v2803 = vld [vmem:[#allocation23 + $0x11a0] sm:$0xff]
    %v2804 = vld [vmem:[#allocation23 + $0x11a8] sm:$0xff]
    %v2805 = vld [vmem:[#allocation23 + $0x11b0] sm:$0xff]
    %v2806 = vld [vmem:[#allocation23 + $0x11b8] sm:$0xff]
    %v2807 = vld [vmem:[#allocation23 + $0x11c0] sm:$0xff]
    %v2808 = vld [vmem:[#allocation23 + $0x11c8] sm:$0xff]
    %v2809 = vld [vmem:[#allocation23 + $0x11d0] sm:$0xff]
    %v2810 = vld [vmem:[#allocation23 + $0x11d8] sm:$0xff]
    %v2811 = vld [vmem:[#allocation23 + $0x11e0] sm:$0xff]
    %v2812 = vld [vmem:[#allocation23 + $0x11e8] sm:$0xff]
    %v2813 = vld [vmem:[#allocation23 + $0x11f0] sm:$0xff]
    %v2814 = vld [vmem:[#allocation23 + $0x11f8] sm:$0xff]
    %v2815 = vld [vmem:[#allocation25] sm:$0x3f]
    %v2817 = vlaneseq
    %v2818 = vshrl.u32 %v2817, 7
    %v2819 = vsub.s32 0, %v2818
    %v2820 = vrot.slane %v2815, %v2819
    %v2821 = vlaneseq
    %v2822 = vshrl.u32 %v2821, 7
    %v2823 = vsub.s32 1, %v2822
    %v2824 = vrot.slane %v2815, %v2823
    %v2825 = vlaneseq
    %v2826 = vshrl.u32 %v2825, 7
    %v2827 = vsub.s32 2, %v2826
    %v2828 = vrot.slane %v2815, %v2827
    %v2829 = vlaneseq
    %v2830 = vshrl.u32 %v2829, 7
    %v2831 = vsub.s32 3, %v2830
    %v2832 = vrot.slane %v2815, %v2831
    %v2833 = vlaneseq
    %v2834 = vshrl.u32 %v2833, 7
    %v2835 = vsub.s32 4, %v2834
    %v2836 = vrot.slane %v2815, %v2835
    %v2837 = vlaneseq
    %v2838 = vshrl.u32 %v2837, 7
    %v2839 = vsub.s32 5, %v2838
    %v2840 = vrot.slane %v2815, %v2839
    %2847 = vmatprep.subr.mxu0 %v2240
    %2848 = vmatpush1.msra.mxu0 %v2239
    %2849 = vmatprep.subr.mxu0 %v2246
    %2850 = vmatpush1.msra.mxu0 %v2245
    %2851 = vmatprep.subr.mxu0 %v2252
    %2852 = vmatpush1.msra.mxu0 %v2251
    %2853 = vmatprep.subr.mxu0 %v2258
    %2854 = vmatpush1.msra.mxu0 %v2257
    %2855 = vmatprep.subr.mxu0 %v2264
    %2856 = vmatpush1.msra.mxu0 %v2263
    %2857 = vmatprep.subr.mxu0 %v2270
    %2858 = vmatpush1.msra.mxu0 %v2269
    %2859 = vmatprep.subr.mxu0 %v2276
    %2860 = vmatpush1.msra.mxu0 %v2275
    %2861 = vmatprep.subr.mxu0 %v2282
    %2862 = vmatpush1.msra.mxu0 %v2281
    %2863 = vmatprep.subr.mxu0 %v2288
    %2864 = vmatpush1.msra.mxu0 %v2287
    %2865 = vmatprep.subr.mxu0 %v2294
    %2866 = vmatpush1.msra.mxu0 %v2293
    %2867 = vmatprep.subr.mxu0 %v2300
    %2868 = vmatpush1.msra.mxu0 %v2299
    %2869 = vmatprep.subr.mxu0 %v2306
    %2870 = vmatpush1.msra.mxu0 %v2305
    %2871 = vmatprep.subr.mxu0 %v2312
    %2872 = vmatpush1.msra.mxu0 %v2311
    %2873 = vmatprep.subr.mxu0 %v2318
    %2874 = vmatpush1.msra.mxu0 %v2317
    %2875 = vmatprep.subr.mxu0 %v2324
    %2876 = vmatpush1.msra.mxu0 %v2323
    %2877 = vmatprep.subr.mxu0 %v2330
    %2878 = vmatpush1.msra.mxu0 %v2329
    %2879 = vmatprep.subr.mxu0 %v2336
    %2880 = vmatpush1.msra.mxu0 %v2335
    %2881 = vmatprep.subr.mxu0 %v2342
    %2882 = vmatpush1.msra.mxu0 %v2341
    %2883 = vmatprep.subr.mxu0 %v2348
    %2884 = vmatpush1.msra.mxu0 %v2347
    %2885 = vmatprep.subr.mxu0 %v2354
    %2886 = vmatpush1.msra.mxu0 %v2353
    %2887 = vmatprep.subr.mxu0 %v2360
    %2888 = vmatpush1.msra.mxu0 %v2359
    %2889 = vmatprep.subr.mxu0 %v2366
    %2890 = vmatpush1.msra.mxu0 %v2365
    %2891 = vmatprep.subr.mxu0 %v2372
    %2892 = vmatpush1.msra.mxu0 %v2371
    %2893 = vmatprep.subr.mxu0 %v2378
    %2894 = vmatpush1.msra.mxu0 %v2377
    %2895 = vmatprep.subr.mxu0 %v2384
    %2896 = vmatpush1.msra.mxu0 %v2383
    %2897 = vmatprep.subr.mxu0 %v2390
    %2898 = vmatpush1.msra.mxu0 %v2389
    %2899 = vmatprep.subr.mxu0 %v2396
    %2900 = vmatpush1.msra.mxu0 %v2395
    %2901 = vmatprep.subr.mxu0 %v2402
    %2902 = vmatpush1.msra.mxu0 %v2401
    %2903 = vmatprep.subr.mxu0 %v2408
    %2904 = vmatpush1.msra.mxu0 %v2407
    %2905 = vmatprep.subr.mxu0 %v2414
    %2906 = vmatpush1.msra.mxu0 %v2413
    %2907 = vmatprep.subr.mxu0 %v2420
    %2908 = vmatpush1.msra.mxu0 %v2419
    %2909 = vmatprep.subr.mxu0 %v2426
    %2910 = vmatpush1.msra.mxu0 %v2425
    %2911 = vmatprep.mubr.f32.mxu0 %v2234
    %2912 = vmatmul.mubr.f32.gmra.mrb[0].mxu0 %v2233
    %v2913 = vpop.f32.mrb[0].mxu0
    %v2914 = vadd.f32 %v2820, %v2913
    %v2915 = vpop.f32.mrb[0].mxu0
    %v2916 = vadd.f32 %v2824, %v2915
    %2917 = vdwg.mxu0
    %2918 = vmatprep.subr.mxu0 %v2432
    %2919 = vmatpush1.msra.mxu0 %v2431
    %2920 = vmatprep.subr.mxu0 %v2438
    %2921 = vmatpush1.msra.mxu0 %v2437
    %2922 = vmatprep.subr.mxu0 %v2444
    %2923 = vmatpush1.msra.mxu0 %v2443
    %2924 = vmatprep.subr.mxu0 %v2450
    %2925 = vmatpush1.msra.mxu0 %v2449
    %2926 = vmatprep.subr.mxu0 %v2456
    %2927 = vmatpush1.msra.mxu0 %v2455
    %2928 = vmatprep.subr.mxu0 %v2462
    %2929 = vmatpush1.msra.mxu0 %v2461
    %2930 = vmatprep.subr.mxu0 %v2468
    %2931 = vmatpush1.msra.mxu0 %v2467
    %2932 = vmatprep.subr.mxu0 %v2474
    %2933 = vmatpush1.msra.mxu0 %v2473
    %2934 = vmatprep.subr.mxu0 %v2480
    %2935 = vmatpush1.msra.mxu0 %v2479
    %2936 = vmatprep.subr.mxu0 %v2486
    %2937 = vmatpush1.msra.mxu0 %v2485
    %2938 = vmatprep.subr.mxu0 %v2492
    %2939 = vmatpush1.msra.mxu0 %v2491
    %2940 = vmatprep.subr.mxu0 %v2498
    %2941 = vmatpush1.msra.mxu0 %v2497
    %2942 = vmatprep.subr.mxu0 %v2504
    %2943 = vmatpush1.msra.mxu0 %v2503
    %2944 = vmatprep.subr.mxu0 %v2510
    %2945 = vmatpush1.msra.mxu0 %v2509
    %2946 = vmatprep.subr.mxu0 %v2516
    %2947 = vmatpush1.msra.mxu0 %v2515
    %2948 = vmatprep.subr.mxu0 %v2522
    %2949 = vmatpush1.msra.mxu0 %v2521
    %2950 = vmatprep.subr.mxu0 %v2528
    %2951 = vmatpush1.msra.mxu0 %v2527
    %2952 = vmatprep.subr.mxu0 %v2534
    %2953 = vmatpush1.msra.mxu0 %v2533
    %2954 = vmatprep.subr.mxu0 %v2540
    %2955 = vmatpush1.msra.mxu0 %v2539
    %2956 = vmatprep.subr.mxu0 %v2546
    %2957 = vmatpush1.msra.mxu0 %v2545
    %2958 = vmatprep.subr.mxu0 %v2552
    %2959 = vmatpush1.msra.mxu0 %v2551
    %2960 = vmatprep.subr.mxu0 %v2558
    %2961 = vmatpush1.msra.mxu0 %v2557
    %2962 = vmatprep.subr.mxu0 %v2564
    %2963 = vmatpush1.msra.mxu0 %v2563
    %2964 = vmatprep.subr.mxu0 %v2570
    %2965 = vmatpush1.msra.mxu0 %v2569
    %2966 = vmatprep.subr.mxu0 %v2576
    %2967 = vmatpush1.msra.mxu0 %v2575
    %2968 = vmatprep.subr.mxu0 %v2582
    %2969 = vmatpush1.msra.mxu0 %v2581
    %2970 = vmatprep.subr.mxu0 %v2588
    %2971 = vmatpush1.msra.mxu0 %v2587
    %2972 = vmatprep.subr.mxu0 %v2594
    %2973 = vmatpush1.msra.mxu0 %v2593
    %2974 = vmatprep.subr.mxu0 %v2600
    %2975 = vmatpush1.msra.mxu0 %v2599
    %2976 = vmatprep.subr.mxu0 %v2606
    %2977 = vmatpush1.msra.mxu0 %v2605
    %2978 = vmatprep.subr.mxu0 %v2612
    %2979 = vmatpush1.msra.mxu0 %v2611
    %2980 = vmatprep.subr.mxu0 %v2618
    %2981 = vmatpush1.msra.mxu0 %v2617
    %2982 = vmatprep.mubr.f32.mxu0 %v2236
    %2983 = vmatmul.mubr.f32.gmra.mrb[0].mxu0 %v2235
    %v2984 = vpop.f32.mrb[0].mxu0
    %v2985 = vadd.f32 %v2914, %v2984
    %v2986 = vpop.f32.mrb[0].mxu0
    %v2987 = vadd.f32 %v2916, %v2986
    %2988 = vdwg.mxu0
    %2989 = vmatprep.subr.mxu0 %v2624
    %2990 = vmatpush1.msra.mxu0 %v2623
    %2991 = vmatprep.subr.mxu0 %v2630
    %2992 = vmatpush1.msra.mxu0 %v2629
    %2993 = vmatprep.subr.mxu0 %v2636
    %2994 = vmatpush1.msra.mxu0 %v2635
    %2995 = vmatprep.subr.mxu0 %v2642
    %2996 = vmatpush1.msra.mxu0 %v2641
    %2997 = vmatprep.subr.mxu0 %v2648
    %2998 = vmatpush1.msra.mxu0 %v2647
    %2999 = vmatprep.subr.mxu0 %v2654
    %3000 = vmatpush1.msra.mxu0 %v2653
    %3001 = vmatprep.subr.mxu0 %v2660
    %3002 = vmatpush1.msra.mxu0 %v2659
    %3003 = vmatprep.subr.mxu0 %v2666
    %3004 = vmatpush1.msra.mxu0 %v2665
    %3005 = vmatprep.subr.mxu0 %v2672
    %3006 = vmatpush1.msra.mxu0 %v2671
    %3007 = vmatprep.subr.mxu0 %v2678
    %3008 = vmatpush1.msra.mxu0 %v2677
    %3009 = vmatprep.subr.mxu0 %v2684
    %3010 = vmatpush1.msra.mxu0 %v2683
    %3011 = vmatprep.subr.mxu0 %v2690
    %3012 = vmatpush1.msra.mxu0 %v2689
    %3013 = vmatprep.subr.mxu0 %v2696
    %3014 = vmatpush1.msra.mxu0 %v2695
    %3015 = vmatprep.subr.mxu0 %v2702
    %3016 = vmatpush1.msra.mxu0 %v2701
    %3017 = vmatprep.subr.mxu0 %v2708
    %3018 = vmatpush1.msra.mxu0 %v2707
    %3019 = vmatprep.subr.mxu0 %v2714
    %3020 = vmatpush1.msra.mxu0 %v2713
    %3021 = vmatprep.subr.mxu0 %v2720
    %3022 = vmatpush1.msra.mxu0 %v2719
    %3023 = vmatprep.subr.mxu0 %v2726
    %3024 = vmatpush1.msra.mxu0 %v2725
    %3025 = vmatprep.subr.mxu0 %v2732
    %3026 = vmatpush1.msra.mxu0 %v2731
    %3027 = vmatprep.subr.mxu0 %v2738
    %3028 = vmatpush1.msra.mxu0 %v2737
    %3029 = vmatprep.subr.mxu0 %v2744
    %3030 = vmatpush1.msra.mxu0 %v2743
    %3031 = vmatprep.subr.mxu0 %v2750
    %3032 = vmatpush1.msra.mxu0 %v2749
    %3033 = vmatprep.subr.mxu0 %v2756
    %3034 = vmatpush1.msra.mxu0 %v2755
    %3035 = vmatprep.subr.mxu0 %v2762
    %3036 = vmatpush1.msra.mxu0 %v2761
    %3037 = vmatprep.subr.mxu0 %v2768
    %3038 = vmatpush1.msra.mxu0 %v2767
    %3039 = vmatprep.subr.mxu0 %v2774
    %3040 = vmatpush1.msra.mxu0 %v2773
    %3041 = vmatprep.subr.mxu0 %v2780
    %3042 = vmatpush1.msra.mxu0 %v2779
    %3043 = vmatprep.subr.mxu0 %v2786
    %3044 = vmatpush1.msra.mxu0 %v2785
    %3045 = vmatprep.subr.mxu0 %v2792
    %3046 = vmatpush1.msra.mxu0 %v2791
    %3047 = vmatprep.subr.mxu0 %v2798
    %3048 = vmatpush1.msra.mxu0 %v2797
    %3049 = vmatprep.subr.mxu0 %v2804
    %3050 = vmatpush1.msra.mxu0 %v2803
    %3051 = vmatprep.subr.mxu0 %v2810
    %3052 = vmatpush1.msra.mxu0 %v2809
    %3053 = vmatprep.mubr.f32.mxu0 %v2238
    %3054 = vmatmul.mubr.f32.gmra.mrb[0].mxu0 %v2237
    %v3055 = vpop.f32.mrb[0].mxu0
    %v3056 = vadd.f32 %v2985, %v3055
    %v3057 = vpop.f32.mrb[0].mxu0
    %v3058 = vadd.f32 %v2987, %v3057
    %3059 = vdwg.mxu0
    %3060 = vmatprep.subr.mxu0 %v2242
    %3061 = vmatpush1.msra.mxu0 %v2241
    %3062 = vmatprep.subr.mxu0 %v2248
    %3063 = vmatpush1.msra.mxu0 %v2247
    %3064 = vmatprep.subr.mxu0 %v2254
    %3065 = vmatpush1.msra.mxu0 %v2253
    %3066 = vmatprep.subr.mxu0 %v2260
    %3067 = vmatpush1.msra.mxu0 %v2259
    %3068 = vmatprep.subr.mxu0 %v2266
    %3069 = vmatpush1.msra.mxu0 %v2265
    %3070 = vmatprep.subr.mxu0 %v2272
    %3071 = vmatpush1.msra.mxu0 %v2271
    %3072 = vmatprep.subr.mxu0 %v2278
    %3073 = vmatpush1.msra.mxu0 %v2277
    %3074 = vmatprep.subr.mxu0 %v2284
    %3075 = vmatpush1.msra.mxu0 %v2283
    %3076 = vmatprep.subr.mxu0 %v2290
    %3077 = vmatpush1.msra.mxu0 %v2289
    %3078 = vmatprep.subr.mxu0 %v2296
    %3079 = vmatpush1.msra.mxu0 %v2295
    %3080 = vmatprep.subr.mxu0 %v2302
    %3081 = vmatpush1.msra.mxu0 %v2301
    %3082 = vmatprep.subr.mxu0 %v2308
    %3083 = vmatpush1.msra.mxu0 %v2307
    %3084 = vmatprep.subr.mxu0 %v2314
    %3085 = vmatpush1.msra.mxu0 %v2313
    %3086 = vmatprep.subr.mxu0 %v2320
    %3087 = vmatpush1.msra.mxu0 %v2319
    %3088 = vmatprep.subr.mxu0 %v2326
    %3089 = vmatpush1.msra.mxu0 %v2325
    %3090 = vmatprep.subr.mxu0 %v2332
    %3091 = vmatpush1.msra.mxu0 %v2331
    %3092 = vmatprep.subr.mxu0 %v2338
    %3093 = vmatpush1.msra.mxu0 %v2337
    %3094 = vmatprep.subr.mxu0 %v2344
    %3095 = vmatpush1.msra.mxu0 %v2343
    %3096 = vmatprep.subr.mxu0 %v2350
    %3097 = vmatpush1.msra.mxu0 %v2349
    %3098 = vmatprep.subr.mxu0 %v2356
    %3099 = vmatpush1.msra.mxu0 %v2355
    %3100 = vmatprep.subr.mxu0 %v2362
    %3101 = vmatpush1.msra.mxu0 %v2361
    %3102 = vmatprep.subr.mxu0 %v2368
    %3103 = vmatpush1.msra.mxu0 %v2367
    %3104 = vmatprep.subr.mxu0 %v2374
    %3105 = vmatpush1.msra.mxu0 %v2373
    %3106 = vmatprep.subr.mxu0 %v2380
    %3107 = vmatpush1.msra.mxu0 %v2379
    %3108 = vmatprep.subr.mxu0 %v2386
    %3109 = vmatpush1.msra.mxu0 %v2385
    %3110 = vmatprep.subr.mxu0 %v2392
    %3111 = vmatpush1.msra.mxu0 %v2391
    %3112 = vmatprep.subr.mxu0 %v2398
    %3113 = vmatpush1.msra.mxu0 %v2397
    %3114 = vmatprep.subr.mxu0 %v2404
    %3115 = vmatpush1.msra.mxu0 %v2403
    %3116 = vmatprep.subr.mxu0 %v2410
    %3117 = vmatpush1.msra.mxu0 %v2409
    %3118 = vmatprep.subr.mxu0 %v2416
    %3119 = vmatpush1.msra.mxu0 %v2415
    %3120 = vmatprep.subr.mxu0 %v2422
    %3121 = vmatpush1.msra.mxu0 %v2421
    %3122 = vmatprep.subr.mxu0 %v2428
    %3123 = vmatpush1.msra.mxu0 %v2427
    %3124 = vmatprep.mubr.f32.mxu0 %v2234
    %3125 = vmatmul.mubr.f32.gmra.mrb[0].mxu0 %v2233
    %v3126 = vpop.f32.mrb[0].mxu0
    %v3127 = vadd.f32 %v2828, %v3126
    %v3128 = vpop.f32.mrb[0].mxu0
    %v3129 = vadd.f32 %v2832, %v3128
    %3130 = vdwg.mxu0
    %3131 = vmatprep.subr.mxu0 %v2434
    %3132 = vmatpush1.msra.mxu0 %v2433
    %3133 = vmatprep.subr.mxu0 %v2440
    %3134 = vmatpush1.msra.mxu0 %v2439
    %3135 = vmatprep.subr.mxu0 %v2446
    %3136 = vmatpush1.msra.mxu0 %v2445
    %3137 = vmatprep.subr.mxu0 %v2452
    %3138 = vmatpush1.msra.mxu0 %v2451
    %3139 = vmatprep.subr.mxu0 %v2458
    %3140 = vmatpush1.msra.mxu0 %v2457
    %3141 = vmatprep.subr.mxu0 %v2464
    %3142 = vmatpush1.msra.mxu0 %v2463
    %3143 = vmatprep.subr.mxu0 %v2470
    %3144 = vmatpush1.msra.mxu0 %v2469
    %3145 = vmatprep.subr.mxu0 %v2476
    %3146 = vmatpush1.msra.mxu0 %v2475
    %3147 = vmatprep.subr.mxu0 %v2482
    %3148 = vmatpush1.msra.mxu0 %v2481
    %3149 = vmatprep.subr.mxu0 %v2488
    %3150 = vmatpush1.msra.mxu0 %v2487
    %3151 = vmatprep.subr.mxu0 %v2494
    %3152 = vmatpush1.msra.mxu0 %v2493
    %3153 = vmatprep.subr.mxu0 %v2500
    %3154 = vmatpush1.msra.mxu0 %v2499
    %3155 = vmatprep.subr.mxu0 %v2506
    %3156 = vmatpush1.msra.mxu0 %v2505
    %3157 = vmatprep.subr.mxu0 %v2512
    %3158 = vmatpush1.msra.mxu0 %v2511
    %3159 = vmatprep.subr.mxu0 %v2518
    %3160 = vmatpush1.msra.mxu0 %v2517
    %3161 = vmatprep.subr.mxu0 %v2524
    %3162 = vmatpush1.msra.mxu0 %v2523
    %3163 = vmatprep.subr.mxu0 %v2530
    %3164 = vmatpush1.msra.mxu0 %v2529
    %3165 = vmatprep.subr.mxu0 %v2536
    %3166 = vmatpush1.msra.mxu0 %v2535
    %3167 = vmatprep.subr.mxu0 %v2542
    %3168 = vmatpush1.msra.mxu0 %v2541
    %3169 = vmatprep.subr.mxu0 %v2548
    %3170 = vmatpush1.msra.mxu0 %v2547
    %3171 = vmatprep.subr.mxu0 %v2554
    %3172 = vmatpush1.msra.mxu0 %v2553
    %3173 = vmatprep.subr.mxu0 %v2560
    %3174 = vmatpush1.msra.mxu0 %v2559
    %3175 = vmatprep.subr.mxu0 %v2566
    %3176 = vmatpush1.msra.mxu0 %v2565
    %3177 = vmatprep.subr.mxu0 %v2572
    %3178 = vmatpush1.msra.mxu0 %v2571
    %3179 = vmatprep.subr.mxu0 %v2578
    %3180 = vmatpush1.msra.mxu0 %v2577
    %3181 = vmatprep.subr.mxu0 %v2584
    %3182 = vmatpush1.msra.mxu0 %v2583
    %3183 = vmatprep.subr.mxu0 %v2590
    %3184 = vmatpush1.msra.mxu0 %v2589
    %3185 = vmatprep.subr.mxu0 %v2596
    %3186 = vmatpush1.msra.mxu0 %v2595
    %3187 = vmatprep.subr.mxu0 %v2602
    %3188 = vmatpush1.msra.mxu0 %v2601
    %3189 = vmatprep.subr.mxu0 %v2608
    %3190 = vmatpush1.msra.mxu0 %v2607
    %3191 = vmatprep.subr.mxu0 %v2614
    %3192 = vmatpush1.msra.mxu0 %v2613
    %3193 = vmatprep.subr.mxu0 %v2620
    %3194 = vmatpush1.msra.mxu0 %v2619
    %3195 = vmatprep.mubr.f32.mxu0 %v2236
    %3196 = vmatmul.mubr.f32.gmra.mrb[0].mxu0 %v2235
    %v3197 = vpop.f32.mrb[0].mxu0
    %v3198 = vadd.f32 %v3127, %v3197
    %v3199 = vpop.f32.mrb[0].mxu0
    %v3200 = vadd.f32 %v3129, %v3199
    %3201 = vdwg.mxu0
    %3202 = vmatprep.subr.mxu0 %v2626
    %3203 = vmatpush1.msra.mxu0 %v2625
    %3204 = vmatprep.subr.mxu0 %v2632
    %3205 = vmatpush1.msra.mxu0 %v2631
    %3206 = vmatprep.subr.mxu0 %v2638
    %3207 = vmatpush1.msra.mxu0 %v2637
    %3208 = vmatprep.subr.mxu0 %v2644
    %3209 = vmatpush1.msra.mxu0 %v2643
    %3210 = vmatprep.subr.mxu0 %v2650
    %3211 = vmatpush1.msra.mxu0 %v2649
    %3212 = vmatprep.subr.mxu0 %v2656
    %3213 = vmatpush1.msra.mxu0 %v2655
    %3214 = vmatprep.subr.mxu0 %v2662
    %3215 = vmatpush1.msra.mxu0 %v2661
    %3216 = vmatprep.subr.mxu0 %v2668
    %3217 = vmatpush1.msra.mxu0 %v2667
    %3218 = vmatprep.subr.mxu0 %v2674
    %3219 = vmatpush1.msra.mxu0 %v2673
    %3220 = vmatprep.subr.mxu0 %v2680
    %3221 = vmatpush1.msra.mxu0 %v2679
    %3222 = vmatprep.subr.mxu0 %v2686
    %3223 = vmatpush1.msra.mxu0 %v2685
    %3224 = vmatprep.subr.mxu0 %v2692
    %3225 = vmatpush1.msra.mxu0 %v2691
    %3226 = vmatprep.subr.mxu0 %v2698
    %3227 = vmatpush1.msra.mxu0 %v2697
    %3228 = vmatprep.subr.mxu0 %v2704
    %3229 = vmatpush1.msra.mxu0 %v2703
    %3230 = vmatprep.subr.mxu0 %v2710
    %3231 = vmatpush1.msra.mxu0 %v2709
    %3232 = vmatprep.subr.mxu0 %v2716
    %3233 = vmatpush1.msra.mxu0 %v2715
    %3234 = vmatprep.subr.mxu0 %v2722
    %3235 = vmatpush1.msra.mxu0 %v2721
    %3236 = vmatprep.subr.mxu0 %v2728
    %3237 = vmatpush1.msra.mxu0 %v2727
    %3238 = vmatprep.subr.mxu0 %v2734
    %3239 = vmatpush1.msra.mxu0 %v2733
    %3240 = vmatprep.subr.mxu0 %v2740
    %3241 = vmatpush1.msra.mxu0 %v2739
    %3242 = vmatprep.subr.mxu0 %v2746
    %3243 = vmatpush1.msra.mxu0 %v2745
    %3244 = vmatprep.subr.mxu0 %v2752
    %3245 = vmatpush1.msra.mxu0 %v2751
    %3246 = vmatprep.subr.mxu0 %v2758
    %3247 = vmatpush1.msra.mxu0 %v2757
    %3248 = vmatprep.subr.mxu0 %v2764
    %3249 = vmatpush1.msra.mxu0 %v2763
    %3250 = vmatprep.subr.mxu0 %v2770
    %3251 = vmatpush1.msra.mxu0 %v2769
    %3252 = vmatprep.subr.mxu0 %v2776
    %3253 = vmatpush1.msra.mxu0 %v2775
    %3254 = vmatprep.subr.mxu0 %v2782
    %3255 = vmatpush1.msra.mxu0 %v2781
    %3256 = vmatprep.subr.mxu0 %v2788
    %3257 = vmatpush1.msra.mxu0 %v2787
    %3258 = vmatprep.subr.mxu0 %v2794
    %3259 = vmatpush1.msra.mxu0 %v2793
    %3260 = vmatprep.subr.mxu0 %v2800
    %3261 = vmatpush1.msra.mxu0 %v2799
    %3262 = vmatprep.subr.mxu0 %v2806
    %3263 = vmatpush1.msra.mxu0 %v2805
    %3264 = vmatprep.subr.mxu0 %v2812
    %3265 = vmatpush1.msra.mxu0 %v2811
    %3266 = vmatprep.mubr.f32.mxu0 %v2238
    %3267 = vmatmul.mubr.f32.gmra.mrb[0].mxu0 %v2237
    %v3268 = vpop.f32.mrb[0].mxu0
    %v3269 = vadd.f32 %v3198, %v3268
    %v3270 = vpop.f32.mrb[0].mxu0
    %v3271 = vadd.f32 %v3200, %v3270
    %3272 = vdwg.mxu0
    %3273 = vmatprep.subr.mxu0 %v2244
    %3274 = vmatpush1.msra.mxu0 %v2243
    %3275 = vmatprep.subr.mxu0 %v2250
    %3276 = vmatpush1.msra.mxu0 %v2249
    %3277 = vmatprep.subr.mxu0 %v2256
    %3278 = vmatpush1.msra.mxu0 %v2255
    %3279 = vmatprep.subr.mxu0 %v2262
    %3280 = vmatpush1.msra.mxu0 %v2261
    %3281 = vmatprep.subr.mxu0 %v2268
    %3282 = vmatpush1.msra.mxu0 %v2267
    %3283 = vmatprep.subr.mxu0 %v2274
    %3284 = vmatpush1.msra.mxu0 %v2273
    %3285 = vmatprep.subr.mxu0 %v2280
    %3286 = vmatpush1.msra.mxu0 %v2279
    %3287 = vmatprep.subr.mxu0 %v2286
    %3288 = vmatpush1.msra.mxu0 %v2285
    %3289 = vmatprep.subr.mxu0 %v2292
    %3290 = vmatpush1.msra.mxu0 %v2291
    %3291 = vmatprep.subr.mxu0 %v2298
    %3292 = vmatpush1.msra.mxu0 %v2297
    %3293 = vmatprep.subr.mxu0 %v2304
    %3294 = vmatpush1.msra.mxu0 %v2303
    %3295 = vmatprep.subr.mxu0 %v2310
    %3296 = vmatpush1.msra.mxu0 %v2309
    %3297 = vmatprep.subr.mxu0 %v2316
    %3298 = vmatpush1.msra.mxu0 %v2315
    %3299 = vmatprep.subr.mxu0 %v2322
    %3300 = vmatpush1.msra.mxu0 %v2321
    %3301 = vmatprep.subr.mxu0 %v2328
    %3302 = vmatpush1.msra.mxu0 %v2327
    %3303 = vmatprep.subr.mxu0 %v2334
    %3304 = vmatpush1.msra.mxu0 %v2333
    %3305 = vmatprep.subr.mxu0 %v2340
    %3306 = vmatpush1.msra.mxu0 %v2339
    %3307 = vmatprep.subr.mxu0 %v2346
    %3308 = vmatpush1.msra.mxu0 %v2345
    %3309 = vmatprep.subr.mxu0 %v2352
    %3310 = vmatpush1.msra.mxu0 %v2351
    %3311 = vmatprep.subr.mxu0 %v2358
    %3312 = vmatpush1.msra.mxu0 %v2357
    %3313 = vmatprep.subr.mxu0 %v2364
    %3314 = vmatpush1.msra.mxu0 %v2363
    %3315 = vmatprep.subr.mxu0 %v2370
    %3316 = vmatpush1.msra.mxu0 %v2369
    %3317 = vmatprep.subr.mxu0 %v2376
    %3318 = vmatpush1.msra.mxu0 %v2375
    %3319 = vmatprep.subr.mxu0 %v2382
    %3320 = vmatpush1.msra.mxu0 %v2381
    %3321 = vmatprep.subr.mxu0 %v2388
    %3322 = vmatpush1.msra.mxu0 %v2387
    %3323 = vmatprep.subr.mxu0 %v2394
    %3324 = vmatpush1.msra.mxu0 %v2393
    %3325 = vmatprep.subr.mxu0 %v2400
    %3326 = vmatpush1.msra.mxu0 %v2399
    %3327 = vmatprep.subr.mxu0 %v2406
    %3328 = vmatpush1.msra.mxu0 %v2405
    %3329 = vmatprep.subr.mxu0 %v2412
    %3330 = vmatpush1.msra.mxu0 %v2411
    %3331 = vmatprep.subr.mxu0 %v2418
    %3332 = vmatpush1.msra.mxu0 %v2417
    %3333 = vmatprep.subr.mxu0 %v2424
    %3334 = vmatpush1.msra.mxu0 %v2423
    %3335 = vmatprep.subr.mxu0 %v2430
    %3336 = vmatpush1.msra.mxu0 %v2429
    %3337 = vmatprep.mubr.f32.mxu0 %v2234
    %3338 = vmatmul.mubr.f32.gmra.mrb[0].mxu0 %v2233
    %v3339 = vpop.f32.mrb[0].mxu0
    %v3340 = vadd.f32 %v2836, %v3339
    %v3341 = vpop.f32.mrb[0].mxu0
    %v3342 = vadd.f32 %v2840, %v3341
    %3343 = vdwg.mxu0
    %3344 = vmatprep.subr.mxu0 %v2436
    %3345 = vmatpush1.msra.mxu0 %v2435
    %3346 = vmatprep.subr.mxu0 %v2442
    %3347 = vmatpush1.msra.mxu0 %v2441
    %3348 = vmatprep.subr.mxu0 %v2448
    %3349 = vmatpush1.msra.mxu0 %v2447
    %3350 = vmatprep.subr.mxu0 %v2454
    %3351 = vmatpush1.msra.mxu0 %v2453
    %3352 = vmatprep.subr.mxu0 %v2460
    %3353 = vmatpush1.msra.mxu0 %v2459
    %3354 = vmatprep.subr.mxu0 %v2466
    %3355 = vmatpush1.msra.mxu0 %v2465
    %3356 = vmatprep.subr.mxu0 %v2472
    %3357 = vmatpush1.msra.mxu0 %v2471
    %3358 = vmatprep.subr.mxu0 %v2478
    %3359 = vmatpush1.msra.mxu0 %v2477
    %3360 = vmatprep.subr.mxu0 %v2484
    %3361 = vmatpush1.msra.mxu0 %v2483
    %3362 = vmatprep.subr.mxu0 %v2490
    %3363 = vmatpush1.msra.mxu0 %v2489
    %3364 = vmatprep.subr.mxu0 %v2496
    %3365 = vmatpush1.msra.mxu0 %v2495
    %3366 = vmatprep.subr.mxu0 %v2502
    %3367 = vmatpush1.msra.mxu0 %v2501
    %3368 = vmatprep.subr.mxu0 %v2508
    %3369 = vmatpush1.msra.mxu0 %v2507
    %3370 = vmatprep.subr.mxu0 %v2514
    %3371 = vmatpush1.msra.mxu0 %v2513
    %3372 = vmatprep.subr.mxu0 %v2520
    %3373 = vmatpush1.msra.mxu0 %v2519
    %3374 = vmatprep.subr.mxu0 %v2526
    %3375 = vmatpush1.msra.mxu0 %v2525
    %3376 = vmatprep.subr.mxu0 %v2532
    %3377 = vmatpush1.msra.mxu0 %v2531
    %3378 = vmatprep.subr.mxu0 %v2538
    %3379 = vmatpush1.msra.mxu0 %v2537
    %3380 = vmatprep.subr.mxu0 %v2544
    %3381 = vmatpush1.msra.mxu0 %v2543
    %3382 = vmatprep.subr.mxu0 %v2550
    %3383 = vmatpush1.msra.mxu0 %v2549
    %3384 = vmatprep.subr.mxu0 %v2556
    %3385 = vmatpush1.msra.mxu0 %v2555
    %3386 = vmatprep.subr.mxu0 %v2562
    %3387 = vmatpush1.msra.mxu0 %v2561
    %3388 = vmatprep.subr.mxu0 %v2568
    %3389 = vmatpush1.msra.mxu0 %v2567
    %3390 = vmatprep.subr.mxu0 %v2574
    %3391 = vmatpush1.msra.mxu0 %v2573
    %3392 = vmatprep.subr.mxu0 %v2580
    %3393 = vmatpush1.msra.mxu0 %v2579
    %3394 = vmatprep.subr.mxu0 %v2586
    %3395 = vmatpush1.msra.mxu0 %v2585
    %3396 = vmatprep.subr.mxu0 %v2592
    %3397 = vmatpush1.msra.mxu0 %v2591
    %3398 = vmatprep.subr.mxu0 %v2598
    %3399 = vmatpush1.msra.mxu0 %v2597
    %3400 = vmatprep.subr.mxu0 %v2604
    %3401 = vmatpush1.msra.mxu0 %v2603
    %3402 = vmatprep.subr.mxu0 %v2610
    %3403 = vmatpush1.msra.mxu0 %v2609
    %3404 = vmatprep.subr.mxu0 %v2616
    %3405 = vmatpush1.msra.mxu0 %v2615
    %3406 = vmatprep.subr.mxu0 %v2622
    %3407 = vmatpush1.msra.mxu0 %v2621
    %3408 = vmatprep.mubr.f32.mxu0 %v2236
    %3409 = vmatmul.mubr.f32.gmra.mrb[0].mxu0 %v2235
    %v3410 = vpop.f32.mrb[0].mxu0
    %v3411 = vadd.f32 %v3340, %v3410
    %v3412 = vpop.f32.mrb[0].mxu0
    %v3413 = vadd.f32 %v3342, %v3412
    %3414 = vdwg.mxu0
    %3415 = vmatprep.subr.mxu0 %v2628
    %3416 = vmatpush1.msra.mxu0 %v2627
    %3417 = vmatprep.subr.mxu0 %v2634
    %3418 = vmatpush1.msra.mxu0 %v2633
    %3419 = vmatprep.subr.mxu0 %v2640
    %3420 = vmatpush1.msra.mxu0 %v2639
    %3421 = vmatprep.subr.mxu0 %v2646
    %3422 = vmatpush1.msra.mxu0 %v2645
    %3423 = vmatprep.subr.mxu0 %v2652
    %3424 = vmatpush1.msra.mxu0 %v2651
    %3425 = vmatprep.subr.mxu0 %v2658
    %3426 = vmatpush1.msra.mxu0 %v2657
    %3427 = vmatprep.subr.mxu0 %v2664
    %3428 = vmatpush1.msra.mxu0 %v2663
    %3429 = vmatprep.subr.mxu0 %v2670
    %3430 = vmatpush1.msra.mxu0 %v2669
    %3431 = vmatprep.subr.mxu0 %v2676
    %3432 = vmatpush1.msra.mxu0 %v2675
    %3433 = vmatprep.subr.mxu0 %v2682
    %3434 = vmatpush1.msra.mxu0 %v2681
    %3435 = vmatprep.subr.mxu0 %v2688
    %3436 = vmatpush1.msra.mxu0 %v2687
    %3437 = vmatprep.subr.mxu0 %v2694
    %3438 = vmatpush1.msra.mxu0 %v2693
    %3439 = vmatprep.subr.mxu0 %v2700
    %3440 = vmatpush1.msra.mxu0 %v2699
    %3441 = vmatprep.subr.mxu0 %v2706
    %3442 = vmatpush1.msra.mxu0 %v2705
    %3443 = vmatprep.subr.mxu0 %v2712
    %3444 = vmatpush1.msra.mxu0 %v2711
    %3445 = vmatprep.subr.mxu0 %v2718
    %3446 = vmatpush1.msra.mxu0 %v2717
    %3447 = vmatprep.subr.mxu0 %v2724
    %3448 = vmatpush1.msra.mxu0 %v2723
    %3449 = vmatprep.subr.mxu0 %v2730
    %3450 = vmatpush1.msra.mxu0 %v2729
    %3451 = vmatprep.subr.mxu0 %v2736
    %3452 = vmatpush1.msra.mxu0 %v2735
    %3453 = vmatprep.subr.mxu0 %v2742
    %3454 = vmatpush1.msra.mxu0 %v2741
    %3455 = vmatprep.subr.mxu0 %v2748
    %3456 = vmatpush1.msra.mxu0 %v2747
    %3457 = vmatprep.subr.mxu0 %v2754
    %3458 = vmatpush1.msra.mxu0 %v2753
    %3459 = vmatprep.subr.mxu0 %v2760
    %3460 = vmatpush1.msra.mxu0 %v2759
    %3461 = vmatprep.subr.mxu0 %v2766
    %3462 = vmatpush1.msra.mxu0 %v2765
    %3463 = vmatprep.subr.mxu0 %v2772
    %3464 = vmatpush1.msra.mxu0 %v2771
    %3465 = vmatprep.subr.mxu0 %v2778
    %3466 = vmatpush1.msra.mxu0 %v2777
    %3467 = vmatprep.subr.mxu0 %v2784
    %3468 = vmatpush1.msra.mxu0 %v2783
    %3469 = vmatprep.subr.mxu0 %v2790
    %3470 = vmatpush1.msra.mxu0 %v2789
    %3471 = vmatprep.subr.mxu0 %v2796
    %3472 = vmatpush1.msra.mxu0 %v2795
    %3473 = vmatprep.subr.mxu0 %v2802
    %3474 = vmatpush1.msra.mxu0 %v2801
    %3475 = vmatprep.subr.mxu0 %v2808
    %3476 = vmatpush1.msra.mxu0 %v2807
    %3477 = vmatprep.subr.mxu0 %v2814
    %3478 = vmatpush1.msra.mxu0 %v2813
    %3479 = vmatprep.mubr.f32.mxu0 %v2238
    %3480 = vmatmul.mubr.f32.gmra.mrb[0].mxu0 %v2237
    %v3481 = vpop.f32.mrb[0].mxu0
    %v3482 = vadd.f32 %v3411, %v3481
    %v3483 = vpop.f32.mrb[0].mxu0
    %v3484 = vadd.f32 %v3413, %v3483
    %3485 = vdwg.mxu0
    %v3486 = vmax.f32 %v3056, 0.0
    %v3487 = vmax.f32 %v3058, 0.0
    %v3488 = vmax.f32 %v3269, 0.0
    %v3489 = vmax.f32 %v3271, 0.0
    %v3490 = vmax.f32 %v3482, 0.0
    %v3491 = vmax.f32 %v3484, 0.0
    %v3492 = vld [vmem:[#allocation26] sm:$0xff]
    %v3493 = vld [vmem:[#allocation26 + $0x8] sm:$0xff]
    %v3494 = vld [vmem:[#allocation26 + $0x10] sm:$0xff]
    %v3495 = vld [vmem:[#allocation26 + $0x18] sm:$0xff]
    %v3496 = vld [vmem:[#allocation26 + $0x20] sm:$0xff]
    %v3497 = vld [vmem:[#allocation26 + $0x28] sm:$0xff]
    %v3498 = vld [vmem:[#allocation26 + $0x30] sm:$0xff]
    %v3499 = vld [vmem:[#allocation26 + $0x38] sm:$0xff]
    %v3500 = vld [vmem:[#allocation26 + $0x40] sm:$0xff]
    %v3501 = vld [vmem:[#allocation26 + $0x48] sm:$0xff]
    %v3502 = vld [vmem:[#allocation26 + $0x50] sm:$0xff]
    %v3503 = vld [vmem:[#allocation26 + $0x58] sm:$0xff]
    %v3504 = vld [vmem:[#allocation26 + $0x60] sm:$0xff]
    %v3505 = vld [vmem:[#allocation26 + $0x68] sm:$0xff]
    %v3506 = vld [vmem:[#allocation26 + $0x70] sm:$0xff]
    %v3507 = vld [vmem:[#allocation26 + $0x78] sm:$0xff]
    %v3508 = vld [vmem:[#allocation26 + $0x80] sm:$0xff]
    %v3509 = vld [vmem:[#allocation26 + $0x88] sm:$0xff]
    %v3510 = vld [vmem:[#allocation26 + $0x90] sm:$0xff]
    %v3511 = vld [vmem:[#allocation26 + $0x98] sm:$0xff]
    %v3512 = vld [vmem:[#allocation26 + $0xa0] sm:$0xff]
    %v3513 = vld [vmem:[#allocation26 + $0xa8] sm:$0xff]
    %v3514 = vld [vmem:[#allocation26 + $0xb0] sm:$0xff]
    %v3515 = vld [vmem:[#allocation26 + $0xb8] sm:$0xff]
    %v3516 = vld [vmem:[#allocation26 + $0xc0] sm:$0xff]
    %v3517 = vld [vmem:[#allocation26 + $0xc8] sm:$0xff]
    %v3518 = vld [vmem:[#allocation26 + $0xd0] sm:$0xff]
    %v3519 = vld [vmem:[#allocation26 + $0xd8] sm:$0xff]
    %v3520 = vld [vmem:[#allocation26 + $0xe0] sm:$0xff]
    %v3521 = vld [vmem:[#allocation26 + $0xe8] sm:$0xff]
    %v3522 = vld [vmem:[#allocation26 + $0xf0] sm:$0xff]
    %v3523 = vld [vmem:[#allocation26 + $0xf8] sm:$0xff]
    %v3524 = vld [vmem:[#allocation26 + $0x100] sm:$0xff]
    %v3525 = vld [vmem:[#allocation26 + $0x108] sm:$0xff]
    %v3526 = vld [vmem:[#allocation26 + $0x110] sm:$0xff]
    %v3527 = vld [vmem:[#allocation26 + $0x118] sm:$0xff]
    %v3528 = vld [vmem:[#allocation26 + $0x120] sm:$0xff]
    %v3529 = vld [vmem:[#allocation26 + $0x128] sm:$0xff]
    %v3530 = vld [vmem:[#allocation26 + $0x130] sm:$0xff]
    %v3531 = vld [vmem:[#allocation26 + $0x138] sm:$0xff]
    %v3532 = vld [vmem:[#allocation26 + $0x140] sm:$0xff]
    %v3533 = vld [vmem:[#allocation26 + $0x148] sm:$0xff]
    %v3534 = vld [vmem:[#allocation26 + $0x150] sm:$0xff]
    %v3535 = vld [vmem:[#allocation26 + $0x158] sm:$0xff]
    %v3536 = vld [vmem:[#allocation26 + $0x160] sm:$0xff]
    %v3537 = vld [vmem:[#allocation26 + $0x168] sm:$0xff]
    %v3538 = vld [vmem:[#allocation26 + $0x170] sm:$0xff]
    %v3539 = vld [vmem:[#allocation26 + $0x178] sm:$0xff]
    %v3540 = vld [vmem:[#allocation26 + $0x180] sm:$0xff]
    %v3541 = vld [vmem:[#allocation26 + $0x188] sm:$0xff]
    %v3542 = vld [vmem:[#allocation26 + $0x190] sm:$0xff]
    %v3543 = vld [vmem:[#allocation26 + $0x198] sm:$0xff]
    %v3544 = vld [vmem:[#allocation26 + $0x1a0] sm:$0xff]
    %v3545 = vld [vmem:[#allocation26 + $0x1a8] sm:$0xff]
    %v3546 = vld [vmem:[#allocation26 + $0x1b0] sm:$0xff]
    %v3547 = vld [vmem:[#allocation26 + $0x1b8] sm:$0xff]
    %v3548 = vld [vmem:[#allocation26 + $0x1c0] sm:$0xff]
    %v3549 = vld [vmem:[#allocation26 + $0x1c8] sm:$0xff]
    %v3550 = vld [vmem:[#allocation26 + $0x1d0] sm:$0xff]
    %v3551 = vld [vmem:[#allocation26 + $0x1d8] sm:$0xff]
    %v3552 = vld [vmem:[#allocation26 + $0x1e0] sm:$0xff]
    %v3553 = vld [vmem:[#allocation26 + $0x1e8] sm:$0xff]
    %v3554 = vld [vmem:[#allocation26 + $0x1f0] sm:$0xff]
    %v3555 = vld [vmem:[#allocation26 + $0x1f8] sm:$0xff]
    %v3556 = vld [vmem:[#allocation26 + $0x200] sm:$0xff]
    %v3557 = vld [vmem:[#allocation26 + $0x208] sm:$0xff]
    %v3558 = vld [vmem:[#allocation26 + $0x210] sm:$0xff]
    %v3559 = vld [vmem:[#allocation26 + $0x218] sm:$0xff]
    %v3560 = vld [vmem:[#allocation26 + $0x220] sm:$0xff]
    %v3561 = vld [vmem:[#allocation26 + $0x228] sm:$0xff]
    %v3562 = vld [vmem:[#allocation26 + $0x230] sm:$0xff]
    %v3563 = vld [vmem:[#allocation26 + $0x238] sm:$0xff]
    %v3564 = vld [vmem:[#allocation26 + $0x240] sm:$0xff]
    %v3565 = vld [vmem:[#allocation26 + $0x248] sm:$0xff]
    %v3566 = vld [vmem:[#allocation26 + $0x250] sm:$0xff]
    %v3567 = vld [vmem:[#allocation26 + $0x258] sm:$0xff]
    %v3568 = vld [vmem:[#allocation26 + $0x260] sm:$0xff]
    %v3569 = vld [vmem:[#allocation26 + $0x268] sm:$0xff]
    %v3570 = vld [vmem:[#allocation26 + $0x270] sm:$0xff]
    %v3571 = vld [vmem:[#allocation26 + $0x278] sm:$0xff]
    %v3572 = vld [vmem:[#allocation26 + $0x280] sm:$0xff]
    %v3573 = vld [vmem:[#allocation26 + $0x288] sm:$0xff]
    %v3574 = vld [vmem:[#allocation26 + $0x290] sm:$0xff]
    %v3575 = vld [vmem:[#allocation26 + $0x298] sm:$0xff]
    %v3576 = vld [vmem:[#allocation26 + $0x2a0] sm:$0xff]
    %v3577 = vld [vmem:[#allocation26 + $0x2a8] sm:$0xff]
    %v3578 = vld [vmem:[#allocation26 + $0x2b0] sm:$0xff]
    %v3579 = vld [vmem:[#allocation26 + $0x2b8] sm:$0xff]
    %v3580 = vld [vmem:[#allocation26 + $0x2c0] sm:$0xff]
    %v3581 = vld [vmem:[#allocation26 + $0x2c8] sm:$0xff]
    %v3582 = vld [vmem:[#allocation26 + $0x2d0] sm:$0xff]
    %v3583 = vld [vmem:[#allocation26 + $0x2d8] sm:$0xff]
    %v3584 = vld [vmem:[#allocation26 + $0x2e0] sm:$0xff]
    %v3585 = vld [vmem:[#allocation26 + $0x2e8] sm:$0xff]
    %v3586 = vld [vmem:[#allocation26 + $0x2f0] sm:$0xff]
    %v3587 = vld [vmem:[#allocation26 + $0x2f8] sm:$0xff]
    %v3588 = vld [vmem:[#allocation28] sm:$0x1]
    %v3590 = vlaneseq
    %v3591 = vshrl.u32 %v3590, 7
    %v3592 = vsub.s32 0, %v3591
    %v3593 = vrot.slane %v3588, %v3592
    %3595 = vmatprep.subr.mxu0 0.0
    %3596 = vmatpush1.msra.mxu0 %v3492
    %3597 = vmatprep.subr.mxu0 0.0
    %3598 = vmatpush1.msra.mxu0 %v3493
    %3599 = vmatprep.subr.mxu0 0.0
    %3600 = vmatpush1.msra.mxu0 %v3494
    %3601 = vmatprep.subr.mxu0 0.0
    %3602 = vmatpush1.msra.mxu0 %v3495
    %3603 = vmatprep.subr.mxu0 0.0
    %3604 = vmatpush1.msra.mxu0 %v3496
    %3605 = vmatprep.subr.mxu0 0.0
    %3606 = vmatpush1.msra.mxu0 %v3497
    %3607 = vmatprep.subr.mxu0 0.0
    %3608 = vmatpush1.msra.mxu0 %v3498
    %3609 = vmatprep.subr.mxu0 0.0
    %3610 = vmatpush1.msra.mxu0 %v3499
    %3611 = vmatprep.subr.mxu0 0.0
    %3612 = vmatpush1.msra.mxu0 %v3500
    %3613 = vmatprep.subr.mxu0 0.0
    %3614 = vmatpush1.msra.mxu0 %v3501
    %3615 = vmatprep.subr.mxu0 0.0
    %3616 = vmatpush1.msra.mxu0 %v3502
    %3617 = vmatprep.subr.mxu0 0.0
    %3618 = vmatpush1.msra.mxu0 %v3503
    %3619 = vmatprep.subr.mxu0 0.0
    %3620 = vmatpush1.msra.mxu0 %v3504
    %3621 = vmatprep.subr.mxu0 0.0
    %3622 = vmatpush1.msra.mxu0 %v3505
    %3623 = vmatprep.subr.mxu0 0.0
    %3624 = vmatpush1.msra.mxu0 %v3506
    %3625 = vmatprep.subr.mxu0 0.0
    %3626 = vmatpush1.msra.mxu0 %v3507
    %3627 = vmatprep.subr.mxu0 0.0
    %3628 = vmatpush1.msra.mxu0 %v3508
    %3629 = vmatprep.subr.mxu0 0.0
    %3630 = vmatpush1.msra.mxu0 %v3509
    %3631 = vmatprep.subr.mxu0 0.0
    %3632 = vmatpush1.msra.mxu0 %v3510
    %3633 = vmatprep.subr.mxu0 0.0
    %3634 = vmatpush1.msra.mxu0 %v3511
    %3635 = vmatprep.subr.mxu0 0.0
    %3636 = vmatpush1.msra.mxu0 %v3512
    %3637 = vmatprep.subr.mxu0 0.0
    %3638 = vmatpush1.msra.mxu0 %v3513
    %3639 = vmatprep.subr.mxu0 0.0
    %3640 = vmatpush1.msra.mxu0 %v3514
    %3641 = vmatprep.subr.mxu0 0.0
    %3642 = vmatpush1.msra.mxu0 %v3515
    %3643 = vmatprep.subr.mxu0 0.0
    %3644 = vmatpush1.msra.mxu0 %v3516
    %3645 = vmatprep.subr.mxu0 0.0
    %3646 = vmatpush1.msra.mxu0 %v3517
    %3647 = vmatprep.subr.mxu0 0.0
    %3648 = vmatpush1.msra.mxu0 %v3518
    %3649 = vmatprep.subr.mxu0 0.0
    %3650 = vmatpush1.msra.mxu0 %v3519
    %3651 = vmatprep.subr.mxu0 0.0
    %3652 = vmatpush1.msra.mxu0 %v3520
    %3653 = vmatprep.subr.mxu0 0.0
    %3654 = vmatpush1.msra.mxu0 %v3521
    %3655 = vmatprep.subr.mxu0 0.0
    %3656 = vmatpush1.msra.mxu0 %v3522
    %3657 = vmatprep.subr.mxu0 0.0
    %3658 = vmatpush1.msra.mxu0 %v3523
    %3659 = vmatprep.mubr.f32.mxu0 %v3487
    %3660 = vmatmul.mubr.f32.gmra.mrb[0].mxu0 %v3486
    %v3661 = vpop.f32.mrb[0].mxu0
    %v3662 = vadd.f32 %v3593, %v3661
    %v3663 = vpop.f32.mrb[0].mxu0
    %3664 = vdwg.mxu0
    %3665 = vmatprep.subr.mxu0 0.0
    %3666 = vmatpush1.msra.mxu0 %v3524
    %3667 = vmatprep.subr.mxu0 0.0
    %3668 = vmatpush1.msra.mxu0 %v3525
    %3669 = vmatprep.subr.mxu0 0.0
    %3670 = vmatpush1.msra.mxu0 %v3526
    %3671 = vmatprep.subr.mxu0 0.0
    %3672 = vmatpush1.msra.mxu0 %v3527
    %3673 = vmatprep.subr.mxu0 0.0
    %3674 = vmatpush1.msra.mxu0 %v3528
    %3675 = vmatprep.subr.mxu0 0.0
    %3676 = vmatpush1.msra.mxu0 %v3529
    %3677 = vmatprep.subr.mxu0 0.0
    %3678 = vmatpush1.msra.mxu0 %v3530
    %3679 = vmatprep.subr.mxu0 0.0
    %3680 = vmatpush1.msra.mxu0 %v3531
    %3681 = vmatprep.subr.mxu0 0.0
    %3682 = vmatpush1.msra.mxu0 %v3532
    %3683 = vmatprep.subr.mxu0 0.0
    %3684 = vmatpush1.msra.mxu0 %v3533
    %3685 = vmatprep.subr.mxu0 0.0
    %3686 = vmatpush1.msra.mxu0 %v3534
    %3687 = vmatprep.subr.mxu0 0.0
    %3688 = vmatpush1.msra.mxu0 %v3535
    %3689 = vmatprep.subr.mxu0 0.0
    %3690 = vmatpush1.msra.mxu0 %v3536
    %3691 = vmatprep.subr.mxu0 0.0
    %3692 = vmatpush1.msra.mxu0 %v3537
    %3693 = vmatprep.subr.mxu0 0.0
    %3694 = vmatpush1.msra.mxu0 %v3538
    %3695 = vmatprep.subr.mxu0 0.0
    %3696 = vmatpush1.msra.mxu0 %v3539
    %3697 = vmatprep.subr.mxu0 0.0
    %3698 = vmatpush1.msra.mxu0 %v3540
    %3699 = vmatprep.subr.mxu0 0.0
    %3700 = vmatpush1.msra.mxu0 %v3541
    %3701 = vmatprep.subr.mxu0 0.0
    %3702 = vmatpush1.msra.mxu0 %v3542
    %3703 = vmatprep.subr.mxu0 0.0
    %3704 = vmatpush1.msra.mxu0 %v3543
    %3705 = vmatprep.subr.mxu0 0.0
    %3706 = vmatpush1.msra.mxu0 %v3544
    %3707 = vmatprep.subr.mxu0 0.0
    %3708 = vmatpush1.msra.mxu0 %v3545
    %3709 = vmatprep.subr.mxu0 0.0
    %3710 = vmatpush1.msra.mxu0 %v3546
    %3711 = vmatprep.subr.mxu0 0.0
    %3712 = vmatpush1.msra.mxu0 %v3547
    %3713 = vmatprep.subr.mxu0 0.0
    %3714 = vmatpush1.msra.mxu0 %v3548
    %3715 = vmatprep.subr.mxu0 0.0
    %3716 = vmatpush1.msra.mxu0 %v3549
    %3717 = vmatprep.subr.mxu0 0.0
    %3718 = vmatpush1.msra.mxu0 %v3550
    %3719 = vmatprep.subr.mxu0 0.0
    %3720 = vmatpush1.msra.mxu0 %v3551
    %3721 = vmatprep.subr.mxu0 0.0
    %3722 = vmatpush1.msra.mxu0 %v3552
    %3723 = vmatprep.subr.mxu0 0.0
    %3724 = vmatpush1.msra.mxu0 %v3553
    %3725 = vmatprep.subr.mxu0 0.0
    %3726 = vmatpush1.msra.mxu0 %v3554
    %3727 = vmatprep.subr.mxu0 0.0
    %3728 = vmatpush1.msra.mxu0 %v3555
    %3729 = vmatprep.mubr.f32.mxu0 %v3489
    %3730 = vmatmul.mubr.f32.gmra.mrb[0].mxu0 %v3488
    %v3731 = vpop.f32.mrb[0].mxu0
    %v3732 = vadd.f32 %v3662, %v3731
    %v3733 = vpop.f32.mrb[0].mxu0
    %3734 = vdwg.mxu0
    %3735 = vmatprep.subr.mxu0 0.0
    %3736 = vmatpush1.msra.mxu0 %v3556
    %3737 = vmatprep.subr.mxu0 0.0
    %3738 = vmatpush1.msra.mxu0 %v3557
    %3739 = vmatprep.subr.mxu0 0.0
    %3740 = vmatpush1.msra.mxu0 %v3558
    %3741 = vmatprep.subr.mxu0 0.0
    %3742 = vmatpush1.msra.mxu0 %v3559
    %3743 = vmatprep.subr.mxu0 0.0
    %3744 = vmatpush1.msra.mxu0 %v3560
    %3745 = vmatprep.subr.mxu0 0.0
    %3746 = vmatpush1.msra.mxu0 %v3561
    %3747 = vmatprep.subr.mxu0 0.0
    %3748 = vmatpush1.msra.mxu0 %v3562
    %3749 = vmatprep.subr.mxu0 0.0
    %3750 = vmatpush1.msra.mxu0 %v3563
    %3751 = vmatprep.subr.mxu0 0.0
    %3752 = vmatpush1.msra.mxu0 %v3564
    %3753 = vmatprep.subr.mxu0 0.0
    %3754 = vmatpush1.msra.mxu0 %v3565
    %3755 = vmatprep.subr.mxu0 0.0
    %3756 = vmatpush1.msra.mxu0 %v3566
    %3757 = vmatprep.subr.mxu0 0.0
    %3758 = vmatpush1.msra.mxu0 %v3567
    %3759 = vmatprep.subr.mxu0 0.0
    %3760 = vmatpush1.msra.mxu0 %v3568
    %3761 = vmatprep.subr.mxu0 0.0
    %3762 = vmatpush1.msra.mxu0 %v3569
    %3763 = vmatprep.subr.mxu0 0.0
    %3764 = vmatpush1.msra.mxu0 %v3570
    %3765 = vmatprep.subr.mxu0 0.0
    %3766 = vmatpush1.msra.mxu0 %v3571
    %3767 = vmatprep.subr.mxu0 0.0
    %3768 = vmatpush1.msra.mxu0 %v3572
    %3769 = vmatprep.subr.mxu0 0.0
    %3770 = vmatpush1.msra.mxu0 %v3573
    %3771 = vmatprep.subr.mxu0 0.0
    %3772 = vmatpush1.msra.mxu0 %v3574
    %3773 = vmatprep.subr.mxu0 0.0
    %3774 = vmatpush1.msra.mxu0 %v3575
    %3775 = vmatprep.subr.mxu0 0.0
    %3776 = vmatpush1.msra.mxu0 %v3576
    %3777 = vmatprep.subr.mxu0 0.0
    %3778 = vmatpush1.msra.mxu0 %v3577
    %3779 = vmatprep.subr.mxu0 0.0
    %3780 = vmatpush1.msra.mxu0 %v3578
    %3781 = vmatprep.subr.mxu0 0.0
    %3782 = vmatpush1.msra.mxu0 %v3579
    %3783 = vmatprep.subr.mxu0 0.0
    %3784 = vmatpush1.msra.mxu0 %v3580
    %3785 = vmatprep.subr.mxu0 0.0
    %3786 = vmatpush1.msra.mxu0 %v3581
    %3787 = vmatprep.subr.mxu0 0.0
    %3788 = vmatpush1.msra.mxu0 %v3582
    %3789 = vmatprep.subr.mxu0 0.0
    %3790 = vmatpush1.msra.mxu0 %v3583
    %3791 = vmatprep.subr.mxu0 0.0
    %3792 = vmatpush1.msra.mxu0 %v3584
    %3793 = vmatprep.subr.mxu0 0.0
    %3794 = vmatpush1.msra.mxu0 %v3585
    %3795 = vmatprep.subr.mxu0 0.0
    %3796 = vmatpush1.msra.mxu0 %v3586
    %3797 = vmatprep.subr.mxu0 0.0
    %3798 = vmatpush1.msra.mxu0 %v3587
    %3799 = vmatprep.mubr.f32.mxu0 %v3491
    %3800 = vmatmul.mubr.f32.gmra.mrb[0].mxu0 %v3490
    %v3801 = vpop.f32.mrb[0].mxu0
    %v3802 = vadd.f32 %v3732, %v3801
    %v3803 = vpop.f32.mrb[0].mxu0
    %3804 = vdwg.mxu0
    %v3805 = vxor.u32 %v3802, 2147483648
    %v3806 = vmul.f32 %v3805, 1.442695
    %v3807 = vpow.pop %v3806
    %v3808 = vadd.f32 %v3807, 1.0
    %v3809 = vrcp.pop %v3808
    %v3810 = vmul.f32 1.0, %v3809
    %3811 = vst [vmem:[#allocation29] sm:$0xff] %v3810
    // Predicated region
    $region138: #{tpu_custom_call.1} parent=1 // pred_check
      _
    $region139: #{tpu_custom_call.1} parent=1 // pred_check_branch
      %3813 = sbr.rel (0) target = $region141
    $region140: #{tpu_custom_call.1} parent=1 // pred_region
      %s3815 = ssub.s32 128, 128
      %3816 = vsyncadd [#allocation4], %s3815
      %s3818 = sshll.u32 [#allocation29], 4
      %s3819 = int_to_ptr.vmem [resolvable:$true] %s3818
      %3821 = dma.vmem_to_hbm [thread:$0]  %s3819, 128, %s17, [#allocation4]
    $region141: #{tpu_custom_call.1} parent=1 // pred_fallthru
      _
    // Predicated region
    $region142: #{tpu_custom_call.1} parent=1 // pred_check
      _
    $region143: #{tpu_custom_call.1} parent=1 // pred_check_branch
      %3823 = sbr.rel (0) target = $region145
    $region144: #{tpu_custom_call.1} parent=1 // pred_region
      %3824 = dma.done [#allocation4], 128
    $region145: #{tpu_custom_call.1} parent=1 // pred_fallthru
      _
    %3825 = vsyncpa [#allocation3], 1
    %3826 = vsyncpa [#allocation6], 1
    %3827 = vsyncpa [#allocation9], 1
    %3828 = vsyncpa [#allocation12], 1
    %3829 = vsyncpa [#allocation15], 1
    %3830 = vsyncpa [#allocation18], 1
    %3831 = vsyncpa [#allocation21], 1
    %3832 = vsyncpa [#allocation24], 1
    %3833 = vsyncpa [#allocation27], 1
    %3834 = vsyncpa [#allocation4], 1

</llo_original>
